<compile_context>
chip_gen: v5e
topology: v5e:2x2
jax: 0.10.0
libtpu: 0.0.40
codegen_flags: <defaults>
</compile_context>

<pallas_src>
import numpy as np
import jax
import jax.numpy as jnp
from jax import lax
from jax.experimental import pallas as pl
from jax.experimental.pallas import tpu as pltpu

# MXU operand dtype (accumulation is always f32). Set to jnp.float32 for bit-exactness.
MXU_DTYPE = jnp.bfloat16


# ----------------------------- in-kernel math helpers -------------------------
def _erf(z):
    # Abramowitz & Stegun 7.1.26, |abs err| < 1.5e-7 — only VPU/EUP ops (abs, mul, exp, where).
    a1, a2, a3, a4, a5 = 0.254829592, -0.284496736, 1.421413741, -1.453152027, 1.061405429
    p = 0.3275911
    az = jnp.abs(z)
    t = 1.0 / (1.0 + p * az)
    poly = ((((a5 * t + a4) * t + a3) * t + a2) * t + a1) * t
    y = 1.0 - poly * jnp.exp(-az * az)
    return jnp.where(z >= 0, y, -y)


def _gelu(x):
    # exact (erf) GELU, matching torch.nn.GELU()
    return 0.5 * x * (1.0 + _erf(x * 0.7071067811865476))


def _group_norm(v, gamma, beta, eps=1e-5):
    # GroupNorm(num_groups=1) over one sample laid out as (C, H*W); biased variance, eps=1e-5.
    n = v.shape[0] * v.shape[1]
    row = jnp.sum(v, axis=1, keepdims=True)                 # (C, 1)  lane reduce
    mu = jnp.sum(row, axis=0, keepdims=True) * (1.0 / n)    # (1, 1)  sublane reduce
    d = v - mu
    row2 = jnp.sum(d * d, axis=1, keepdims=True)
    var = jnp.sum(row2, axis=0, keepdims=True) * (1.0 / n)
    return d * lax.rsqrt(var + eps) * gamma + beta


def _shift_lanes(v, k, hw):
    # result[:, i] = v[:, (i + k) mod hw]; wrapped entries are zeroed by the caller's mask.
    s = (-k) % hw
    if s == 0:
        return v
    return pltpu.roll(v, s, axis=1)


def _tap_masks(H, W, r):
    """((2r+1)^2, H*W) f32 validity masks for all (dy, dx) in [-r, r]^2."""
    HW = H * W
    n = 2 * r + 1
    yy, xx = np.meshgrid(np.arange(H), np.arange(W), indexing="ij")
    yy = yy.reshape(-1)
    xx = xx.reshape(-1)
    m = np.zeros((n * n, HW), np.float32)
    for dy in range(-r, r + 1):
        for dx in range(-r, r + 1):
            k = (dy + r) * n + (dx + r)
            valid = (yy + dy >= 0) & (yy + dy < H) & (xx + dx >= 0) & (xx + dx < W)
            m[k] = valid.astype(np.float32)
    return m


# ----------------------------- fused ConvNext kernel --------------------------
def _build_kernel(C, H, W, hidden, Cout, has_time, has_res):
    HW = H * W

    def kernel(*refs):
        it = iter(refs)
        x_ref = next(it)                    # (1, C, HW)
        wm_ref = next(it)                   # (49, C, HW)  depthwise weight * boundary mask
        m9_ref = next(it)                   # (9, 1, HW)   3x3 boundary masks
        if has_time:
            t_ref = next(it)                # (1, 1, T)
            wmlp_ref = next(it)             # (C, T)
            bmlp_ref = next(it)             # (C, 1)
        bds_ref = next(it)                  # (C, 1)
        g1_ref = next(it)                   # (C, 1)
        be1_ref = next(it)                  # (C, 1)
        w1_ref = next(it)                   # (9, hidden, C)
        b1_ref = next(it)                   # (hidden, 1)
        g2_ref = next(it)                   # (hidden, 1)
        be2_ref = next(it)                  # (hidden, 1)
        w2_ref = next(it)                   # (9, Cout, hidden)
        b2_ref = next(it)                   # (Cout, 1)
        if has_res:
            wres_ref = next(it)             # (Cout, C)
            bres_ref = next(it)             # (Cout, 1)
        o_ref = next(it)                    # (1, Cout, HW)

        x = x_ref[0]                        # (C, HW) f32

        # ---- per-channel bias: depthwise bias (+ time conditioning) ----
        bias = bds_ref[...]                                                  # (C, 1)
        if has_time:
            tg = _gelu(t_ref[0])                                             # (1, T)
            bias = bias + jnp.sum(wmlp_ref[...] * tg, axis=1, keepdims=True) + bmlp_ref[...]

        # ---- 7x7 depthwise conv: 49 shifted VPU multiply-accumulates ----
        # wm_ref[k] already carries tap-weight * boundary-mask, so each tap is one FMA.
        h = jnp.zeros((C, HW), jnp.float32)
        for dy in range(-3, 4):
            for dx in range(-3, 4):
                k = (dy + 3) * 7 + (dx + 3)
                h = h + _shift_lanes(x, dy * W + dx, HW) * wm_ref[k]
        h = h + bias

        # ---- GroupNorm(1, C) ----
        h = _group_norm(h, g1_ref[...], be1_ref[...])

        # ---- dense 3x3 conv as 9 lane-dense MXU matmuls ----
        def conv3x3(v, w_ref, b_ref, out_ch):
            acc = jnp.zeros((out_ch, HW), jnp.float32)
            for dy in range(-1, 2):
                for dx in range(-1, 2):
                    k9 = (dy + 1) * 3 + (dx + 1)
                    sh = _shift_lanes(v, dy * W + dx, HW) * m9_ref[k9]
                    acc = acc + jnp.dot(w_ref[k9].astype(MXU_DTYPE),
                                        sh.astype(MXU_DTYPE),
                                        preferred_element_type=jnp.float32)
            return acc + b_ref[...]

        h = conv3x3(h, w1_ref, b1_ref, hidden)              # dim -> dim_out*mult
        h = _gelu(h)
        h = _group_norm(h, g2_ref[...], be2_ref[...])
        h = conv3x3(h, w2_ref, b2_ref, Cout)                # dim_out*mult -> dim_out

        # ---- residual 1x1 conv (or identity) ----
        if has_res:
            res = jnp.dot(wres_ref[...].astype(MXU_DTYPE), x.astype(MXU_DTYPE),
                          preferred_element_type=jnp.float32) + bres_ref[...]
        else:
            res = x
        o_ref[0] = h + res

    return kernel


def convnext_block(params, x, time_emb=None):
    """Fused ConvNextBlock forward. x: (B, C, H, W), time_emb: (B, T) or None."""
    B, C, H, W = x.shape
    HW = H * W
    hidden = params['w1'].shape[0]
    Cout = params['w2'].shape[0]
    has_time = (time_emb is not None) and (params.get('w_mlp', None) is not None)
    has_res = params.get('w_res', None) is not None
    if not has_res:
        assert Cout == C, "identity residual requires dim == dim_out"
    f32 = jnp.float32

    # One-time weight repacks into kernel-friendly (tap-major, lane-dense) layouts.
    mask49 = jnp.asarray(_tap_masks(H, W, 3))                                # (49, HW)
    mask9 = jnp.asarray(_tap_masks(H, W, 1))[:, None, :]                     # (9, 1, HW)
    wds_t = params['w_ds'].reshape(C, 49).T.astype(f32)                      # (49, C)
    wm = wds_t[:, :, None] * mask49[:, None, :]                              # (49, C, HW)

    w1 = params['w1'].transpose(2, 3, 0, 1).reshape(9, hidden, C).astype(f32)
    w2 = params['w2'].transpose(2, 3, 0, 1).reshape(9, Cout, hidden).astype(f32)

    inputs = [x.reshape(B, C, HW).astype(f32), wm, mask9]
    in_specs = [
        pl.BlockSpec((1, C, HW), lambda b: (b, 0, 0)),
        pl.BlockSpec((49, C, HW), lambda b: (0, 0, 0)),
        pl.BlockSpec((9, 1, HW), lambda b: (0, 0, 0)),
    ]
    if has_time:
        T = time_emb.shape[-1]
        inputs += [time_emb.reshape(B, 1, T).astype(f32),
                   params['w_mlp'].astype(f32),
                   params['b_mlp'].reshape(C, 1).astype(f32)]
        in_specs += [pl.BlockSpec((1, 1, T), lambda b: (b, 0, 0)),
                     pl.BlockSpec((C, T), lambda b: (0, 0)),
                     pl.BlockSpec((C, 1), lambda b: (0, 0))]
    inputs += [params['b_ds'].reshape(C, 1).astype(f32),
               params['gn1_g'].reshape(C, 1).astype(f32),
               params['gn1_b'].reshape(C, 1).astype(f32),
               w1,
               params['b1'].reshape(hidden, 1).astype(f32),
               params['gn2_g'].reshape(hidden, 1).astype(f32),
               params['gn2_b'].reshape(hidden, 1).astype(f32),
               w2,
               params['b2'].reshape(Cout, 1).astype(f32)]
    in_specs += [
        pl.BlockSpec((C, 1), lambda b: (0, 0)),
        pl.BlockSpec((C, 1), lambda b: (0, 0)),
        pl.BlockSpec((C, 1), lambda b: (0, 0)),
        pl.BlockSpec((9, hidden, C), lambda b: (0, 0, 0)),
        pl.BlockSpec((hidden, 1), lambda b: (0, 0)),
        pl.BlockSpec((hidden, 1), lambda b: (0, 0)),
        pl.BlockSpec((hidden, 1), lambda b: (0, 0)),
        pl.BlockSpec((9, Cout, hidden), lambda b: (0, 0, 0)),
        pl.BlockSpec((Cout, 1), lambda b: (0, 0)),
    ]
    if has_res:
        inputs += [params['w_res'].reshape(Cout, C).astype(f32),
                   params['b_res'].reshape(Cout, 1).astype(f32)]
        in_specs += [pl.BlockSpec((Cout, C), lambda b: (0, 0)),
                     pl.BlockSpec((Cout, 1), lambda b: (0, 0))]

    kernel = _build_kernel(C, H, W, hidden, Cout, has_time, has_res)
    out = pl.pallas_call(
        kernel,
        out_shape=jax.ShapeDtypeStruct((B, Cout, HW), jnp.float32),
        grid=(B,),
        in_specs=in_specs,
        out_specs=pl.BlockSpec((1, Cout, HW), lambda b: (b, 0, 0)),
        compiler_params=pltpu.CompilerParams(
            dimension_semantics=("parallel",)),       # one sample per TC on v7x
    )(*inputs)
    return out.reshape(B, Cout, H, W)


# ----------------------------- pure-JAX reference (PyTorch semantics) ---------
def convnext_block_ref(params, x, time_emb=None):
    dn = ("NCHW", "OIHW", "NCHW")
    P = lax.Precision.HIGHEST
    C = x.shape[1]

    def gn(v, g, b):
        mu = jnp.mean(v, axis=(1, 2, 3), keepdims=True)
        var = jnp.mean((v - mu) ** 2, axis=(1, 2, 3), keepdims=True)
        return (v - mu) * lax.rsqrt(var + 1e-5) * g[None, :, None, None] + b[None, :, None, None]

    h = lax.conv_general_dilated(x, params['w_ds'], (1, 1), [(3, 3), (3, 3)],
                                 dimension_numbers=dn, feature_group_count=C,
                                 precision=P) + params['b_ds'][None, :, None, None]
    if time_emb is not None and params.get('w_mlp', None) is not None:
        cond = jax.nn.gelu(time_emb, approximate=False) @ params['w_mlp'].T + params['b_mlp']
        h = h + cond[:, :, None, None]
    h = gn(h, params['gn1_g'], params['gn1_b'])
    h = lax.conv_general_dilated(h, params['w1'], (1, 1), [(1, 1), (1, 1)],
                                 dimension_numbers=dn, precision=P) + params['b1'][None, :, None, None]
    h = jax.nn.gelu(h, approximate=False)
    h = gn(h, params['gn2_g'], params['gn2_b'])
    h = lax.conv_general_dilated(h, params['w2'], (1, 1), [(1, 1), (1, 1)],
                                 dimension_numbers=dn, precision=P) + params['b2'][None, :, None, None]
    if params.get('w_res', None) is not None:
        res = lax.conv_general_dilated(x, params['w_res'], (1, 1), [(0, 0), (0, 0)],
                                       dimension_numbers=dn, precision=P)
        res = res + params['b_res'][None, :, None, None]
    else:
        res = x
    return h + res


# ----------------------------- main -------------------------------------------
if __name__ == "__main__":
    B, C, Cout, H, W = 2, 8, 16, 16, 16     # dim=8, dim_out=16, 16x16 spatial
    MULT, TDIM = 2, 32                       # mult=2 -> hidden=32, time_emb_dim=32
    hidden = Cout * MULT

    key = jax.random.PRNGKey(0)
    ks = jax.random.split(key, 16)

    def rnd(k, *shape, scale=0.05):
        return scale * jax.random.normal(k, shape, jnp.float32)

    params = {
        'w_ds': rnd(ks[0], C, 1, 7, 7), 'b_ds': rnd(ks[1], C, scale=0.02),
        'w_mlp': rnd(ks[2], C, TDIM), 'b_mlp': rnd(ks[3], C, scale=0.02),
        'gn1_g': 1.0 + rnd(ks[4], C, scale=0.1), 'gn1_b': rnd(ks[5], C, scale=0.05),
        'w1': rnd(ks[6], hidden, C, 3, 3), 'b1': rnd(ks[7], hidden, scale=0.02),
        'gn2_g': 1.0 + rnd(ks[8], hidden, scale=0.1), 'gn2_b': rnd(ks[9], hidden, scale=0.05),
        'w2': rnd(ks[10], Cout, hidden, 3, 3), 'b2': rnd(ks[11], Cout, scale=0.02),
        'w_res': rnd(ks[12], Cout, C, 1, 1), 'b_res': rnd(ks[13], Cout, scale=0.02),
    }
    x = jax.random.normal(ks[14], (B, C, H, W), jnp.float32)
    t = jax.random.normal(ks[15], (B, TDIM), jnp.float32)

    fwd = jax.jit(convnext_block)
    out = fwd(params, x, t)
    jax.block_until_ready(out)
    assert out.shape == (B, Cout, H, W), out.shape

    ref = convnext_block_ref(params, x, t)
    diff = jnp.abs(out - ref)
    max_err = float(jnp.max(diff))
    mean_err = float(jnp.mean(diff))
    # bf16 MXU operands (f32 accumulation) give ~1% worst-case deviation from the
    # fp32 reference; a structural bug (tap/shift/mask error) would be O(0.3+).
    assert np.isfinite(max_err) and max_err < 1.5e-1 and mean_err < 3e-2, (max_err, mean_err)
    print("KERNEL_OK")
</pallas_src>

<mosaic_0001>
module attributes {stable_mosaic.version = 11 : i64} {
  func.func @kernel(%arg0: i32, %arg1: memref<1x8x256xf32, #tpu.memory_space<vmem>>, %arg2: memref<49x8x256xf32, #tpu.memory_space<vmem>>, %arg3: memref<9x1x256xf32, #tpu.memory_space<vmem>>, %arg4: memref<1x1x32xf32, #tpu.memory_space<vmem>>, %arg5: memref<8x32xf32, #tpu.memory_space<vmem>>, %arg6: memref<8x1xf32, #tpu.memory_space<vmem>>, %arg7: memref<8x1xf32, #tpu.memory_space<vmem>>, %arg8: memref<8x1xf32, #tpu.memory_space<vmem>>, %arg9: memref<8x1xf32, #tpu.memory_space<vmem>>, %arg10: memref<9x32x8xf32, #tpu.memory_space<vmem>>, %arg11: memref<32x1xf32, #tpu.memory_space<vmem>>, %arg12: memref<32x1xf32, #tpu.memory_space<vmem>>, %arg13: memref<32x1xf32, #tpu.memory_space<vmem>>, %arg14: memref<9x16x32xf32, #tpu.memory_space<vmem>>, %arg15: memref<16x1xf32, #tpu.memory_space<vmem>>, %arg16: memref<16x8xf32, #tpu.memory_space<vmem>>, %arg17: memref<16x1xf32, #tpu.memory_space<vmem>>, %arg18: memref<1x16x256xf32, #tpu.memory_space<vmem>>) attributes {dimension_semantics = [#tpu.dimension_semantics<parallel>], iteration_bounds = array<i64: 2>, scalar_prefetch = 0 : i64, scratch_operands = 0 : i64, tpu.core_type = #tpu.core_type<tc>, window_params = [{transform_indices = @transform_0, window_bounds = array<i64: 1, 8, 256>}, {pipeline_mode = #tpu.pipeline_mode<synchronous>, transform_indices = @transform_1, window_bounds = array<i64: 49, 8, 256>}, {pipeline_mode = #tpu.pipeline_mode<synchronous>, transform_indices = @transform_2, window_bounds = array<i64: 9, 1, 256>}, {transform_indices = @transform_3, window_bounds = array<i64: 1, 1, 32>}, {pipeline_mode = #tpu.pipeline_mode<synchronous>, transform_indices = @transform_4, window_bounds = array<i64: 8, 32>}, {pipeline_mode = #tpu.pipeline_mode<synchronous>, transform_indices = @transform_5, window_bounds = array<i64: 8, 1>}, {pipeline_mode = #tpu.pipeline_mode<synchronous>, transform_indices = @transform_6, window_bounds = array<i64: 8, 1>}, {pipeline_mode = #tpu.pipeline_mode<synchronous>, transform_indices = @transform_7, window_bounds = array<i64: 8, 1>}, {pipeline_mode = #tpu.pipeline_mode<synchronous>, transform_indices = @transform_8, window_bounds = array<i64: 8, 1>}, {pipeline_mode = #tpu.pipeline_mode<synchronous>, transform_indices = @transform_9, window_bounds = array<i64: 9, 32, 8>}, {pipeline_mode = #tpu.pipeline_mode<synchronous>, transform_indices = @transform_10, window_bounds = array<i64: 32, 1>}, {pipeline_mode = #tpu.pipeline_mode<synchronous>, transform_indices = @transform_11, window_bounds = array<i64: 32, 1>}, {pipeline_mode = #tpu.pipeline_mode<synchronous>, transform_indices = @transform_12, window_bounds = array<i64: 32, 1>}, {pipeline_mode = #tpu.pipeline_mode<synchronous>, transform_indices = @transform_13, window_bounds = array<i64: 9, 16, 32>}, {pipeline_mode = #tpu.pipeline_mode<synchronous>, transform_indices = @transform_14, window_bounds = array<i64: 16, 1>}, {pipeline_mode = #tpu.pipeline_mode<synchronous>, transform_indices = @transform_15, window_bounds = array<i64: 16, 8>}, {pipeline_mode = #tpu.pipeline_mode<synchronous>, transform_indices = @transform_16, window_bounds = array<i64: 16, 1>}, {transform_indices = @transform_17, window_bounds = array<i64: 1, 16, 256>}]} {
    %c0 = arith.constant 0 : index
    %c0_0 = arith.constant 0 : index
    %c0_1 = arith.constant 0 : index
    %0 = vector.load %arg1[%c0, %c0_0, %c0_1] : memref<1x8x256xf32, #tpu.memory_space<vmem>>, vector<1x8x256xf32>
    %1 = vector.shape_cast %0 : vector<1x8x256xf32> to vector<8x256xf32>
    %c0_2 = arith.constant 0 : index
    %c0_3 = arith.constant 0 : index
    %2 = vector.load %arg7[%c0_2, %c0_3] : memref<8x1xf32, #tpu.memory_space<vmem>>, vector<8x1xf32>
    %c0_4 = arith.constant 0 : index
    %c0_5 = arith.constant 0 : index
    %c0_6 = arith.constant 0 : index
    %3 = vector.load %arg4[%c0_4, %c0_5, %c0_6] : memref<1x1x32xf32, #tpu.memory_space<vmem>>, vector<1x1x32xf32>
    %4 = vector.shape_cast %3 : vector<1x1x32xf32> to vector<1x32xf32>
    %cst = arith.constant 5.000000e-01 : f32
    %5 = vector.broadcast %cst : f32 to vector<1x32xf32>
    %6 = arith.mulf %5, %4 : vector<1x32xf32>
    %cst_7 = arith.constant 0.707106769 : f32
    %7 = vector.broadcast %cst_7 : f32 to vector<1x32xf32>
    %8 = arith.mulf %4, %7 : vector<1x32xf32>
    %9 = math.absf %8 : vector<1x32xf32>
    %cst_8 = arith.constant 0.327591091 : f32
    %10 = vector.broadcast %cst_8 : f32 to vector<1x32xf32>
    %11 = arith.mulf %10, %9 : vector<1x32xf32>
    %cst_9 = arith.constant 1.000000e+00 : f32
    %12 = vector.broadcast %cst_9 : f32 to vector<1x32xf32>
    %13 = arith.addf %12, %11 : vector<1x32xf32>
    %cst_10 = arith.constant 1.000000e+00 : f32
    %14 = vector.broadcast %cst_10 : f32 to vector<1x32xf32>
    %15 = arith.divf %14, %13 : vector<1x32xf32>
    %cst_11 = arith.constant 1.06140542 : f32
    %16 = vector.broadcast %cst_11 : f32 to vector<1x32xf32>
    %17 = arith.mulf %16, %15 : vector<1x32xf32>
    %cst_12 = arith.constant -1.45315206 : f32
    %18 = vector.broadcast %cst_12 : f32 to vector<1x32xf32>
    %19 = arith.addf %17, %18 : vector<1x32xf32>
    %20 = arith.mulf %19, %15 : vector<1x32xf32>
    %cst_13 = arith.constant 1.42141378 : f32
    %21 = vector.broadcast %cst_13 : f32 to vector<1x32xf32>
    %22 = arith.addf %20, %21 : vector<1x32xf32>
    %23 = arith.mulf %22, %15 : vector<1x32xf32>
    %cst_14 = arith.constant -0.284496725 : f32
    %24 = vector.broadcast %cst_14 : f32 to vector<1x32xf32>
    %25 = arith.addf %23, %24 : vector<1x32xf32>
    %26 = arith.mulf %25, %15 : vector<1x32xf32>
    %cst_15 = arith.constant 0.254829586 : f32
    %27 = vector.broadcast %cst_15 : f32 to vector<1x32xf32>
    %28 = arith.addf %26, %27 : vector<1x32xf32>
    %29 = arith.mulf %28, %15 : vector<1x32xf32>
    %cst_16 = arith.constant 0.000000e+00 : f32
    %30 = vector.broadcast %cst_16 : f32 to vector<1x32xf32>
    %31 = arith.subf %30, %9 : vector<1x32xf32>
    %32 = arith.mulf %31, %9 : vector<1x32xf32>
    %33 = math.exp %32 : vector<1x32xf32>
    %34 = arith.mulf %29, %33 : vector<1x32xf32>
    %cst_17 = arith.constant 1.000000e+00 : f32
    %35 = vector.broadcast %cst_17 : f32 to vector<1x32xf32>
    %36 = arith.subf %35, %34 : vector<1x32xf32>
    %cst_18 = arith.constant 0.000000e+00 : f32
    %37 = vector.broadcast %cst_18 : f32 to vector<1x32xf32>
    %38 = arith.cmpf oge, %8, %37 : vector<1x32xf32>
    %cst_19 = arith.constant 0.000000e+00 : f32
    %39 = vector.broadcast %cst_19 : f32 to vector<1x32xf32>
    %40 = arith.subf %39, %36 : vector<1x32xf32>
    %41 = arith.select %38, %36, %40 : vector<1x32xi1>, vector<1x32xf32>
    %cst_20 = arith.constant 1.000000e+00 : f32
    %42 = vector.broadcast %cst_20 : f32 to vector<1x32xf32>
    %43 = arith.addf %42, %41 : vector<1x32xf32>
    %44 = arith.mulf %6, %43 : vector<1x32xf32>
    %c0_21 = arith.constant 0 : index
    %c0_22 = arith.constant 0 : index
    %45 = vector.load %arg5[%c0_21, %c0_22] : memref<8x32xf32, #tpu.memory_space<vmem>>, vector<8x32xf32>
    %46 = vector.broadcast %44 : vector<1x32xf32> to vector<8x32xf32>
    %47 = arith.mulf %45, %46 : vector<8x32xf32>
    %cst_23 = arith.constant dense<0.000000e+00> : vector<8xf32>
    %48 = vector.multi_reduction <add>, %47, %cst_23 [1] : vector<8x32xf32> to vector<8xf32>
    %49 = vector.shape_cast %48 : vector<8xf32> to vector<8x1xf32>
    %50 = arith.addf %2, %49 : vector<8x1xf32>
    %c0_24 = arith.constant 0 : index
    %c0_25 = arith.constant 0 : index
    %51 = vector.load %arg6[%c0_24, %c0_25] : memref<8x1xf32, #tpu.memory_space<vmem>>, vector<8x1xf32>
    %52 = arith.addf %50, %51 : vector<8x1xf32>
    %cst_26 = arith.constant 0.000000e+00 : f32
    %53 = vector.broadcast %cst_26 : f32 to vector<8x256xf32>
    %c51_i32 = arith.constant 51 : i32
    %54 = tpu.dynamic_rotate %1 by %c51_i32 dim 1 : vector<8x256xf32>, i32 -> vector<8x256xf32>
    %c0_27 = arith.constant 0 : index
    %c0_28 = arith.constant 0 : index
    %c0_29 = arith.constant 0 : index
    %55 = vector.load %arg2[%c0_27, %c0_28, %c0_29] : memref<49x8x256xf32, #tpu.memory_space<vmem>>, vector<1x8x256xf32>
    %56 = vector.shape_cast %55 : vector<1x8x256xf32> to vector<8x256xf32>
    %57 = arith.mulf %54, %56 : vector<8x256xf32>
    %58 = arith.addf %53, %57 : vector<8x256xf32>
    %c50_i32 = arith.constant 50 : i32
    %59 = tpu.dynamic_rotate %1 by %c50_i32 dim 1 : vector<8x256xf32>, i32 -> vector<8x256xf32>
    %c1 = arith.constant 1 : index
    %c0_30 = arith.constant 0 : index
    %c0_31 = arith.constant 0 : index
    %60 = vector.load %arg2[%c1, %c0_30, %c0_31] : memref<49x8x256xf32, #tpu.memory_space<vmem>>, vector<1x8x256xf32>
    %61 = vector.shape_cast %60 : vector<1x8x256xf32> to vector<8x256xf32>
    %62 = arith.mulf %59, %61 : vector<8x256xf32>
    %63 = arith.addf %58, %62 : vector<8x256xf32>
    %c49_i32 = arith.constant 49 : i32
    %64 = tpu.dynamic_rotate %1 by %c49_i32 dim 1 : vector<8x256xf32>, i32 -> vector<8x256xf32>
    %c2 = arith.constant 2 : index
    %c0_32 = arith.constant 0 : index
    %c0_33 = arith.constant 0 : index
    %65 = vector.load %arg2[%c2, %c0_32, %c0_33] : memref<49x8x256xf32, #tpu.memory_space<vmem>>, vector<1x8x256xf32>
    %66 = vector.shape_cast %65 : vector<1x8x256xf32> to vector<8x256xf32>
    %67 = arith.mulf %64, %66 : vector<8x256xf32>
    %68 = arith.addf %63, %67 : vector<8x256xf32>
    %c48_i32 = arith.constant 48 : i32
    %69 = tpu.dynamic_rotate %1 by %c48_i32 dim 1 : vector<8x256xf32>, i32 -> vector<8x256xf32>
    %c3 = arith.constant 3 : index
    %c0_34 = arith.constant 0 : index
    %c0_35 = arith.constant 0 : index
    %70 = vector.load %arg2[%c3, %c0_34, %c0_35] : memref<49x8x256xf32, #tpu.memory_space<vmem>>, vector<1x8x256xf32>
    %71 = vector.shape_cast %70 : vector<1x8x256xf32> to vector<8x256xf32>
    %72 = arith.mulf %69, %71 : vector<8x256xf32>
    %73 = arith.addf %68, %72 : vector<8x256xf32>
    %c47_i32 = arith.constant 47 : i32
    %74 = tpu.dynamic_rotate %1 by %c47_i32 dim 1 : vector<8x256xf32>, i32 -> vector<8x256xf32>
    %c4 = arith.constant 4 : index
    %c0_36 = arith.constant 0 : index
    %c0_37 = arith.constant 0 : index
    %75 = vector.load %arg2[%c4, %c0_36, %c0_37] : memref<49x8x256xf32, #tpu.memory_space<vmem>>, vector<1x8x256xf32>
    %76 = vector.shape_cast %75 : vector<1x8x256xf32> to vector<8x256xf32>
    %77 = arith.mulf %74, %76 : vector<8x256xf32>
    %78 = arith.addf %73, %77 : vector<8x256xf32>
    %c46_i32 = arith.constant 46 : i32
    %79 = tpu.dynamic_rotate %1 by %c46_i32 dim 1 : vector<8x256xf32>, i32 -> vector<8x256xf32>
    %c5 = arith.constant 5 : index
    %c0_38 = arith.constant 0 : index
    %c0_39 = arith.constant 0 : index
    %80 = vector.load %arg2[%c5, %c0_38, %c0_39] : memref<49x8x256xf32, #tpu.memory_space<vmem>>, vector<1x8x256xf32>
    %81 = vector.shape_cast %80 : vector<1x8x256xf32> to vector<8x256xf32>
    %82 = arith.mulf %79, %81 : vector<8x256xf32>
    %83 = arith.addf %78, %82 : vector<8x256xf32>
    %c45_i32 = arith.constant 45 : i32
    %84 = tpu.dynamic_rotate %1 by %c45_i32 dim 1 : vector<8x256xf32>, i32 -> vector<8x256xf32>
    %c6 = arith.constant 6 : index
    %c0_40 = arith.constant 0 : index
    %c0_41 = arith.constant 0 : index
    %85 = vector.load %arg2[%c6, %c0_40, %c0_41] : memref<49x8x256xf32, #tpu.memory_space<vmem>>, vector<1x8x256xf32>
    %86 = vector.shape_cast %85 : vector<1x8x256xf32> to vector<8x256xf32>
    %87 = arith.mulf %84, %86 : vector<8x256xf32>
    %88 = arith.addf %83, %87 : vector<8x256xf32>
    %c35_i32 = arith.constant 35 : i32
    %89 = tpu.dynamic_rotate %1 by %c35_i32 dim 1 : vector<8x256xf32>, i32 -> vector<8x256xf32>
    %c7 = arith.constant 7 : index
    %c0_42 = arith.constant 0 : index
    %c0_43 = arith.constant 0 : index
    %90 = vector.load %arg2[%c7, %c0_42, %c0_43] : memref<49x8x256xf32, #tpu.memory_space<vmem>>, vector<1x8x256xf32>
    %91 = vector.shape_cast %90 : vector<1x8x256xf32> to vector<8x256xf32>
    %92 = arith.mulf %89, %91 : vector<8x256xf32>
    %93 = arith.addf %88, %92 : vector<8x256xf32>
    %c34_i32 = arith.constant 34 : i32
    %94 = tpu.dynamic_rotate %1 by %c34_i32 dim 1 : vector<8x256xf32>, i32 -> vector<8x256xf32>
    %c8 = arith.constant 8 : index
    %c0_44 = arith.constant 0 : index
    %c0_45 = arith.constant 0 : index
    %95 = vector.load %arg2[%c8, %c0_44, %c0_45] : memref<49x8x256xf32, #tpu.memory_space<vmem>>, vector<1x8x256xf32>
    %96 = vector.shape_cast %95 : vector<1x8x256xf32> to vector<8x256xf32>
    %97 = arith.mulf %94, %96 : vector<8x256xf32>
    %98 = arith.addf %93, %97 : vector<8x256xf32>
    %c33_i32 = arith.constant 33 : i32
    %99 = tpu.dynamic_rotate %1 by %c33_i32 dim 1 : vector<8x256xf32>, i32 -> vector<8x256xf32>
    %c9 = arith.constant 9 : index
    %c0_46 = arith.constant 0 : index
    %c0_47 = arith.constant 0 : index
    %100 = vector.load %arg2[%c9, %c0_46, %c0_47] : memref<49x8x256xf32, #tpu.memory_space<vmem>>, vector<1x8x256xf32>
    %101 = vector.shape_cast %100 : vector<1x8x256xf32> to vector<8x256xf32>
    %102 = arith.mulf %99, %101 : vector<8x256xf32>
    %103 = arith.addf %98, %102 : vector<8x256xf32>
    %c32_i32 = arith.constant 32 : i32
    %104 = tpu.dynamic_rotate %1 by %c32_i32 dim 1 : vector<8x256xf32>, i32 -> vector<8x256xf32>
    %c10 = arith.constant 10 : index
    %c0_48 = arith.constant 0 : index
    %c0_49 = arith.constant 0 : index
    %105 = vector.load %arg2[%c10, %c0_48, %c0_49] : memref<49x8x256xf32, #tpu.memory_space<vmem>>, vector<1x8x256xf32>
    %106 = vector.shape_cast %105 : vector<1x8x256xf32> to vector<8x256xf32>
    %107 = arith.mulf %104, %106 : vector<8x256xf32>
    %108 = arith.addf %103, %107 : vector<8x256xf32>
    %c31_i32 = arith.constant 31 : i32
    %109 = tpu.dynamic_rotate %1 by %c31_i32 dim 1 : vector<8x256xf32>, i32 -> vector<8x256xf32>
    %c11 = arith.constant 11 : index
    %c0_50 = arith.constant 0 : index
    %c0_51 = arith.constant 0 : index
    %110 = vector.load %arg2[%c11, %c0_50, %c0_51] : memref<49x8x256xf32, #tpu.memory_space<vmem>>, vector<1x8x256xf32>
    %111 = vector.shape_cast %110 : vector<1x8x256xf32> to vector<8x256xf32>
    %112 = arith.mulf %109, %111 : vector<8x256xf32>
    %113 = arith.addf %108, %112 : vector<8x256xf32>
    %c30_i32 = arith.constant 30 : i32
    %114 = tpu.dynamic_rotate %1 by %c30_i32 dim 1 : vector<8x256xf32>, i32 -> vector<8x256xf32>
    %c12 = arith.constant 12 : index
    %c0_52 = arith.constant 0 : index
    %c0_53 = arith.constant 0 : index
    %115 = vector.load %arg2[%c12, %c0_52, %c0_53] : memref<49x8x256xf32, #tpu.memory_space<vmem>>, vector<1x8x256xf32>
    %116 = vector.shape_cast %115 : vector<1x8x256xf32> to vector<8x256xf32>
    %117 = arith.mulf %114, %116 : vector<8x256xf32>
    %118 = arith.addf %113, %117 : vector<8x256xf32>
    %c29_i32 = arith.constant 29 : i32
    %119 = tpu.dynamic_rotate %1 by %c29_i32 dim 1 : vector<8x256xf32>, i32 -> vector<8x256xf32>
    %c13 = arith.constant 13 : index
    %c0_54 = arith.constant 0 : index
    %c0_55 = arith.constant 0 : index
    %120 = vector.load %arg2[%c13, %c0_54, %c0_55] : memref<49x8x256xf32, #tpu.memory_space<vmem>>, vector<1x8x256xf32>
    %121 = vector.shape_cast %120 : vector<1x8x256xf32> to vector<8x256xf32>
    %122 = arith.mulf %119, %121 : vector<8x256xf32>
    %123 = arith.addf %118, %122 : vector<8x256xf32>
    %c19_i32 = arith.constant 19 : i32
    %124 = tpu.dynamic_rotate %1 by %c19_i32 dim 1 : vector<8x256xf32>, i32 -> vector<8x256xf32>
    %c14 = arith.constant 14 : index
    %c0_56 = arith.constant 0 : index
    %c0_57 = arith.constant 0 : index
    %125 = vector.load %arg2[%c14, %c0_56, %c0_57] : memref<49x8x256xf32, #tpu.memory_space<vmem>>, vector<1x8x256xf32>
    %126 = vector.shape_cast %125 : vector<1x8x256xf32> to vector<8x256xf32>
    %127 = arith.mulf %124, %126 : vector<8x256xf32>
    %128 = arith.addf %123, %127 : vector<8x256xf32>
    %c18_i32 = arith.constant 18 : i32
    %129 = tpu.dynamic_rotate %1 by %c18_i32 dim 1 : vector<8x256xf32>, i32 -> vector<8x256xf32>
    %c15 = arith.constant 15 : index
    %c0_58 = arith.constant 0 : index
    %c0_59 = arith.constant 0 : index
    %130 = vector.load %arg2[%c15, %c0_58, %c0_59] : memref<49x8x256xf32, #tpu.memory_space<vmem>>, vector<1x8x256xf32>
    %131 = vector.shape_cast %130 : vector<1x8x256xf32> to vector<8x256xf32>
    %132 = arith.mulf %129, %131 : vector<8x256xf32>
    %133 = arith.addf %128, %132 : vector<8x256xf32>
    %c17_i32 = arith.constant 17 : i32
    %134 = tpu.dynamic_rotate %1 by %c17_i32 dim 1 : vector<8x256xf32>, i32 -> vector<8x256xf32>
    %c16 = arith.constant 16 : index
    %c0_60 = arith.constant 0 : index
    %c0_61 = arith.constant 0 : index
    %135 = vector.load %arg2[%c16, %c0_60, %c0_61] : memref<49x8x256xf32, #tpu.memory_space<vmem>>, vector<1x8x256xf32>
    %136 = vector.shape_cast %135 : vector<1x8x256xf32> to vector<8x256xf32>
    %137 = arith.mulf %134, %136 : vector<8x256xf32>
    %138 = arith.addf %133, %137 : vector<8x256xf32>
    %c16_i32 = arith.constant 16 : i32
    %139 = tpu.dynamic_rotate %1 by %c16_i32 dim 1 : vector<8x256xf32>, i32 -> vector<8x256xf32>
    %c17 = arith.constant 17 : index
    %c0_62 = arith.constant 0 : index
    %c0_63 = arith.constant 0 : index
    %140 = vector.load %arg2[%c17, %c0_62, %c0_63] : memref<49x8x256xf32, #tpu.memory_space<vmem>>, vector<1x8x256xf32>
    %141 = vector.shape_cast %140 : vector<1x8x256xf32> to vector<8x256xf32>
    %142 = arith.mulf %139, %141 : vector<8x256xf32>
    %143 = arith.addf %138, %142 : vector<8x256xf32>
    %c15_i32 = arith.constant 15 : i32
    %144 = tpu.dynamic_rotate %1 by %c15_i32 dim 1 : vector<8x256xf32>, i32 -> vector<8x256xf32>
    %c18 = arith.constant 18 : index
    %c0_64 = arith.constant 0 : index
    %c0_65 = arith.constant 0 : index
    %145 = vector.load %arg2[%c18, %c0_64, %c0_65] : memref<49x8x256xf32, #tpu.memory_space<vmem>>, vector<1x8x256xf32>
    %146 = vector.shape_cast %145 : vector<1x8x256xf32> to vector<8x256xf32>
    %147 = arith.mulf %144, %146 : vector<8x256xf32>
    %148 = arith.addf %143, %147 : vector<8x256xf32>
    %c14_i32 = arith.constant 14 : i32
    %149 = tpu.dynamic_rotate %1 by %c14_i32 dim 1 : vector<8x256xf32>, i32 -> vector<8x256xf32>
    %c19 = arith.constant 19 : index
    %c0_66 = arith.constant 0 : index
    %c0_67 = arith.constant 0 : index
    %150 = vector.load %arg2[%c19, %c0_66, %c0_67] : memref<49x8x256xf32, #tpu.memory_space<vmem>>, vector<1x8x256xf32>
    %151 = vector.shape_cast %150 : vector<1x8x256xf32> to vector<8x256xf32>
    %152 = arith.mulf %149, %151 : vector<8x256xf32>
    %153 = arith.addf %148, %152 : vector<8x256xf32>
    %c13_i32 = arith.constant 13 : i32
    %154 = tpu.dynamic_rotate %1 by %c13_i32 dim 1 : vector<8x256xf32>, i32 -> vector<8x256xf32>
    %c20 = arith.constant 20 : index
    %c0_68 = arith.constant 0 : index
    %c0_69 = arith.constant 0 : index
    %155 = vector.load %arg2[%c20, %c0_68, %c0_69] : memref<49x8x256xf32, #tpu.memory_space<vmem>>, vector<1x8x256xf32>
    %156 = vector.shape_cast %155 : vector<1x8x256xf32> to vector<8x256xf32>
    %157 = arith.mulf %154, %156 : vector<8x256xf32>
    %158 = arith.addf %153, %157 : vector<8x256xf32>
    %c3_i32 = arith.constant 3 : i32
    %159 = tpu.dynamic_rotate %1 by %c3_i32 dim 1 : vector<8x256xf32>, i32 -> vector<8x256xf32>
    %c21 = arith.constant 21 : index
    %c0_70 = arith.constant 0 : index
    %c0_71 = arith.constant 0 : index
    %160 = vector.load %arg2[%c21, %c0_70, %c0_71] : memref<49x8x256xf32, #tpu.memory_space<vmem>>, vector<1x8x256xf32>
    %161 = vector.shape_cast %160 : vector<1x8x256xf32> to vector<8x256xf32>
    %162 = arith.mulf %159, %161 : vector<8x256xf32>
    %163 = arith.addf %158, %162 : vector<8x256xf32>
    %c2_i32 = arith.constant 2 : i32
    %164 = tpu.dynamic_rotate %1 by %c2_i32 dim 1 : vector<8x256xf32>, i32 -> vector<8x256xf32>
    %c22 = arith.constant 22 : index
    %c0_72 = arith.constant 0 : index
    %c0_73 = arith.constant 0 : index
    %165 = vector.load %arg2[%c22, %c0_72, %c0_73] : memref<49x8x256xf32, #tpu.memory_space<vmem>>, vector<1x8x256xf32>
    %166 = vector.shape_cast %165 : vector<1x8x256xf32> to vector<8x256xf32>
    %167 = arith.mulf %164, %166 : vector<8x256xf32>
    %168 = arith.addf %163, %167 : vector<8x256xf32>
    %c1_i32 = arith.constant 1 : i32
    %169 = tpu.dynamic_rotate %1 by %c1_i32 dim 1 : vector<8x256xf32>, i32 -> vector<8x256xf32>
    %c23 = arith.constant 23 : index
    %c0_74 = arith.constant 0 : index
    %c0_75 = arith.constant 0 : index
    %170 = vector.load %arg2[%c23, %c0_74, %c0_75] : memref<49x8x256xf32, #tpu.memory_space<vmem>>, vector<1x8x256xf32>
    %171 = vector.shape_cast %170 : vector<1x8x256xf32> to vector<8x256xf32>
    %172 = arith.mulf %169, %171 : vector<8x256xf32>
    %173 = arith.addf %168, %172 : vector<8x256xf32>
    %c24 = arith.constant 24 : index
    %c0_76 = arith.constant 0 : index
    %c0_77 = arith.constant 0 : index
    %174 = vector.load %arg2[%c24, %c0_76, %c0_77] : memref<49x8x256xf32, #tpu.memory_space<vmem>>, vector<1x8x256xf32>
    %175 = vector.shape_cast %174 : vector<1x8x256xf32> to vector<8x256xf32>
    %176 = arith.mulf %1, %175 : vector<8x256xf32>
    %177 = arith.addf %173, %176 : vector<8x256xf32>
    %c255_i32 = arith.constant 255 : i32
    %178 = tpu.dynamic_rotate %1 by %c255_i32 dim 1 : vector<8x256xf32>, i32 -> vector<8x256xf32>
    %c25 = arith.constant 25 : index
    %c0_78 = arith.constant 0 : index
    %c0_79 = arith.constant 0 : index
    %179 = vector.load %arg2[%c25, %c0_78, %c0_79] : memref<49x8x256xf32, #tpu.memory_space<vmem>>, vector<1x8x256xf32>
    %180 = vector.shape_cast %179 : vector<1x8x256xf32> to vector<8x256xf32>
    %181 = arith.mulf %178, %180 : vector<8x256xf32>
    %182 = arith.addf %177, %181 : vector<8x256xf32>
    %c254_i32 = arith.constant 254 : i32
    %183 = tpu.dynamic_rotate %1 by %c254_i32 dim 1 : vector<8x256xf32>, i32 -> vector<8x256xf32>
    %c26 = arith.constant 26 : index
    %c0_80 = arith.constant 0 : index
    %c0_81 = arith.constant 0 : index
    %184 = vector.load %arg2[%c26, %c0_80, %c0_81] : memref<49x8x256xf32, #tpu.memory_space<vmem>>, vector<1x8x256xf32>
    %185 = vector.shape_cast %184 : vector<1x8x256xf32> to vector<8x256xf32>
    %186 = arith.mulf %183, %185 : vector<8x256xf32>
    %187 = arith.addf %182, %186 : vector<8x256xf32>
    %c253_i32 = arith.constant 253 : i32
    %188 = tpu.dynamic_rotate %1 by %c253_i32 dim 1 : vector<8x256xf32>, i32 -> vector<8x256xf32>
    %c27 = arith.constant 27 : index
    %c0_82 = arith.constant 0 : index
    %c0_83 = arith.constant 0 : index
    %189 = vector.load %arg2[%c27, %c0_82, %c0_83] : memref<49x8x256xf32, #tpu.memory_space<vmem>>, vector<1x8x256xf32>
    %190 = vector.shape_cast %189 : vector<1x8x256xf32> to vector<8x256xf32>
    %191 = arith.mulf %188, %190 : vector<8x256xf32>
    %192 = arith.addf %187, %191 : vector<8x256xf32>
    %c243_i32 = arith.constant 243 : i32
    %193 = tpu.dynamic_rotate %1 by %c243_i32 dim 1 : vector<8x256xf32>, i32 -> vector<8x256xf32>
    %c28 = arith.constant 28 : index
    %c0_84 = arith.constant 0 : index
    %c0_85 = arith.constant 0 : index
    %194 = vector.load %arg2[%c28, %c0_84, %c0_85] : memref<49x8x256xf32, #tpu.memory_space<vmem>>, vector<1x8x256xf32>
    %195 = vector.shape_cast %194 : vector<1x8x256xf32> to vector<8x256xf32>
    %196 = arith.mulf %193, %195 : vector<8x256xf32>
    %197 = arith.addf %192, %196 : vector<8x256xf32>
    %c242_i32 = arith.constant 242 : i32
    %198 = tpu.dynamic_rotate %1 by %c242_i32 dim 1 : vector<8x256xf32>, i32 -> vector<8x256xf32>
    %c29 = arith.constant 29 : index
    %c0_86 = arith.constant 0 : index
    %c0_87 = arith.constant 0 : index
    %199 = vector.load %arg2[%c29, %c0_86, %c0_87] : memref<49x8x256xf32, #tpu.memory_space<vmem>>, vector<1x8x256xf32>
    %200 = vector.shape_cast %199 : vector<1x8x256xf32> to vector<8x256xf32>
    %201 = arith.mulf %198, %200 : vector<8x256xf32>
    %202 = arith.addf %197, %201 : vector<8x256xf32>
    %c241_i32 = arith.constant 241 : i32
    %203 = tpu.dynamic_rotate %1 by %c241_i32 dim 1 : vector<8x256xf32>, i32 -> vector<8x256xf32>
    %c30 = arith.constant 30 : index
    %c0_88 = arith.constant 0 : index
    %c0_89 = arith.constant 0 : index
    %204 = vector.load %arg2[%c30, %c0_88, %c0_89] : memref<49x8x256xf32, #tpu.memory_space<vmem>>, vector<1x8x256xf32>
    %205 = vector.shape_cast %204 : vector<1x8x256xf32> to vector<8x256xf32>
    %206 = arith.mulf %203, %205 : vector<8x256xf32>
    %207 = arith.addf %202, %206 : vector<8x256xf32>
    %c240_i32 = arith.constant 240 : i32
    %208 = tpu.dynamic_rotate %1 by %c240_i32 dim 1 : vector<8x256xf32>, i32 -> vector<8x256xf32>
    %c31 = arith.constant 31 : index
    %c0_90 = arith.constant 0 : index
    %c0_91 = arith.constant 0 : index
    %209 = vector.load %arg2[%c31, %c0_90, %c0_91] : memref<49x8x256xf32, #tpu.memory_space<vmem>>, vector<1x8x256xf32>
    %210 = vector.shape_cast %209 : vector<1x8x256xf32> to vector<8x256xf32>
    %211 = arith.mulf %208, %210 : vector<8x256xf32>
    %212 = arith.addf %207, %211 : vector<8x256xf32>
    %c239_i32 = arith.constant 239 : i32
    %213 = tpu.dynamic_rotate %1 by %c239_i32 dim 1 : vector<8x256xf32>, i32 -> vector<8x256xf32>
    %c32 = arith.constant 32 : index
    %c0_92 = arith.constant 0 : index
    %c0_93 = arith.constant 0 : index
    %214 = vector.load %arg2[%c32, %c0_92, %c0_93] : memref<49x8x256xf32, #tpu.memory_space<vmem>>, vector<1x8x256xf32>
    %215 = vector.shape_cast %214 : vector<1x8x256xf32> to vector<8x256xf32>
    %216 = arith.mulf %213, %215 : vector<8x256xf32>
    %217 = arith.addf %212, %216 : vector<8x256xf32>
    %c238_i32 = arith.constant 238 : i32
    %218 = tpu.dynamic_rotate %1 by %c238_i32 dim 1 : vector<8x256xf32>, i32 -> vector<8x256xf32>
    %c33 = arith.constant 33 : index
    %c0_94 = arith.constant 0 : index
    %c0_95 = arith.constant 0 : index
    %219 = vector.load %arg2[%c33, %c0_94, %c0_95] : memref<49x8x256xf32, #tpu.memory_space<vmem>>, vector<1x8x256xf32>
    %220 = vector.shape_cast %219 : vector<1x8x256xf32> to vector<8x256xf32>
    %221 = arith.mulf %218, %220 : vector<8x256xf32>
    %222 = arith.addf %217, %221 : vector<8x256xf32>
    %c237_i32 = arith.constant 237 : i32
    %223 = tpu.dynamic_rotate %1 by %c237_i32 dim 1 : vector<8x256xf32>, i32 -> vector<8x256xf32>
    %c34 = arith.constant 34 : index
    %c0_96 = arith.constant 0 : index
    %c0_97 = arith.constant 0 : index
    %224 = vector.load %arg2[%c34, %c0_96, %c0_97] : memref<49x8x256xf32, #tpu.memory_space<vmem>>, vector<1x8x256xf32>
    %225 = vector.shape_cast %224 : vector<1x8x256xf32> to vector<8x256xf32>
    %226 = arith.mulf %223, %225 : vector<8x256xf32>
    %227 = arith.addf %222, %226 : vector<8x256xf32>
    %c227_i32 = arith.constant 227 : i32
    %228 = tpu.dynamic_rotate %1 by %c227_i32 dim 1 : vector<8x256xf32>, i32 -> vector<8x256xf32>
    %c35 = arith.constant 35 : index
    %c0_98 = arith.constant 0 : index
    %c0_99 = arith.constant 0 : index
    %229 = vector.load %arg2[%c35, %c0_98, %c0_99] : memref<49x8x256xf32, #tpu.memory_space<vmem>>, vector<1x8x256xf32>
    %230 = vector.shape_cast %229 : vector<1x8x256xf32> to vector<8x256xf32>
    %231 = arith.mulf %228, %230 : vector<8x256xf32>
    %232 = arith.addf %227, %231 : vector<8x256xf32>
    %c226_i32 = arith.constant 226 : i32
    %233 = tpu.dynamic_rotate %1 by %c226_i32 dim 1 : vector<8x256xf32>, i32 -> vector<8x256xf32>
    %c36 = arith.constant 36 : index
    %c0_100 = arith.constant 0 : index
    %c0_101 = arith.constant 0 : index
    %234 = vector.load %arg2[%c36, %c0_100, %c0_101] : memref<49x8x256xf32, #tpu.memory_space<vmem>>, vector<1x8x256xf32>
    %235 = vector.shape_cast %234 : vector<1x8x256xf32> to vector<8x256xf32>
    %236 = arith.mulf %233, %235 : vector<8x256xf32>
    %237 = arith.addf %232, %236 : vector<8x256xf32>
    %c225_i32 = arith.constant 225 : i32
    %238 = tpu.dynamic_rotate %1 by %c225_i32 dim 1 : vector<8x256xf32>, i32 -> vector<8x256xf32>
    %c37 = arith.constant 37 : index
    %c0_102 = arith.constant 0 : index
    %c0_103 = arith.constant 0 : index
    %239 = vector.load %arg2[%c37, %c0_102, %c0_103] : memref<49x8x256xf32, #tpu.memory_space<vmem>>, vector<1x8x256xf32>
    %240 = vector.shape_cast %239 : vector<1x8x256xf32> to vector<8x256xf32>
    %241 = arith.mulf %238, %240 : vector<8x256xf32>
    %242 = arith.addf %237, %241 : vector<8x256xf32>
    %c224_i32 = arith.constant 224 : i32
    %243 = tpu.dynamic_rotate %1 by %c224_i32 dim 1 : vector<8x256xf32>, i32 -> vector<8x256xf32>
    %c38 = arith.constant 38 : index
    %c0_104 = arith.constant 0 : index
    %c0_105 = arith.constant 0 : index
    %244 = vector.load %arg2[%c38, %c0_104, %c0_105] : memref<49x8x256xf32, #tpu.memory_space<vmem>>, vector<1x8x256xf32>
    %245 = vector.shape_cast %244 : vector<1x8x256xf32> to vector<8x256xf32>
    %246 = arith.mulf %243, %245 : vector<8x256xf32>
    %247 = arith.addf %242, %246 : vector<8x256xf32>
    %c223_i32 = arith.constant 223 : i32
    %248 = tpu.dynamic_rotate %1 by %c223_i32 dim 1 : vector<8x256xf32>, i32 -> vector<8x256xf32>
    %c39 = arith.constant 39 : index
    %c0_106 = arith.constant 0 : index
    %c0_107 = arith.constant 0 : index
    %249 = vector.load %arg2[%c39, %c0_106, %c0_107] : memref<49x8x256xf32, #tpu.memory_space<vmem>>, vector<1x8x256xf32>
    %250 = vector.shape_cast %249 : vector<1x8x256xf32> to vector<8x256xf32>
    %251 = arith.mulf %248, %250 : vector<8x256xf32>
    %252 = arith.addf %247, %251 : vector<8x256xf32>
    %c222_i32 = arith.constant 222 : i32
    %253 = tpu.dynamic_rotate %1 by %c222_i32 dim 1 : vector<8x256xf32>, i32 -> vector<8x256xf32>
    %c40 = arith.constant 40 : index
    %c0_108 = arith.constant 0 : index
    %c0_109 = arith.constant 0 : index
    %254 = vector.load %arg2[%c40, %c0_108, %c0_109] : memref<49x8x256xf32, #tpu.memory_space<vmem>>, vector<1x8x256xf32>
    %255 = vector.shape_cast %254 : vector<1x8x256xf32> to vector<8x256xf32>
    %256 = arith.mulf %253, %255 : vector<8x256xf32>
    %257 = arith.addf %252, %256 : vector<8x256xf32>
    %c221_i32 = arith.constant 221 : i32
    %258 = tpu.dynamic_rotate %1 by %c221_i32 dim 1 : vector<8x256xf32>, i32 -> vector<8x256xf32>
    %c41 = arith.constant 41 : index
    %c0_110 = arith.constant 0 : index
    %c0_111 = arith.constant 0 : index
    %259 = vector.load %arg2[%c41, %c0_110, %c0_111] : memref<49x8x256xf32, #tpu.memory_space<vmem>>, vector<1x8x256xf32>
    %260 = vector.shape_cast %259 : vector<1x8x256xf32> to vector<8x256xf32>
    %261 = arith.mulf %258, %260 : vector<8x256xf32>
    %262 = arith.addf %257, %261 : vector<8x256xf32>
    %c211_i32 = arith.constant 211 : i32
    %263 = tpu.dynamic_rotate %1 by %c211_i32 dim 1 : vector<8x256xf32>, i32 -> vector<8x256xf32>
    %c42 = arith.constant 42 : index
    %c0_112 = arith.constant 0 : index
    %c0_113 = arith.constant 0 : index
    %264 = vector.load %arg2[%c42, %c0_112, %c0_113] : memref<49x8x256xf32, #tpu.memory_space<vmem>>, vector<1x8x256xf32>
    %265 = vector.shape_cast %264 : vector<1x8x256xf32> to vector<8x256xf32>
    %266 = arith.mulf %263, %265 : vector<8x256xf32>
    %267 = arith.addf %262, %266 : vector<8x256xf32>
    %c210_i32 = arith.constant 210 : i32
    %268 = tpu.dynamic_rotate %1 by %c210_i32 dim 1 : vector<8x256xf32>, i32 -> vector<8x256xf32>
    %c43 = arith.constant 43 : index
    %c0_114 = arith.constant 0 : index
    %c0_115 = arith.constant 0 : index
    %269 = vector.load %arg2[%c43, %c0_114, %c0_115] : memref<49x8x256xf32, #tpu.memory_space<vmem>>, vector<1x8x256xf32>
    %270 = vector.shape_cast %269 : vector<1x8x256xf32> to vector<8x256xf32>
    %271 = arith.mulf %268, %270 : vector<8x256xf32>
    %272 = arith.addf %267, %271 : vector<8x256xf32>
    %c209_i32 = arith.constant 209 : i32
    %273 = tpu.dynamic_rotate %1 by %c209_i32 dim 1 : vector<8x256xf32>, i32 -> vector<8x256xf32>
    %c44 = arith.constant 44 : index
    %c0_116 = arith.constant 0 : index
    %c0_117 = arith.constant 0 : index
    %274 = vector.load %arg2[%c44, %c0_116, %c0_117] : memref<49x8x256xf32, #tpu.memory_space<vmem>>, vector<1x8x256xf32>
    %275 = vector.shape_cast %274 : vector<1x8x256xf32> to vector<8x256xf32>
    %276 = arith.mulf %273, %275 : vector<8x256xf32>
    %277 = arith.addf %272, %276 : vector<8x256xf32>
    %c208_i32 = arith.constant 208 : i32
    %278 = tpu.dynamic_rotate %1 by %c208_i32 dim 1 : vector<8x256xf32>, i32 -> vector<8x256xf32>
    %c45 = arith.constant 45 : index
    %c0_118 = arith.constant 0 : index
    %c0_119 = arith.constant 0 : index
    %279 = vector.load %arg2[%c45, %c0_118, %c0_119] : memref<49x8x256xf32, #tpu.memory_space<vmem>>, vector<1x8x256xf32>
    %280 = vector.shape_cast %279 : vector<1x8x256xf32> to vector<8x256xf32>
    %281 = arith.mulf %278, %280 : vector<8x256xf32>
    %282 = arith.addf %277, %281 : vector<8x256xf32>
    %c207_i32 = arith.constant 207 : i32
    %283 = tpu.dynamic_rotate %1 by %c207_i32 dim 1 : vector<8x256xf32>, i32 -> vector<8x256xf32>
    %c46 = arith.constant 46 : index
    %c0_120 = arith.constant 0 : index
    %c0_121 = arith.constant 0 : index
    %284 = vector.load %arg2[%c46, %c0_120, %c0_121] : memref<49x8x256xf32, #tpu.memory_space<vmem>>, vector<1x8x256xf32>
    %285 = vector.shape_cast %284 : vector<1x8x256xf32> to vector<8x256xf32>
    %286 = arith.mulf %283, %285 : vector<8x256xf32>
    %287 = arith.addf %282, %286 : vector<8x256xf32>
    %c206_i32 = arith.constant 206 : i32
    %288 = tpu.dynamic_rotate %1 by %c206_i32 dim 1 : vector<8x256xf32>, i32 -> vector<8x256xf32>
    %c47 = arith.constant 47 : index
    %c0_122 = arith.constant 0 : index
    %c0_123 = arith.constant 0 : index
    %289 = vector.load %arg2[%c47, %c0_122, %c0_123] : memref<49x8x256xf32, #tpu.memory_space<vmem>>, vector<1x8x256xf32>
    %290 = vector.shape_cast %289 : vector<1x8x256xf32> to vector<8x256xf32>
    %291 = arith.mulf %288, %290 : vector<8x256xf32>
    %292 = arith.addf %287, %291 : vector<8x256xf32>
    %c205_i32 = arith.constant 205 : i32
    %293 = tpu.dynamic_rotate %1 by %c205_i32 dim 1 : vector<8x256xf32>, i32 -> vector<8x256xf32>
    %c48 = arith.constant 48 : index
    %c0_124 = arith.constant 0 : index
    %c0_125 = arith.constant 0 : index
    %294 = vector.load %arg2[%c48, %c0_124, %c0_125] : memref<49x8x256xf32, #tpu.memory_space<vmem>>, vector<1x8x256xf32>
    %295 = vector.shape_cast %294 : vector<1x8x256xf32> to vector<8x256xf32>
    %296 = arith.mulf %293, %295 : vector<8x256xf32>
    %297 = arith.addf %292, %296 : vector<8x256xf32>
    %298 = vector.broadcast %52 : vector<8x1xf32> to vector<8x256xf32>
    %299 = arith.addf %297, %298 : vector<8x256xf32>
    %c0_126 = arith.constant 0 : index
    %c0_127 = arith.constant 0 : index
    %300 = vector.load %arg8[%c0_126, %c0_127] : memref<8x1xf32, #tpu.memory_space<vmem>>, vector<8x1xf32>
    %c0_128 = arith.constant 0 : index
    %c0_129 = arith.constant 0 : index
    %301 = vector.load %arg9[%c0_128, %c0_129] : memref<8x1xf32, #tpu.memory_space<vmem>>, vector<8x1xf32>
    %cst_130 = arith.constant dense<0.000000e+00> : vector<8xf32>
    %302 = vector.multi_reduction <add>, %299, %cst_130 [1] : vector<8x256xf32> to vector<8xf32>
    %303 = vector.shape_cast %302 : vector<8xf32> to vector<8x1xf32>
    %cst_131 = arith.constant dense<0.000000e+00> : vector<1xf32>
    %304 = vector.multi_reduction <add>, %303, %cst_131 [0] : vector<8x1xf32> to vector<1xf32>
    %305 = vector.shape_cast %304 : vector<1xf32> to vector<1x1xf32>
    %cst_132 = arith.constant 4.8828125E-4 : f32
    %306 = vector.broadcast %cst_132 : f32 to vector<1x1xf32>
    %307 = arith.mulf %305, %306 : vector<1x1xf32>
    %308 = vector.broadcast %307 : vector<1x1xf32> to vector<8x256xf32>
    %309 = arith.subf %299, %308 : vector<8x256xf32>
    %310 = arith.mulf %309, %309 : vector<8x256xf32>
    %cst_133 = arith.constant dense<0.000000e+00> : vector<8xf32>
    %311 = vector.multi_reduction <add>, %310, %cst_133 [1] : vector<8x256xf32> to vector<8xf32>
    %312 = vector.shape_cast %311 : vector<8xf32> to vector<8x1xf32>
    %cst_134 = arith.constant dense<0.000000e+00> : vector<1xf32>
    %313 = vector.multi_reduction <add>, %312, %cst_134 [0] : vector<8x1xf32> to vector<1xf32>
    %314 = vector.shape_cast %313 : vector<1xf32> to vector<1x1xf32>
    %cst_135 = arith.constant 4.8828125E-4 : f32
    %315 = vector.broadcast %cst_135 : f32 to vector<1x1xf32>
    %316 = arith.mulf %314, %315 : vector<1x1xf32>
    %cst_136 = arith.constant 9.99999974E-6 : f32
    %317 = vector.broadcast %cst_136 : f32 to vector<1x1xf32>
    %318 = arith.addf %316, %317 : vector<1x1xf32>
    %319 = math.rsqrt %318 : vector<1x1xf32>
    %320 = vector.broadcast %319 : vector<1x1xf32> to vector<8x256xf32>
    %321 = arith.mulf %309, %320 : vector<8x256xf32>
    %322 = vector.broadcast %300 : vector<8x1xf32> to vector<8x256xf32>
    %323 = arith.mulf %321, %322 : vector<8x256xf32>
    %324 = vector.broadcast %301 : vector<8x1xf32> to vector<8x256xf32>
    %325 = arith.addf %323, %324 : vector<8x256xf32>
    %cst_137 = arith.constant 0.000000e+00 : f32
    %326 = vector.broadcast %cst_137 : f32 to vector<32x256xf32>
    %c17_i32_138 = arith.constant 17 : i32
    %327 = tpu.dynamic_rotate %325 by %c17_i32_138 dim 1 : vector<8x256xf32>, i32 -> vector<8x256xf32>
    %c0_139 = arith.constant 0 : index
    %c0_140 = arith.constant 0 : index
    %c0_141 = arith.constant 0 : index
    %328 = vector.load %arg3[%c0_139, %c0_140, %c0_141] : memref<9x1x256xf32, #tpu.memory_space<vmem>>, vector<1x1x256xf32>
    %329 = vector.shape_cast %328 : vector<1x1x256xf32> to vector<1x256xf32>
    %330 = vector.broadcast %329 : vector<1x256xf32> to vector<8x256xf32>
    %331 = arith.mulf %327, %330 : vector<8x256xf32>
    %c0_142 = arith.constant 0 : index
    %c0_143 = arith.constant 0 : index
    %c0_144 = arith.constant 0 : index
    %332 = vector.load %arg10[%c0_142, %c0_143, %c0_144] : memref<9x32x8xf32, #tpu.memory_space<vmem>>, vector<1x32x8xf32>
    %333 = vector.shape_cast %332 : vector<1x32x8xf32> to vector<32x8xf32>
    %334 = arith.truncf %333 : vector<32x8xf32> to vector<32x8xbf16>
    %335 = arith.truncf %331 : vector<8x256xf32> to vector<8x256xbf16>
    %cst_145 = arith.constant dense<0.000000e+00> : vector<32x256xf32>
    %336 = tpu.matmul %334, %335, %cst_145 {dimension_numbers = #tpu.dot_dimension_numbers<[1], [0], [0], [1], [0, 0, 1, 1], [], []>} : vector<32x8xbf16>, vector<8x256xbf16>, vector<32x256xf32> -> vector<32x256xf32>
    %337 = arith.addf %326, %336 : vector<32x256xf32>
    %c16_i32_146 = arith.constant 16 : i32
    %338 = tpu.dynamic_rotate %325 by %c16_i32_146 dim 1 : vector<8x256xf32>, i32 -> vector<8x256xf32>
    %c1_147 = arith.constant 1 : index
    %c0_148 = arith.constant 0 : index
    %c0_149 = arith.constant 0 : index
    %339 = vector.load %arg3[%c1_147, %c0_148, %c0_149] : memref<9x1x256xf32, #tpu.memory_space<vmem>>, vector<1x1x256xf32>
    %340 = vector.shape_cast %339 : vector<1x1x256xf32> to vector<1x256xf32>
    %341 = vector.broadcast %340 : vector<1x256xf32> to vector<8x256xf32>
    %342 = arith.mulf %338, %341 : vector<8x256xf32>
    %c1_150 = arith.constant 1 : index
    %c0_151 = arith.constant 0 : index
    %c0_152 = arith.constant 0 : index
    %343 = vector.load %arg10[%c1_150, %c0_151, %c0_152] : memref<9x32x8xf32, #tpu.memory_space<vmem>>, vector<1x32x8xf32>
    %344 = vector.shape_cast %343 : vector<1x32x8xf32> to vector<32x8xf32>
    %345 = arith.truncf %344 : vector<32x8xf32> to vector<32x8xbf16>
    %346 = arith.truncf %342 : vector<8x256xf32> to vector<8x256xbf16>
    %cst_153 = arith.constant dense<0.000000e+00> : vector<32x256xf32>
    %347 = tpu.matmul %345, %346, %cst_153 {dimension_numbers = #tpu.dot_dimension_numbers<[1], [0], [0], [1], [0, 0, 1, 1], [], []>} : vector<32x8xbf16>, vector<8x256xbf16>, vector<32x256xf32> -> vector<32x256xf32>
    %348 = arith.addf %337, %347 : vector<32x256xf32>
    %c15_i32_154 = arith.constant 15 : i32
    %349 = tpu.dynamic_rotate %325 by %c15_i32_154 dim 1 : vector<8x256xf32>, i32 -> vector<8x256xf32>
    %c2_155 = arith.constant 2 : index
    %c0_156 = arith.constant 0 : index
    %c0_157 = arith.constant 0 : index
    %350 = vector.load %arg3[%c2_155, %c0_156, %c0_157] : memref<9x1x256xf32, #tpu.memory_space<vmem>>, vector<1x1x256xf32>
    %351 = vector.shape_cast %350 : vector<1x1x256xf32> to vector<1x256xf32>
    %352 = vector.broadcast %351 : vector<1x256xf32> to vector<8x256xf32>
    %353 = arith.mulf %349, %352 : vector<8x256xf32>
    %c2_158 = arith.constant 2 : index
    %c0_159 = arith.constant 0 : index
    %c0_160 = arith.constant 0 : index
    %354 = vector.load %arg10[%c2_158, %c0_159, %c0_160] : memref<9x32x8xf32, #tpu.memory_space<vmem>>, vector<1x32x8xf32>
    %355 = vector.shape_cast %354 : vector<1x32x8xf32> to vector<32x8xf32>
    %356 = arith.truncf %355 : vector<32x8xf32> to vector<32x8xbf16>
    %357 = arith.truncf %353 : vector<8x256xf32> to vector<8x256xbf16>
    %cst_161 = arith.constant dense<0.000000e+00> : vector<32x256xf32>
    %358 = tpu.matmul %356, %357, %cst_161 {dimension_numbers = #tpu.dot_dimension_numbers<[1], [0], [0], [1], [0, 0, 1, 1], [], []>} : vector<32x8xbf16>, vector<8x256xbf16>, vector<32x256xf32> -> vector<32x256xf32>
    %359 = arith.addf %348, %358 : vector<32x256xf32>
    %c1_i32_162 = arith.constant 1 : i32
    %360 = tpu.dynamic_rotate %325 by %c1_i32_162 dim 1 : vector<8x256xf32>, i32 -> vector<8x256xf32>
    %c3_163 = arith.constant 3 : index
    %c0_164 = arith.constant 0 : index
    %c0_165 = arith.constant 0 : index
    %361 = vector.load %arg3[%c3_163, %c0_164, %c0_165] : memref<9x1x256xf32, #tpu.memory_space<vmem>>, vector<1x1x256xf32>
    %362 = vector.shape_cast %361 : vector<1x1x256xf32> to vector<1x256xf32>
    %363 = vector.broadcast %362 : vector<1x256xf32> to vector<8x256xf32>
    %364 = arith.mulf %360, %363 : vector<8x256xf32>
    %c3_166 = arith.constant 3 : index
    %c0_167 = arith.constant 0 : index
    %c0_168 = arith.constant 0 : index
    %365 = vector.load %arg10[%c3_166, %c0_167, %c0_168] : memref<9x32x8xf32, #tpu.memory_space<vmem>>, vector<1x32x8xf32>
    %366 = vector.shape_cast %365 : vector<1x32x8xf32> to vector<32x8xf32>
    %367 = arith.truncf %366 : vector<32x8xf32> to vector<32x8xbf16>
    %368 = arith.truncf %364 : vector<8x256xf32> to vector<8x256xbf16>
    %cst_169 = arith.constant dense<0.000000e+00> : vector<32x256xf32>
    %369 = tpu.matmul %367, %368, %cst_169 {dimension_numbers = #tpu.dot_dimension_numbers<[1], [0], [0], [1], [0, 0, 1, 1], [], []>} : vector<32x8xbf16>, vector<8x256xbf16>, vector<32x256xf32> -> vector<32x256xf32>
    %370 = arith.addf %359, %369 : vector<32x256xf32>
    %c4_170 = arith.constant 4 : index
    %c0_171 = arith.constant 0 : index
    %c0_172 = arith.constant 0 : index
    %371 = vector.load %arg3[%c4_170, %c0_171, %c0_172] : memref<9x1x256xf32, #tpu.memory_space<vmem>>, vector<1x1x256xf32>
    %372 = vector.shape_cast %371 : vector<1x1x256xf32> to vector<1x256xf32>
    %373 = vector.broadcast %372 : vector<1x256xf32> to vector<8x256xf32>
    %374 = arith.mulf %325, %373 : vector<8x256xf32>
    %c4_173 = arith.constant 4 : index
    %c0_174 = arith.constant 0 : index
    %c0_175 = arith.constant 0 : index
    %375 = vector.load %arg10[%c4_173, %c0_174, %c0_175] : memref<9x32x8xf32, #tpu.memory_space<vmem>>, vector<1x32x8xf32>
    %376 = vector.shape_cast %375 : vector<1x32x8xf32> to vector<32x8xf32>
    %377 = arith.truncf %376 : vector<32x8xf32> to vector<32x8xbf16>
    %378 = arith.truncf %374 : vector<8x256xf32> to vector<8x256xbf16>
    %cst_176 = arith.constant dense<0.000000e+00> : vector<32x256xf32>
    %379 = tpu.matmul %377, %378, %cst_176 {dimension_numbers = #tpu.dot_dimension_numbers<[1], [0], [0], [1], [0, 0, 1, 1], [], []>} : vector<32x8xbf16>, vector<8x256xbf16>, vector<32x256xf32> -> vector<32x256xf32>
    %380 = arith.addf %370, %379 : vector<32x256xf32>
    %c255_i32_177 = arith.constant 255 : i32
    %381 = tpu.dynamic_rotate %325 by %c255_i32_177 dim 1 : vector<8x256xf32>, i32 -> vector<8x256xf32>
    %c5_178 = arith.constant 5 : index
    %c0_179 = arith.constant 0 : index
    %c0_180 = arith.constant 0 : index
    %382 = vector.load %arg3[%c5_178, %c0_179, %c0_180] : memref<9x1x256xf32, #tpu.memory_space<vmem>>, vector<1x1x256xf32>
    %383 = vector.shape_cast %382 : vector<1x1x256xf32> to vector<1x256xf32>
    %384 = vector.broadcast %383 : vector<1x256xf32> to vector<8x256xf32>
    %385 = arith.mulf %381, %384 : vector<8x256xf32>
    %c5_181 = arith.constant 5 : index
    %c0_182 = arith.constant 0 : index
    %c0_183 = arith.constant 0 : index
    %386 = vector.load %arg10[%c5_181, %c0_182, %c0_183] : memref<9x32x8xf32, #tpu.memory_space<vmem>>, vector<1x32x8xf32>
    %387 = vector.shape_cast %386 : vector<1x32x8xf32> to vector<32x8xf32>
    %388 = arith.truncf %387 : vector<32x8xf32> to vector<32x8xbf16>
    %389 = arith.truncf %385 : vector<8x256xf32> to vector<8x256xbf16>
    %cst_184 = arith.constant dense<0.000000e+00> : vector<32x256xf32>
    %390 = tpu.matmul %388, %389, %cst_184 {dimension_numbers = #tpu.dot_dimension_numbers<[1], [0], [0], [1], [0, 0, 1, 1], [], []>} : vector<32x8xbf16>, vector<8x256xbf16>, vector<32x256xf32> -> vector<32x256xf32>
    %391 = arith.addf %380, %390 : vector<32x256xf32>
    %c241_i32_185 = arith.constant 241 : i32
    %392 = tpu.dynamic_rotate %325 by %c241_i32_185 dim 1 : vector<8x256xf32>, i32 -> vector<8x256xf32>
    %c6_186 = arith.constant 6 : index
    %c0_187 = arith.constant 0 : index
    %c0_188 = arith.constant 0 : index
    %393 = vector.load %arg3[%c6_186, %c0_187, %c0_188] : memref<9x1x256xf32, #tpu.memory_space<vmem>>, vector<1x1x256xf32>
    %394 = vector.shape_cast %393 : vector<1x1x256xf32> to vector<1x256xf32>
    %395 = vector.broadcast %394 : vector<1x256xf32> to vector<8x256xf32>
    %396 = arith.mulf %392, %395 : vector<8x256xf32>
    %c6_189 = arith.constant 6 : index
    %c0_190 = arith.constant 0 : index
    %c0_191 = arith.constant 0 : index
    %397 = vector.load %arg10[%c6_189, %c0_190, %c0_191] : memref<9x32x8xf32, #tpu.memory_space<vmem>>, vector<1x32x8xf32>
    %398 = vector.shape_cast %397 : vector<1x32x8xf32> to vector<32x8xf32>
    %399 = arith.truncf %398 : vector<32x8xf32> to vector<32x8xbf16>
    %400 = arith.truncf %396 : vector<8x256xf32> to vector<8x256xbf16>
    %cst_192 = arith.constant dense<0.000000e+00> : vector<32x256xf32>
    %401 = tpu.matmul %399, %400, %cst_192 {dimension_numbers = #tpu.dot_dimension_numbers<[1], [0], [0], [1], [0, 0, 1, 1], [], []>} : vector<32x8xbf16>, vector<8x256xbf16>, vector<32x256xf32> -> vector<32x256xf32>
    %402 = arith.addf %391, %401 : vector<32x256xf32>
    %c240_i32_193 = arith.constant 240 : i32
    %403 = tpu.dynamic_rotate %325 by %c240_i32_193 dim 1 : vector<8x256xf32>, i32 -> vector<8x256xf32>
    %c7_194 = arith.constant 7 : index
    %c0_195 = arith.constant 0 : index
    %c0_196 = arith.constant 0 : index
    %404 = vector.load %arg3[%c7_194, %c0_195, %c0_196] : memref<9x1x256xf32, #tpu.memory_space<vmem>>, vector<1x1x256xf32>
    %405 = vector.shape_cast %404 : vector<1x1x256xf32> to vector<1x256xf32>
    %406 = vector.broadcast %405 : vector<1x256xf32> to vector<8x256xf32>
    %407 = arith.mulf %403, %406 : vector<8x256xf32>
    %c7_197 = arith.constant 7 : index
    %c0_198 = arith.constant 0 : index
    %c0_199 = arith.constant 0 : index
    %408 = vector.load %arg10[%c7_197, %c0_198, %c0_199] : memref<9x32x8xf32, #tpu.memory_space<vmem>>, vector<1x32x8xf32>
    %409 = vector.shape_cast %408 : vector<1x32x8xf32> to vector<32x8xf32>
    %410 = arith.truncf %409 : vector<32x8xf32> to vector<32x8xbf16>
    %411 = arith.truncf %407 : vector<8x256xf32> to vector<8x256xbf16>
    %cst_200 = arith.constant dense<0.000000e+00> : vector<32x256xf32>
    %412 = tpu.matmul %410, %411, %cst_200 {dimension_numbers = #tpu.dot_dimension_numbers<[1], [0], [0], [1], [0, 0, 1, 1], [], []>} : vector<32x8xbf16>, vector<8x256xbf16>, vector<32x256xf32> -> vector<32x256xf32>
    %413 = arith.addf %402, %412 : vector<32x256xf32>
    %c239_i32_201 = arith.constant 239 : i32
    %414 = tpu.dynamic_rotate %325 by %c239_i32_201 dim 1 : vector<8x256xf32>, i32 -> vector<8x256xf32>
    %c8_202 = arith.constant 8 : index
    %c0_203 = arith.constant 0 : index
    %c0_204 = arith.constant 0 : index
    %415 = vector.load %arg3[%c8_202, %c0_203, %c0_204] : memref<9x1x256xf32, #tpu.memory_space<vmem>>, vector<1x1x256xf32>
    %416 = vector.shape_cast %415 : vector<1x1x256xf32> to vector<1x256xf32>
    %417 = vector.broadcast %416 : vector<1x256xf32> to vector<8x256xf32>
    %418 = arith.mulf %414, %417 : vector<8x256xf32>
    %c8_205 = arith.constant 8 : index
    %c0_206 = arith.constant 0 : index
    %c0_207 = arith.constant 0 : index
    %419 = vector.load %arg10[%c8_205, %c0_206, %c0_207] : memref<9x32x8xf32, #tpu.memory_space<vmem>>, vector<1x32x8xf32>
    %420 = vector.shape_cast %419 : vector<1x32x8xf32> to vector<32x8xf32>
    %421 = arith.truncf %420 : vector<32x8xf32> to vector<32x8xbf16>
    %422 = arith.truncf %418 : vector<8x256xf32> to vector<8x256xbf16>
    %cst_208 = arith.constant dense<0.000000e+00> : vector<32x256xf32>
    %423 = tpu.matmul %421, %422, %cst_208 {dimension_numbers = #tpu.dot_dimension_numbers<[1], [0], [0], [1], [0, 0, 1, 1], [], []>} : vector<32x8xbf16>, vector<8x256xbf16>, vector<32x256xf32> -> vector<32x256xf32>
    %424 = arith.addf %413, %423 : vector<32x256xf32>
    %c0_209 = arith.constant 0 : index
    %c0_210 = arith.constant 0 : index
    %425 = vector.load %arg11[%c0_209, %c0_210] : memref<32x1xf32, #tpu.memory_space<vmem>>, vector<32x1xf32>
    %426 = vector.broadcast %425 : vector<32x1xf32> to vector<32x256xf32>
    %427 = arith.addf %424, %426 : vector<32x256xf32>
    %cst_211 = arith.constant 5.000000e-01 : f32
    %428 = vector.broadcast %cst_211 : f32 to vector<32x256xf32>
    %429 = arith.mulf %428, %427 : vector<32x256xf32>
    %cst_212 = arith.constant 0.707106769 : f32
    %430 = vector.broadcast %cst_212 : f32 to vector<32x256xf32>
    %431 = arith.mulf %427, %430 : vector<32x256xf32>
    %432 = math.absf %431 : vector<32x256xf32>
    %cst_213 = arith.constant 0.327591091 : f32
    %433 = vector.broadcast %cst_213 : f32 to vector<32x256xf32>
    %434 = arith.mulf %433, %432 : vector<32x256xf32>
    %cst_214 = arith.constant 1.000000e+00 : f32
    %435 = vector.broadcast %cst_214 : f32 to vector<32x256xf32>
    %436 = arith.addf %435, %434 : vector<32x256xf32>
    %cst_215 = arith.constant 1.000000e+00 : f32
    %437 = vector.broadcast %cst_215 : f32 to vector<32x256xf32>
    %438 = arith.divf %437, %436 : vector<32x256xf32>
    %cst_216 = arith.constant 1.06140542 : f32
    %439 = vector.broadcast %cst_216 : f32 to vector<32x256xf32>
    %440 = arith.mulf %439, %438 : vector<32x256xf32>
    %cst_217 = arith.constant -1.45315206 : f32
    %441 = vector.broadcast %cst_217 : f32 to vector<32x256xf32>
    %442 = arith.addf %440, %441 : vector<32x256xf32>
    %443 = arith.mulf %442, %438 : vector<32x256xf32>
    %cst_218 = arith.constant 1.42141378 : f32
    %444 = vector.broadcast %cst_218 : f32 to vector<32x256xf32>
    %445 = arith.addf %443, %444 : vector<32x256xf32>
    %446 = arith.mulf %445, %438 : vector<32x256xf32>
    %cst_219 = arith.constant -0.284496725 : f32
    %447 = vector.broadcast %cst_219 : f32 to vector<32x256xf32>
    %448 = arith.addf %446, %447 : vector<32x256xf32>
    %449 = arith.mulf %448, %438 : vector<32x256xf32>
    %cst_220 = arith.constant 0.254829586 : f32
    %450 = vector.broadcast %cst_220 : f32 to vector<32x256xf32>
    %451 = arith.addf %449, %450 : vector<32x256xf32>
    %452 = arith.mulf %451, %438 : vector<32x256xf32>
    %cst_221 = arith.constant 0.000000e+00 : f32
    %453 = vector.broadcast %cst_221 : f32 to vector<32x256xf32>
    %454 = arith.subf %453, %432 : vector<32x256xf32>
    %455 = arith.mulf %454, %432 : vector<32x256xf32>
    %456 = math.exp %455 : vector<32x256xf32>
    %457 = arith.mulf %452, %456 : vector<32x256xf32>
    %cst_222 = arith.constant 1.000000e+00 : f32
    %458 = vector.broadcast %cst_222 : f32 to vector<32x256xf32>
    %459 = arith.subf %458, %457 : vector<32x256xf32>
    %cst_223 = arith.constant 0.000000e+00 : f32
    %460 = vector.broadcast %cst_223 : f32 to vector<32x256xf32>
    %461 = arith.cmpf oge, %431, %460 : vector<32x256xf32>
    %cst_224 = arith.constant 0.000000e+00 : f32
    %462 = vector.broadcast %cst_224 : f32 to vector<32x256xf32>
    %463 = arith.subf %462, %459 : vector<32x256xf32>
    %464 = arith.select %461, %459, %463 : vector<32x256xi1>, vector<32x256xf32>
    %cst_225 = arith.constant 1.000000e+00 : f32
    %465 = vector.broadcast %cst_225 : f32 to vector<32x256xf32>
    %466 = arith.addf %465, %464 : vector<32x256xf32>
    %467 = arith.mulf %429, %466 : vector<32x256xf32>
    %c0_226 = arith.constant 0 : index
    %c0_227 = arith.constant 0 : index
    %468 = vector.load %arg12[%c0_226, %c0_227] : memref<32x1xf32, #tpu.memory_space<vmem>>, vector<32x1xf32>
    %c0_228 = arith.constant 0 : index
    %c0_229 = arith.constant 0 : index
    %469 = vector.load %arg13[%c0_228, %c0_229] : memref<32x1xf32, #tpu.memory_space<vmem>>, vector<32x1xf32>
    %cst_230 = arith.constant dense<0.000000e+00> : vector<32xf32>
    %470 = vector.multi_reduction <add>, %467, %cst_230 [1] : vector<32x256xf32> to vector<32xf32>
    %471 = vector.shape_cast %470 : vector<32xf32> to vector<32x1xf32>
    %cst_231 = arith.constant dense<0.000000e+00> : vector<1xf32>
    %472 = vector.multi_reduction <add>, %471, %cst_231 [0] : vector<32x1xf32> to vector<1xf32>
    %473 = vector.shape_cast %472 : vector<1xf32> to vector<1x1xf32>
    %cst_232 = arith.constant 1.22070313E-4 : f32
    %474 = vector.broadcast %cst_232 : f32 to vector<1x1xf32>
    %475 = arith.mulf %473, %474 : vector<1x1xf32>
    %476 = vector.broadcast %475 : vector<1x1xf32> to vector<32x256xf32>
    %477 = arith.subf %467, %476 : vector<32x256xf32>
    %478 = arith.mulf %477, %477 : vector<32x256xf32>
    %cst_233 = arith.constant dense<0.000000e+00> : vector<32xf32>
    %479 = vector.multi_reduction <add>, %478, %cst_233 [1] : vector<32x256xf32> to vector<32xf32>
    %480 = vector.shape_cast %479 : vector<32xf32> to vector<32x1xf32>
    %cst_234 = arith.constant dense<0.000000e+00> : vector<1xf32>
    %481 = vector.multi_reduction <add>, %480, %cst_234 [0] : vector<32x1xf32> to vector<1xf32>
    %482 = vector.shape_cast %481 : vector<1xf32> to vector<1x1xf32>
    %cst_235 = arith.constant 1.22070313E-4 : f32
    %483 = vector.broadcast %cst_235 : f32 to vector<1x1xf32>
    %484 = arith.mulf %482, %483 : vector<1x1xf32>
    %cst_236 = arith.constant 9.99999974E-6 : f32
    %485 = vector.broadcast %cst_236 : f32 to vector<1x1xf32>
    %486 = arith.addf %484, %485 : vector<1x1xf32>
    %487 = math.rsqrt %486 : vector<1x1xf32>
    %488 = vector.broadcast %487 : vector<1x1xf32> to vector<32x256xf32>
    %489 = arith.mulf %477, %488 : vector<32x256xf32>
    %490 = vector.broadcast %468 : vector<32x1xf32> to vector<32x256xf32>
    %491 = arith.mulf %489, %490 : vector<32x256xf32>
    %492 = vector.broadcast %469 : vector<32x1xf32> to vector<32x256xf32>
    %493 = arith.addf %491, %492 : vector<32x256xf32>
    %cst_237 = arith.constant 0.000000e+00 : f32
    %494 = vector.broadcast %cst_237 : f32 to vector<16x256xf32>
    %c17_i32_238 = arith.constant 17 : i32
    %495 = tpu.dynamic_rotate %493 by %c17_i32_238 dim 1 : vector<32x256xf32>, i32 -> vector<32x256xf32>
    %c0_239 = arith.constant 0 : index
    %c0_240 = arith.constant 0 : index
    %c0_241 = arith.constant 0 : index
    %496 = vector.load %arg3[%c0_239, %c0_240, %c0_241] : memref<9x1x256xf32, #tpu.memory_space<vmem>>, vector<1x1x256xf32>
    %497 = vector.shape_cast %496 : vector<1x1x256xf32> to vector<1x256xf32>
    %498 = vector.broadcast %497 : vector<1x256xf32> to vector<32x256xf32>
    %499 = arith.mulf %495, %498 : vector<32x256xf32>
    %c0_242 = arith.constant 0 : index
    %c0_243 = arith.constant 0 : index
    %c0_244 = arith.constant 0 : index
    %500 = vector.load %arg14[%c0_242, %c0_243, %c0_244] : memref<9x16x32xf32, #tpu.memory_space<vmem>>, vector<1x16x32xf32>
    %501 = vector.shape_cast %500 : vector<1x16x32xf32> to vector<16x32xf32>
    %502 = arith.truncf %501 : vector<16x32xf32> to vector<16x32xbf16>
    %503 = arith.truncf %499 : vector<32x256xf32> to vector<32x256xbf16>
    %cst_245 = arith.constant dense<0.000000e+00> : vector<16x256xf32>
    %504 = tpu.matmul %502, %503, %cst_245 {dimension_numbers = #tpu.dot_dimension_numbers<[1], [0], [0], [1], [0, 0, 1, 1], [], []>} : vector<16x32xbf16>, vector<32x256xbf16>, vector<16x256xf32> -> vector<16x256xf32>
    %505 = arith.addf %494, %504 : vector<16x256xf32>
    %c16_i32_246 = arith.constant 16 : i32
    %506 = tpu.dynamic_rotate %493 by %c16_i32_246 dim 1 : vector<32x256xf32>, i32 -> vector<32x256xf32>
    %c1_247 = arith.constant 1 : index
    %c0_248 = arith.constant 0 : index
    %c0_249 = arith.constant 0 : index
    %507 = vector.load %arg3[%c1_247, %c0_248, %c0_249] : memref<9x1x256xf32, #tpu.memory_space<vmem>>, vector<1x1x256xf32>
    %508 = vector.shape_cast %507 : vector<1x1x256xf32> to vector<1x256xf32>
    %509 = vector.broadcast %508 : vector<1x256xf32> to vector<32x256xf32>
    %510 = arith.mulf %506, %509 : vector<32x256xf32>
    %c1_250 = arith.constant 1 : index
    %c0_251 = arith.constant 0 : index
    %c0_252 = arith.constant 0 : index
    %511 = vector.load %arg14[%c1_250, %c0_251, %c0_252] : memref<9x16x32xf32, #tpu.memory_space<vmem>>, vector<1x16x32xf32>
    %512 = vector.shape_cast %511 : vector<1x16x32xf32> to vector<16x32xf32>
    %513 = arith.truncf %512 : vector<16x32xf32> to vector<16x32xbf16>
    %514 = arith.truncf %510 : vector<32x256xf32> to vector<32x256xbf16>
    %cst_253 = arith.constant dense<0.000000e+00> : vector<16x256xf32>
    %515 = tpu.matmul %513, %514, %cst_253 {dimension_numbers = #tpu.dot_dimension_numbers<[1], [0], [0], [1], [0, 0, 1, 1], [], []>} : vector<16x32xbf16>, vector<32x256xbf16>, vector<16x256xf32> -> vector<16x256xf32>
    %516 = arith.addf %505, %515 : vector<16x256xf32>
    %c15_i32_254 = arith.constant 15 : i32
    %517 = tpu.dynamic_rotate %493 by %c15_i32_254 dim 1 : vector<32x256xf32>, i32 -> vector<32x256xf32>
    %c2_255 = arith.constant 2 : index
    %c0_256 = arith.constant 0 : index
    %c0_257 = arith.constant 0 : index
    %518 = vector.load %arg3[%c2_255, %c0_256, %c0_257] : memref<9x1x256xf32, #tpu.memory_space<vmem>>, vector<1x1x256xf32>
    %519 = vector.shape_cast %518 : vector<1x1x256xf32> to vector<1x256xf32>
    %520 = vector.broadcast %519 : vector<1x256xf32> to vector<32x256xf32>
    %521 = arith.mulf %517, %520 : vector<32x256xf32>
    %c2_258 = arith.constant 2 : index
    %c0_259 = arith.constant 0 : index
    %c0_260 = arith.constant 0 : index
    %522 = vector.load %arg14[%c2_258, %c0_259, %c0_260] : memref<9x16x32xf32, #tpu.memory_space<vmem>>, vector<1x16x32xf32>
    %523 = vector.shape_cast %522 : vector<1x16x32xf32> to vector<16x32xf32>
    %524 = arith.truncf %523 : vector<16x32xf32> to vector<16x32xbf16>
    %525 = arith.truncf %521 : vector<32x256xf32> to vector<32x256xbf16>
    %cst_261 = arith.constant dense<0.000000e+00> : vector<16x256xf32>
    %526 = tpu.matmul %524, %525, %cst_261 {dimension_numbers = #tpu.dot_dimension_numbers<[1], [0], [0], [1], [0, 0, 1, 1], [], []>} : vector<16x32xbf16>, vector<32x256xbf16>, vector<16x256xf32> -> vector<16x256xf32>
    %527 = arith.addf %516, %526 : vector<16x256xf32>
    %c1_i32_262 = arith.constant 1 : i32
    %528 = tpu.dynamic_rotate %493 by %c1_i32_262 dim 1 : vector<32x256xf32>, i32 -> vector<32x256xf32>
    %c3_263 = arith.constant 3 : index
    %c0_264 = arith.constant 0 : index
    %c0_265 = arith.constant 0 : index
    %529 = vector.load %arg3[%c3_263, %c0_264, %c0_265] : memref<9x1x256xf32, #tpu.memory_space<vmem>>, vector<1x1x256xf32>
    %530 = vector.shape_cast %529 : vector<1x1x256xf32> to vector<1x256xf32>
    %531 = vector.broadcast %530 : vector<1x256xf32> to vector<32x256xf32>
    %532 = arith.mulf %528, %531 : vector<32x256xf32>
    %c3_266 = arith.constant 3 : index
    %c0_267 = arith.constant 0 : index
    %c0_268 = arith.constant 0 : index
    %533 = vector.load %arg14[%c3_266, %c0_267, %c0_268] : memref<9x16x32xf32, #tpu.memory_space<vmem>>, vector<1x16x32xf32>
    %534 = vector.shape_cast %533 : vector<1x16x32xf32> to vector<16x32xf32>
    %535 = arith.truncf %534 : vector<16x32xf32> to vector<16x32xbf16>
    %536 = arith.truncf %532 : vector<32x256xf32> to vector<32x256xbf16>
    %cst_269 = arith.constant dense<0.000000e+00> : vector<16x256xf32>
    %537 = tpu.matmul %535, %536, %cst_269 {dimension_numbers = #tpu.dot_dimension_numbers<[1], [0], [0], [1], [0, 0, 1, 1], [], []>} : vector<16x32xbf16>, vector<32x256xbf16>, vector<16x256xf32> -> vector<16x256xf32>
    %538 = arith.addf %527, %537 : vector<16x256xf32>
    %c4_270 = arith.constant 4 : index
    %c0_271 = arith.constant 0 : index
    %c0_272 = arith.constant 0 : index
    %539 = vector.load %arg3[%c4_270, %c0_271, %c0_272] : memref<9x1x256xf32, #tpu.memory_space<vmem>>, vector<1x1x256xf32>
    %540 = vector.shape_cast %539 : vector<1x1x256xf32> to vector<1x256xf32>
    %541 = vector.broadcast %540 : vector<1x256xf32> to vector<32x256xf32>
    %542 = arith.mulf %493, %541 : vector<32x256xf32>
    %c4_273 = arith.constant 4 : index
    %c0_274 = arith.constant 0 : index
    %c0_275 = arith.constant 0 : index
    %543 = vector.load %arg14[%c4_273, %c0_274, %c0_275] : memref<9x16x32xf32, #tpu.memory_space<vmem>>, vector<1x16x32xf32>
    %544 = vector.shape_cast %543 : vector<1x16x32xf32> to vector<16x32xf32>
    %545 = arith.truncf %544 : vector<16x32xf32> to vector<16x32xbf16>
    %546 = arith.truncf %542 : vector<32x256xf32> to vector<32x256xbf16>
    %cst_276 = arith.constant dense<0.000000e+00> : vector<16x256xf32>
    %547 = tpu.matmul %545, %546, %cst_276 {dimension_numbers = #tpu.dot_dimension_numbers<[1], [0], [0], [1], [0, 0, 1, 1], [], []>} : vector<16x32xbf16>, vector<32x256xbf16>, vector<16x256xf32> -> vector<16x256xf32>
    %548 = arith.addf %538, %547 : vector<16x256xf32>
    %c255_i32_277 = arith.constant 255 : i32
    %549 = tpu.dynamic_rotate %493 by %c255_i32_277 dim 1 : vector<32x256xf32>, i32 -> vector<32x256xf32>
    %c5_278 = arith.constant 5 : index
    %c0_279 = arith.constant 0 : index
    %c0_280 = arith.constant 0 : index
    %550 = vector.load %arg3[%c5_278, %c0_279, %c0_280] : memref<9x1x256xf32, #tpu.memory_space<vmem>>, vector<1x1x256xf32>
    %551 = vector.shape_cast %550 : vector<1x1x256xf32> to vector<1x256xf32>
    %552 = vector.broadcast %551 : vector<1x256xf32> to vector<32x256xf32>
    %553 = arith.mulf %549, %552 : vector<32x256xf32>
    %c5_281 = arith.constant 5 : index
    %c0_282 = arith.constant 0 : index
    %c0_283 = arith.constant 0 : index
    %554 = vector.load %arg14[%c5_281, %c0_282, %c0_283] : memref<9x16x32xf32, #tpu.memory_space<vmem>>, vector<1x16x32xf32>
    %555 = vector.shape_cast %554 : vector<1x16x32xf32> to vector<16x32xf32>
    %556 = arith.truncf %555 : vector<16x32xf32> to vector<16x32xbf16>
    %557 = arith.truncf %553 : vector<32x256xf32> to vector<32x256xbf16>
    %cst_284 = arith.constant dense<0.000000e+00> : vector<16x256xf32>
    %558 = tpu.matmul %556, %557, %cst_284 {dimension_numbers = #tpu.dot_dimension_numbers<[1], [0], [0], [1], [0, 0, 1, 1], [], []>} : vector<16x32xbf16>, vector<32x256xbf16>, vector<16x256xf32> -> vector<16x256xf32>
    %559 = arith.addf %548, %558 : vector<16x256xf32>
    %c241_i32_285 = arith.constant 241 : i32
    %560 = tpu.dynamic_rotate %493 by %c241_i32_285 dim 1 : vector<32x256xf32>, i32 -> vector<32x256xf32>
    %c6_286 = arith.constant 6 : index
    %c0_287 = arith.constant 0 : index
    %c0_288 = arith.constant 0 : index
    %561 = vector.load %arg3[%c6_286, %c0_287, %c0_288] : memref<9x1x256xf32, #tpu.memory_space<vmem>>, vector<1x1x256xf32>
    %562 = vector.shape_cast %561 : vector<1x1x256xf32> to vector<1x256xf32>
    %563 = vector.broadcast %562 : vector<1x256xf32> to vector<32x256xf32>
    %564 = arith.mulf %560, %563 : vector<32x256xf32>
    %c6_289 = arith.constant 6 : index
    %c0_290 = arith.constant 0 : index
    %c0_291 = arith.constant 0 : index
    %565 = vector.load %arg14[%c6_289, %c0_290, %c0_291] : memref<9x16x32xf32, #tpu.memory_space<vmem>>, vector<1x16x32xf32>
    %566 = vector.shape_cast %565 : vector<1x16x32xf32> to vector<16x32xf32>
    %567 = arith.truncf %566 : vector<16x32xf32> to vector<16x32xbf16>
    %568 = arith.truncf %564 : vector<32x256xf32> to vector<32x256xbf16>
    %cst_292 = arith.constant dense<0.000000e+00> : vector<16x256xf32>
    %569 = tpu.matmul %567, %568, %cst_292 {dimension_numbers = #tpu.dot_dimension_numbers<[1], [0], [0], [1], [0, 0, 1, 1], [], []>} : vector<16x32xbf16>, vector<32x256xbf16>, vector<16x256xf32> -> vector<16x256xf32>
    %570 = arith.addf %559, %569 : vector<16x256xf32>
    %c240_i32_293 = arith.constant 240 : i32
    %571 = tpu.dynamic_rotate %493 by %c240_i32_293 dim 1 : vector<32x256xf32>, i32 -> vector<32x256xf32>
    %c7_294 = arith.constant 7 : index
    %c0_295 = arith.constant 0 : index
    %c0_296 = arith.constant 0 : index
    %572 = vector.load %arg3[%c7_294, %c0_295, %c0_296] : memref<9x1x256xf32, #tpu.memory_space<vmem>>, vector<1x1x256xf32>
    %573 = vector.shape_cast %572 : vector<1x1x256xf32> to vector<1x256xf32>
    %574 = vector.broadcast %573 : vector<1x256xf32> to vector<32x256xf32>
    %575 = arith.mulf %571, %574 : vector<32x256xf32>
    %c7_297 = arith.constant 7 : index
    %c0_298 = arith.constant 0 : index
    %c0_299 = arith.constant 0 : index
    %576 = vector.load %arg14[%c7_297, %c0_298, %c0_299] : memref<9x16x32xf32, #tpu.memory_space<vmem>>, vector<1x16x32xf32>
    %577 = vector.shape_cast %576 : vector<1x16x32xf32> to vector<16x32xf32>
    %578 = arith.truncf %577 : vector<16x32xf32> to vector<16x32xbf16>
    %579 = arith.truncf %575 : vector<32x256xf32> to vector<32x256xbf16>
    %cst_300 = arith.constant dense<0.000000e+00> : vector<16x256xf32>
    %580 = tpu.matmul %578, %579, %cst_300 {dimension_numbers = #tpu.dot_dimension_numbers<[1], [0], [0], [1], [0, 0, 1, 1], [], []>} : vector<16x32xbf16>, vector<32x256xbf16>, vector<16x256xf32> -> vector<16x256xf32>
    %581 = arith.addf %570, %580 : vector<16x256xf32>
    %c239_i32_301 = arith.constant 239 : i32
    %582 = tpu.dynamic_rotate %493 by %c239_i32_301 dim 1 : vector<32x256xf32>, i32 -> vector<32x256xf32>
    %c8_302 = arith.constant 8 : index
    %c0_303 = arith.constant 0 : index
    %c0_304 = arith.constant 0 : index
    %583 = vector.load %arg3[%c8_302, %c0_303, %c0_304] : memref<9x1x256xf32, #tpu.memory_space<vmem>>, vector<1x1x256xf32>
    %584 = vector.shape_cast %583 : vector<1x1x256xf32> to vector<1x256xf32>
    %585 = vector.broadcast %584 : vector<1x256xf32> to vector<32x256xf32>
    %586 = arith.mulf %582, %585 : vector<32x256xf32>
    %c8_305 = arith.constant 8 : index
    %c0_306 = arith.constant 0 : index
    %c0_307 = arith.constant 0 : index
    %587 = vector.load %arg14[%c8_305, %c0_306, %c0_307] : memref<9x16x32xf32, #tpu.memory_space<vmem>>, vector<1x16x32xf32>
    %588 = vector.shape_cast %587 : vector<1x16x32xf32> to vector<16x32xf32>
    %589 = arith.truncf %588 : vector<16x32xf32> to vector<16x32xbf16>
    %590 = arith.truncf %586 : vector<32x256xf32> to vector<32x256xbf16>
    %cst_308 = arith.constant dense<0.000000e+00> : vector<16x256xf32>
    %591 = tpu.matmul %589, %590, %cst_308 {dimension_numbers = #tpu.dot_dimension_numbers<[1], [0], [0], [1], [0, 0, 1, 1], [], []>} : vector<16x32xbf16>, vector<32x256xbf16>, vector<16x256xf32> -> vector<16x256xf32>
    %592 = arith.addf %581, %591 : vector<16x256xf32>
    %c0_309 = arith.constant 0 : index
    %c0_310 = arith.constant 0 : index
    %593 = vector.load %arg15[%c0_309, %c0_310] : memref<16x1xf32, #tpu.memory_space<vmem>>, vector<16x1xf32>
    %594 = vector.broadcast %593 : vector<16x1xf32> to vector<16x256xf32>
    %595 = arith.addf %592, %594 : vector<16x256xf32>
    %c0_311 = arith.constant 0 : index
    %c0_312 = arith.constant 0 : index
    %596 = vector.load %arg16[%c0_311, %c0_312] : memref<16x8xf32, #tpu.memory_space<vmem>>, vector<16x8xf32>
    %597 = arith.truncf %596 : vector<16x8xf32> to vector<16x8xbf16>
    %598 = arith.truncf %1 : vector<8x256xf32> to vector<8x256xbf16>
    %cst_313 = arith.constant dense<0.000000e+00> : vector<16x256xf32>
    %599 = tpu.matmul %597, %598, %cst_313 {dimension_numbers = #tpu.dot_dimension_numbers<[1], [0], [0], [1], [0, 0, 1, 1], [], []>} : vector<16x8xbf16>, vector<8x256xbf16>, vector<16x256xf32> -> vector<16x256xf32>
    %c0_314 = arith.constant 0 : index
    %c0_315 = arith.constant 0 : index
    %600 = vector.load %arg17[%c0_314, %c0_315] : memref<16x1xf32, #tpu.memory_space<vmem>>, vector<16x1xf32>
    %601 = vector.broadcast %600 : vector<16x1xf32> to vector<16x256xf32>
    %602 = arith.addf %599, %601 : vector<16x256xf32>
    %603 = arith.addf %595, %602 : vector<16x256xf32>
    %c0_316 = arith.constant 0 : index
    %c0_317 = arith.constant 0 : index
    %c0_318 = arith.constant 0 : index
    %604 = vector.load %arg18[%c0_316, %c0_317, %c0_318] : memref<1x16x256xf32, #tpu.memory_space<vmem>>, vector<1x16x256xf32>
    %605 = vector.shape_cast %604 : vector<1x16x256xf32> to vector<16x256xf32>
    %606 = vector.shape_cast %603 : vector<16x256xf32> to vector<1x16x256xf32>
    tpu.vector_store %arg18[%c0_316, %c0_317, %c0_318], %606 {strides = array<i32>} : memref<1x16x256xf32, #tpu.memory_space<vmem>>, vector<1x16x256xf32>,
    return
  }
  func.func @transform_0(%arg0: i32) -> (i32, i32, i32) {
    %c0_i32 = arith.constant 0 : i32
    %c0_i32_0 = arith.constant 0 : i32
    %c0_i32_1 = arith.constant 0 : i32
    return %arg0, %c0_i32, %c0_i32_0 : i32, i32, i32
  }
  func.func @transform_1(%arg0: i32) -> (i32, i32, i32) {
    %c0_i32 = arith.constant 0 : i32
    %c0_i32_0 = arith.constant 0 : i32
    %c0_i32_1 = arith.constant 0 : i32
    %c0_i32_2 = arith.constant 0 : i32
    return %c0_i32, %c0_i32_0, %c0_i32_1 : i32, i32, i32
  }
  func.func @transform_2(%arg0: i32) -> (i32, i32, i32) {
    %c0_i32 = arith.constant 0 : i32
    %c0_i32_0 = arith.constant 0 : i32
    %c0_i32_1 = arith.constant 0 : i32
    %c0_i32_2 = arith.constant 0 : i32
    return %c0_i32, %c0_i32_0, %c0_i32_1 : i32, i32, i32
  }
  func.func @transform_3(%arg0: i32) -> (i32, i32, i32) {
    %c0_i32 = arith.constant 0 : i32
    %c0_i32_0 = arith.constant 0 : i32
    %c0_i32_1 = arith.constant 0 : i32
    return %arg0, %c0_i32, %c0_i32_0 : i32, i32, i32
  }
  func.func @transform_4(%arg0: i32) -> (i32, i32) {
    %c0_i32 = arith.constant 0 : i32
    %c0_i32_0 = arith.constant 0 : i32
    %c0_i32_1 = arith.constant 0 : i32
    return %c0_i32, %c0_i32_0 : i32, i32
  }
  func.func @transform_5(%arg0: i32) -> (i32, i32) {
    %c0_i32 = arith.constant 0 : i32
    %c0_i32_0 = arith.constant 0 : i32
    %c0_i32_1 = arith.constant 0 : i32
    return %c0_i32, %c0_i32_0 : i32, i32
  }
  func.func @transform_6(%arg0: i32) -> (i32, i32) {
    %c0_i32 = arith.constant 0 : i32
    %c0_i32_0 = arith.constant 0 : i32
    %c0_i32_1 = arith.constant 0 : i32
    return %c0_i32, %c0_i32_0 : i32, i32
  }
  func.func @transform_7(%arg0: i32) -> (i32, i32) {
    %c0_i32 = arith.constant 0 : i32
    %c0_i32_0 = arith.constant 0 : i32
    %c0_i32_1 = arith.constant 0 : i32
    return %c0_i32, %c0_i32_0 : i32, i32
  }
  func.func @transform_8(%arg0: i32) -> (i32, i32) {
    %c0_i32 = arith.constant 0 : i32
    %c0_i32_0 = arith.constant 0 : i32
    %c0_i32_1 = arith.constant 0 : i32
    return %c0_i32, %c0_i32_0 : i32, i32
  }
  func.func @transform_9(%arg0: i32) -> (i32, i32, i32) {
    %c0_i32 = arith.constant 0 : i32
    %c0_i32_0 = arith.constant 0 : i32
    %c0_i32_1 = arith.constant 0 : i32
    %c0_i32_2 = arith.constant 0 : i32
    return %c0_i32, %c0_i32_0, %c0_i32_1 : i32, i32, i32
  }
  func.func @transform_10(%arg0: i32) -> (i32, i32) {
    %c0_i32 = arith.constant 0 : i32
    %c0_i32_0 = arith.constant 0 : i32
    %c0_i32_1 = arith.constant 0 : i32
    return %c0_i32, %c0_i32_0 : i32, i32
  }
  func.func @transform_11(%arg0: i32) -> (i32, i32) {
    %c0_i32 = arith.constant 0 : i32
    %c0_i32_0 = arith.constant 0 : i32
    %c0_i32_1 = arith.constant 0 : i32
    return %c0_i32, %c0_i32_0 : i32, i32
  }
  func.func @transform_12(%arg0: i32) -> (i32, i32) {
    %c0_i32 = arith.constant 0 : i32
    %c0_i32_0 = arith.constant 0 : i32
    %c0_i32_1 = arith.constant 0 : i32
    return %c0_i32, %c0_i32_0 : i32, i32
  }
  func.func @transform_13(%arg0: i32) -> (i32, i32, i32) {
    %c0_i32 = arith.constant 0 : i32
    %c0_i32_0 = arith.constant 0 : i32
    %c0_i32_1 = arith.constant 0 : i32
    %c0_i32_2 = arith.constant 0 : i32
    return %c0_i32, %c0_i32_0, %c0_i32_1 : i32, i32, i32
  }
  func.func @transform_14(%arg0: i32) -> (i32, i32) {
    %c0_i32 = arith.constant 0 : i32
    %c0_i32_0 = arith.constant 0 : i32
    %c0_i32_1 = arith.constant 0 : i32
    return %c0_i32, %c0_i32_0 : i32, i32
  }
  func.func @transform_15(%arg0: i32) -> (i32, i32) {
    %c0_i32 = arith.constant 0 : i32
    %c0_i32_0 = arith.constant 0 : i32
    %c0_i32_1 = arith.constant 0 : i32
    return %c0_i32, %c0_i32_0 : i32, i32
  }
  func.func @transform_16(%arg0: i32) -> (i32, i32) {
    %c0_i32 = arith.constant 0 : i32
    %c0_i32_0 = arith.constant 0 : i32
    %c0_i32_1 = arith.constant 0 : i32
    return %c0_i32, %c0_i32_0 : i32, i32
  }
  func.func @transform_17(%arg0: i32) -> (i32, i32, i32) {
    %c0_i32 = arith.constant 0 : i32
    %c0_i32_0 = arith.constant 0 : i32
    %c0_i32_1 = arith.constant 0 : i32
    return %arg0, %c0_i32, %c0_i32_0 : i32, i32, i32
  }
}

</mosaic_0001>

<llo_original>
// kernel: convnext_block.1
$region0: #{convnext_block.1}
  #allocation0 [shape = 'u32[]', space=smem, size = 0x4, offset = 0x4, fixed_abs, tag = 'smem constant byte address 0x4 - core index']
  #allocation1 [shape = 'u32[72,128]{1,0:T(1,128)}', space=vmem, size = 0x9000, scoped, tag = 'internal scratch']
  %s0 = inlined_call_operand.vmem [shape: f32[2,8,256], index: 0, kind: input, shape index: {}]
  %s1 = inlined_call_operand.vmem [shape: f32[49,8,256], index: 1, kind: input, shape index: {}]
  %s2 = inlined_call_operand.vmem [shape: f32[9,1,256], index: 2, kind: input, shape index: {}]
  %s3 = inlined_call_operand.vmem [shape: f32[2,1,32], index: 3, kind: input, shape index: {}]
  %s4 = inlined_call_operand.vmem [shape: f32[8,32], index: 4, kind: input, shape index: {}]
  %s5 = inlined_call_operand.vmem [shape: f32[8,1], index: 5, kind: input, shape index: {}]
  %s6 = inlined_call_operand.vmem [shape: f32[8,1], index: 6, kind: input, shape index: {}]
  %s7 = inlined_call_operand.vmem [shape: f32[8,1], index: 7, kind: input, shape index: {}]
  %s8 = inlined_call_operand.vmem [shape: f32[8,1], index: 8, kind: input, shape index: {}]
  %s9 = inlined_call_operand.vmem [shape: f32[9,32,8], index: 9, kind: input, shape index: {}]
  %s10 = inlined_call_operand.vmem [shape: f32[32,1], index: 10, kind: input, shape index: {}]
  %s11 = inlined_call_operand.vmem [shape: f32[32,1], index: 11, kind: input, shape index: {}]
  %s12 = inlined_call_operand.vmem [shape: f32[32,1], index: 12, kind: input, shape index: {}]
  %s13 = inlined_call_operand.vmem [shape: f32[9,16,32], index: 13, kind: input, shape index: {}]
  %s14 = inlined_call_operand.vmem [shape: f32[16,1], index: 14, kind: input, shape index: {}]
  %s15 = inlined_call_operand.vmem [shape: f32[16,8], index: 15, kind: input, shape index: {}]
  %s16 = inlined_call_operand.vmem [shape: f32[16,1], index: 16, kind: input, shape index: {}]
  %s17 = inlined_call_operand.vmem [shape: f32[2,16,256], index: 17, kind: output, shape index: {}]
  %s18 = sld [smem:[#allocation0]]
  $region101: #{convnext_block.1} parent=0
    _
  %s20 = ssub.s32 1, %s18
  %s21 = scalar_select 0, %s20, %s18
  loop: start=0, step=1, limit=4
  $region2: #{convnext_block.1} parent=0 // loop_pre_header
    _
  $region3: #{convnext_block.1} parent=0 // loop_header
    %s23 = sphi 0, %s27
    %p24 = scmp.ge.s32.totalorder %s23, 4
    %s33 = sphi 0, %s35
    %s36 = sphi 0, %s33
    %s37 = sphi 0, %s36
    %s53 = sphi 0, %s37
    %s57 = sphi 0, %s57
    %s59 = sphi 0, %s57
    %s60 = sphi 0, %s59
    %s74 = sphi 0, %s60
    %s78 = sphi 0, %s78
    %s80 = sphi 0, %s78
    %s81 = sphi 0, %s80
    %s95 = sphi 0, %s81
    %s101 = sphi 0, %s103
    %s104 = sphi 0, %s101
    %s105 = sphi 0, %s104
    %s121 = sphi 0, %s105
    %s125 = sphi 0, %s125
    %s127 = sphi 0, %s125
    %s128 = sphi 0, %s127
    %s142 = sphi 0, %s128
    %s146 = sphi 0, %s146
    %s148 = sphi 0, %s146
    %s149 = sphi 0, %s148
    %s163 = sphi 0, %s149
    %s167 = sphi 0, %s167
    %s169 = sphi 0, %s167
    %s170 = sphi 0, %s169
    %s184 = sphi 0, %s170
    %s188 = sphi 0, %s188
    %s190 = sphi 0, %s188
    %s191 = sphi 0, %s190
    %s205 = sphi 0, %s191
    %s209 = sphi 0, %s209
    %s211 = sphi 0, %s209
    %s212 = sphi 0, %s211
    %s226 = sphi 0, %s212
    %s230 = sphi 0, %s230
    %s232 = sphi 0, %s230
    %s233 = sphi 0, %s232
    %s247 = sphi 0, %s233
    %s251 = sphi 0, %s251
    %s253 = sphi 0, %s251
    %s254 = sphi 0, %s253
    %s268 = sphi 0, %s254
    %s272 = sphi 0, %s272
    %s274 = sphi 0, %s272
    %s275 = sphi 0, %s274
    %s289 = sphi 0, %s275
    %s293 = sphi 0, %s293
    %s295 = sphi 0, %s293
    %s296 = sphi 0, %s295
    %s310 = sphi 0, %s296
    %s314 = sphi 0, %s314
    %s316 = sphi 0, %s314
    %s317 = sphi 0, %s316
    %s331 = sphi 0, %s317
    %s335 = sphi 0, %s335
    %s337 = sphi 0, %s335
    %s338 = sphi 0, %s337
    %s352 = sphi 0, %s338
    %s356 = sphi 0, %s356
    %s358 = sphi 0, %s356
    %s359 = sphi 0, %s358
    %s373 = sphi 0, %s359
    %s377 = sphi 0, %s377
    %s379 = sphi 0, %s377
    %s380 = sphi 0, %s379
    %s394 = sphi 0, %s380
    %s400 = sphi 0, %s402
    %s403 = sphi 0, %s400
    %s404 = sphi 0, %s403
    %s420 = sphi 0, %s404
  $region4: #{convnext_block.1} parent=0 // loop_header_branch
    %26 = sbr.rel (%p24) target = $region8
  $region5: #{convnext_block.1} parent=0 // loop_body
    %s28 = ssub.s32 %s23, 1
    %s29 = ssub.s32 %s23, 2
    %s30 = sadd.s32 %s23, 1
    %s31 = ssub.s32 %s23, %s30
    %p32 = scmp.eq.s32.totalorder %s31, 0
    %s34 = sadd.s32 %s33, 1
    %s35 = scalar_select %p32, %s33, %s34
    %p38 = pneg %p32
    %p39 = scmp.eq.s32.totalorder %s23, 1
    %p40 = por %p38, %p39
    %p41 = scmp.ne.s32.totalorder %s33, %s36
    %p42 = scmp.eq.s32.totalorder %s23, 0
    %p43 = por %p41, %p42
    %p44 = scmp.ne.s32.totalorder %s33, %s36
    %p45 = scmp.eq.s32.totalorder %s28, 1
    %p46 = por %p44, %p45
    %p47 = scmp.ne.s32.totalorder %s36, %s37
    %p48 = scmp.eq.s32.totalorder %s28, 0
    %p49 = por %p47, %p48
    %p50 = scmp.ne.s32.totalorder %s36, %s37
    %p51 = scmp.eq.s32.totalorder %s29, 1
    %p52 = por %p50, %p51
    %p54 = scmp.ne.s32.totalorder %s37, %s53
    %p55 = scmp.eq.s32.totalorder %s29, 0
    %p56 = por %p54, %p55
    %s58 = sadd.s32 %s57, 1
    %p61 = scmp.eq.s32.totalorder %s23, 1
    %p62 = scmp.ne.s32.totalorder %s57, %s59
    %p63 = scmp.eq.s32.totalorder %s23, 0
    %p64 = por %p62, %p63
    %p65 = scmp.ne.s32.totalorder %s57, %s59
    %p66 = scmp.eq.s32.totalorder %s28, 1
    %p67 = por %p65, %p66
    %p68 = scmp.ne.s32.totalorder %s59, %s60
    %p69 = scmp.eq.s32.totalorder %s28, 0
    %p70 = por %p68, %p69
    %p71 = scmp.ne.s32.totalorder %s59, %s60
    %p72 = scmp.eq.s32.totalorder %s29, 1
    %p73 = por %p71, %p72
    %p75 = scmp.ne.s32.totalorder %s60, %s74
    %p76 = scmp.eq.s32.totalorder %s29, 0
    %p77 = por %p75, %p76
    %s79 = sadd.s32 %s78, 1
    %p82 = scmp.eq.s32.totalorder %s23, 1
    %p83 = scmp.ne.s32.totalorder %s78, %s80
    %p84 = scmp.eq.s32.totalorder %s23, 0
    %p85 = por %p83, %p84
    %p86 = scmp.ne.s32.totalorder %s78, %s80
    %p87 = scmp.eq.s32.totalorder %s28, 1
    %p88 = por %p86, %p87
    %p89 = scmp.ne.s32.totalorder %s80, %s81
    %p90 = scmp.eq.s32.totalorder %s28, 0
    %p91 = por %p89, %p90
    %p92 = scmp.ne.s32.totalorder %s80, %s81
    %p93 = scmp.eq.s32.totalorder %s29, 1
    %p94 = por %p92, %p93
    %p96 = scmp.ne.s32.totalorder %s81, %s95
    %p97 = scmp.eq.s32.totalorder %s29, 0
    %p98 = por %p96, %p97
    %s99 = ssub.s32 %s23, %s30
    %p100 = scmp.eq.s32.totalorder %s99, 0
    %s102 = sadd.s32 %s101, 1
    %s103 = scalar_select %p100, %s101, %s102
    %p106 = pneg %p100
    %p107 = scmp.eq.s32.totalorder %s23, 1
    %p108 = por %p106, %p107
    %p109 = scmp.ne.s32.totalorder %s101, %s104
    %p110 = scmp.eq.s32.totalorder %s23, 0
    %p111 = por %p109, %p110
    %p112 = scmp.ne.s32.totalorder %s101, %s104
    %p113 = scmp.eq.s32.totalorder %s28, 1
    %p114 = por %p112, %p113
    %p115 = scmp.ne.s32.totalorder %s104, %s105
    %p116 = scmp.eq.s32.totalorder %s28, 0
    %p117 = por %p115, %p116
    %p118 = scmp.ne.s32.totalorder %s104, %s105
    %p119 = scmp.eq.s32.totalorder %s29, 1
    %p120 = por %p118, %p119
    %p122 = scmp.ne.s32.totalorder %s105, %s121
    %p123 = scmp.eq.s32.totalorder %s29, 0
    %p124 = por %p122, %p123
    %s126 = sadd.s32 %s125, 1
    %p129 = scmp.eq.s32.totalorder %s23, 1
    %p130 = scmp.ne.s32.totalorder %s125, %s127
    %p131 = scmp.eq.s32.totalorder %s23, 0
    %p132 = por %p130, %p131
    %p133 = scmp.ne.s32.totalorder %s125, %s127
    %p134 = scmp.eq.s32.totalorder %s28, 1
    %p135 = por %p133, %p134
    %p136 = scmp.ne.s32.totalorder %s127, %s128
    %p137 = scmp.eq.s32.totalorder %s28, 0
    %p138 = por %p136, %p137
    %p139 = scmp.ne.s32.totalorder %s127, %s128
    %p140 = scmp.eq.s32.totalorder %s29, 1
    %p141 = por %p139, %p140
    %p143 = scmp.ne.s32.totalorder %s128, %s142
    %p144 = scmp.eq.s32.totalorder %s29, 0
    %p145 = por %p143, %p144
    %s147 = sadd.s32 %s146, 1
    %p150 = scmp.eq.s32.totalorder %s23, 1
    %p151 = scmp.ne.s32.totalorder %s146, %s148
    %p152 = scmp.eq.s32.totalorder %s23, 0
    %p153 = por %p151, %p152
    %p154 = scmp.ne.s32.totalorder %s146, %s148
    %p155 = scmp.eq.s32.totalorder %s28, 1
    %p156 = por %p154, %p155
    %p157 = scmp.ne.s32.totalorder %s148, %s149
    %p158 = scmp.eq.s32.totalorder %s28, 0
    %p159 = por %p157, %p158
    %p160 = scmp.ne.s32.totalorder %s148, %s149
    %p161 = scmp.eq.s32.totalorder %s29, 1
    %p162 = por %p160, %p161
    %p164 = scmp.ne.s32.totalorder %s149, %s163
    %p165 = scmp.eq.s32.totalorder %s29, 0
    %p166 = por %p164, %p165
    %s168 = sadd.s32 %s167, 1
    %p171 = scmp.eq.s32.totalorder %s23, 1
    %p172 = scmp.ne.s32.totalorder %s167, %s169
    %p173 = scmp.eq.s32.totalorder %s23, 0
    %p174 = por %p172, %p173
    %p175 = scmp.ne.s32.totalorder %s167, %s169
    %p176 = scmp.eq.s32.totalorder %s28, 1
    %p177 = por %p175, %p176
    %p178 = scmp.ne.s32.totalorder %s169, %s170
    %p179 = scmp.eq.s32.totalorder %s28, 0
    %p180 = por %p178, %p179
    %p181 = scmp.ne.s32.totalorder %s169, %s170
    %p182 = scmp.eq.s32.totalorder %s29, 1
    %p183 = por %p181, %p182
    %p185 = scmp.ne.s32.totalorder %s170, %s184
    %p186 = scmp.eq.s32.totalorder %s29, 0
    %p187 = por %p185, %p186
    %s189 = sadd.s32 %s188, 1
    %p192 = scmp.eq.s32.totalorder %s23, 1
    %p193 = scmp.ne.s32.totalorder %s188, %s190
    %p194 = scmp.eq.s32.totalorder %s23, 0
    %p195 = por %p193, %p194
    %p196 = scmp.ne.s32.totalorder %s188, %s190
    %p197 = scmp.eq.s32.totalorder %s28, 1
    %p198 = por %p196, %p197
    %p199 = scmp.ne.s32.totalorder %s190, %s191
    %p200 = scmp.eq.s32.totalorder %s28, 0
    %p201 = por %p199, %p200
    %p202 = scmp.ne.s32.totalorder %s190, %s191
    %p203 = scmp.eq.s32.totalorder %s29, 1
    %p204 = por %p202, %p203
    %p206 = scmp.ne.s32.totalorder %s191, %s205
    %p207 = scmp.eq.s32.totalorder %s29, 0
    %p208 = por %p206, %p207
    %s210 = sadd.s32 %s209, 1
    %p213 = scmp.eq.s32.totalorder %s23, 1
    %p214 = scmp.ne.s32.totalorder %s209, %s211
    %p215 = scmp.eq.s32.totalorder %s23, 0
    %p216 = por %p214, %p215
    %p217 = scmp.ne.s32.totalorder %s209, %s211
    %p218 = scmp.eq.s32.totalorder %s28, 1
    %p219 = por %p217, %p218
    %p220 = scmp.ne.s32.totalorder %s211, %s212
    %p221 = scmp.eq.s32.totalorder %s28, 0
    %p222 = por %p220, %p221
    %p223 = scmp.ne.s32.totalorder %s211, %s212
    %p224 = scmp.eq.s32.totalorder %s29, 1
    %p225 = por %p223, %p224
    %p227 = scmp.ne.s32.totalorder %s212, %s226
    %p228 = scmp.eq.s32.totalorder %s29, 0
    %p229 = por %p227, %p228
    %s231 = sadd.s32 %s230, 1
    %p234 = scmp.eq.s32.totalorder %s23, 1
    %p235 = scmp.ne.s32.totalorder %s230, %s232
    %p236 = scmp.eq.s32.totalorder %s23, 0
    %p237 = por %p235, %p236
    %p238 = scmp.ne.s32.totalorder %s230, %s232
    %p239 = scmp.eq.s32.totalorder %s28, 1
    %p240 = por %p238, %p239
    %p241 = scmp.ne.s32.totalorder %s232, %s233
    %p242 = scmp.eq.s32.totalorder %s28, 0
    %p243 = por %p241, %p242
    %p244 = scmp.ne.s32.totalorder %s232, %s233
    %p245 = scmp.eq.s32.totalorder %s29, 1
    %p246 = por %p244, %p245
    %p248 = scmp.ne.s32.totalorder %s233, %s247
    %p249 = scmp.eq.s32.totalorder %s29, 0
    %p250 = por %p248, %p249
    %s252 = sadd.s32 %s251, 1
    %p255 = scmp.eq.s32.totalorder %s23, 1
    %p256 = scmp.ne.s32.totalorder %s251, %s253
    %p257 = scmp.eq.s32.totalorder %s23, 0
    %p258 = por %p256, %p257
    %p259 = scmp.ne.s32.totalorder %s251, %s253
    %p260 = scmp.eq.s32.totalorder %s28, 1
    %p261 = por %p259, %p260
    %p262 = scmp.ne.s32.totalorder %s253, %s254
    %p263 = scmp.eq.s32.totalorder %s28, 0
    %p264 = por %p262, %p263
    %p265 = scmp.ne.s32.totalorder %s253, %s254
    %p266 = scmp.eq.s32.totalorder %s29, 1
    %p267 = por %p265, %p266
    %p269 = scmp.ne.s32.totalorder %s254, %s268
    %p270 = scmp.eq.s32.totalorder %s29, 0
    %p271 = por %p269, %p270
    %s273 = sadd.s32 %s272, 1
    %p276 = scmp.eq.s32.totalorder %s23, 1
    %p277 = scmp.ne.s32.totalorder %s272, %s274
    %p278 = scmp.eq.s32.totalorder %s23, 0
    %p279 = por %p277, %p278
    %p280 = scmp.ne.s32.totalorder %s272, %s274
    %p281 = scmp.eq.s32.totalorder %s28, 1
    %p282 = por %p280, %p281
    %p283 = scmp.ne.s32.totalorder %s274, %s275
    %p284 = scmp.eq.s32.totalorder %s28, 0
    %p285 = por %p283, %p284
    %p286 = scmp.ne.s32.totalorder %s274, %s275
    %p287 = scmp.eq.s32.totalorder %s29, 1
    %p288 = por %p286, %p287
    %p290 = scmp.ne.s32.totalorder %s275, %s289
    %p291 = scmp.eq.s32.totalorder %s29, 0
    %p292 = por %p290, %p291
    %s294 = sadd.s32 %s293, 1
    %p297 = scmp.eq.s32.totalorder %s23, 1
    %p298 = scmp.ne.s32.totalorder %s293, %s295
    %p299 = scmp.eq.s32.totalorder %s23, 0
    %p300 = por %p298, %p299
    %p301 = scmp.ne.s32.totalorder %s293, %s295
    %p302 = scmp.eq.s32.totalorder %s28, 1
    %p303 = por %p301, %p302
    %p304 = scmp.ne.s32.totalorder %s295, %s296
    %p305 = scmp.eq.s32.totalorder %s28, 0
    %p306 = por %p304, %p305
    %p307 = scmp.ne.s32.totalorder %s295, %s296
    %p308 = scmp.eq.s32.totalorder %s29, 1
    %p309 = por %p307, %p308
    %p311 = scmp.ne.s32.totalorder %s296, %s310
    %p312 = scmp.eq.s32.totalorder %s29, 0
    %p313 = por %p311, %p312
    %s315 = sadd.s32 %s314, 1
    %p318 = scmp.eq.s32.totalorder %s23, 1
    %p319 = scmp.ne.s32.totalorder %s314, %s316
    %p320 = scmp.eq.s32.totalorder %s23, 0
    %p321 = por %p319, %p320
    %p322 = scmp.ne.s32.totalorder %s314, %s316
    %p323 = scmp.eq.s32.totalorder %s28, 1
    %p324 = por %p322, %p323
    %p325 = scmp.ne.s32.totalorder %s316, %s317
    %p326 = scmp.eq.s32.totalorder %s28, 0
    %p327 = por %p325, %p326
    %p328 = scmp.ne.s32.totalorder %s316, %s317
    %p329 = scmp.eq.s32.totalorder %s29, 1
    %p330 = por %p328, %p329
    %p332 = scmp.ne.s32.totalorder %s317, %s331
    %p333 = scmp.eq.s32.totalorder %s29, 0
    %p334 = por %p332, %p333
    %s336 = sadd.s32 %s335, 1
    %p339 = scmp.eq.s32.totalorder %s23, 1
    %p340 = scmp.ne.s32.totalorder %s335, %s337
    %p341 = scmp.eq.s32.totalorder %s23, 0
    %p342 = por %p340, %p341
    %p343 = scmp.ne.s32.totalorder %s335, %s337
    %p344 = scmp.eq.s32.totalorder %s28, 1
    %p345 = por %p343, %p344
    %p346 = scmp.ne.s32.totalorder %s337, %s338
    %p347 = scmp.eq.s32.totalorder %s28, 0
    %p348 = por %p346, %p347
    %p349 = scmp.ne.s32.totalorder %s337, %s338
    %p350 = scmp.eq.s32.totalorder %s29, 1
    %p351 = por %p349, %p350
    %p353 = scmp.ne.s32.totalorder %s338, %s352
    %p354 = scmp.eq.s32.totalorder %s29, 0
    %p355 = por %p353, %p354
    %s357 = sadd.s32 %s356, 1
    %p360 = scmp.eq.s32.totalorder %s23, 1
    %p361 = scmp.ne.s32.totalorder %s356, %s358
    %p362 = scmp.eq.s32.totalorder %s23, 0
    %p363 = por %p361, %p362
    %p364 = scmp.ne.s32.totalorder %s356, %s358
    %p365 = scmp.eq.s32.totalorder %s28, 1
    %p366 = por %p364, %p365
    %p367 = scmp.ne.s32.totalorder %s358, %s359
    %p368 = scmp.eq.s32.totalorder %s28, 0
    %p369 = por %p367, %p368
    %p370 = scmp.ne.s32.totalorder %s358, %s359
    %p371 = scmp.eq.s32.totalorder %s29, 1
    %p372 = por %p370, %p371
    %p374 = scmp.ne.s32.totalorder %s359, %s373
    %p375 = scmp.eq.s32.totalorder %s29, 0
    %p376 = por %p374, %p375
    %s378 = sadd.s32 %s377, 1
    %p381 = scmp.eq.s32.totalorder %s23, 1
    %p382 = scmp.ne.s32.totalorder %s377, %s379
    %p383 = scmp.eq.s32.totalorder %s23, 0
    %p384 = por %p382, %p383
    %p385 = scmp.ne.s32.totalorder %s377, %s379
    %p386 = scmp.eq.s32.totalorder %s28, 1
    %p387 = por %p385, %p386
    %p388 = scmp.ne.s32.totalorder %s379, %s380
    %p389 = scmp.eq.s32.totalorder %s28, 0
    %p390 = por %p388, %p389
    %p391 = scmp.ne.s32.totalorder %s379, %s380
    %p392 = scmp.eq.s32.totalorder %s29, 1
    %p393 = por %p391, %p392
    %p395 = scmp.ne.s32.totalorder %s380, %s394
    %p396 = scmp.eq.s32.totalorder %s29, 0
    %p397 = por %p395, %p396
    %s398 = ssub.s32 %s23, %s30
    %p399 = scmp.eq.s32.totalorder %s398, 0
    %s401 = sadd.s32 %s400, 1
    %s402 = scalar_select %p399, %s400, %s401
    %p405 = pneg %p399
    %p406 = scmp.eq.s32.totalorder %s23, 1
    %p407 = por %p405, %p406
    %p408 = scmp.ne.s32.totalorder %s400, %s403
    %p409 = scmp.eq.s32.totalorder %s23, 0
    %p410 = por %p408, %p409
    %p411 = scmp.ne.s32.totalorder %s400, %s403
    %p412 = scmp.eq.s32.totalorder %s28, 1
    %p413 = por %p411, %p412
    %p414 = scmp.ne.s32.totalorder %s403, %s404
    %p415 = scmp.eq.s32.totalorder %s28, 0
    %p416 = por %p414, %p415
    %p417 = scmp.ne.s32.totalorder %s403, %s404
    %p418 = scmp.eq.s32.totalorder %s29, 1
    %p419 = por %p417, %p418
    %p421 = scmp.ne.s32.totalorder %s404, %s420
    %p422 = scmp.eq.s32.totalorder %s29, 0
    %p423 = por %p421, %p422
    %p424 = scmp.le.s32.totalorder 1, %s23
    %p425 = scmp.lt.s32.totalorder %s23, 3
    %p426 = pnand %p424, %p425
    %p427 = pneg %p426
    // Predicated region
    $region9: #{convnext_block.1} parent=5 // pred_check
      _
    $region10: #{convnext_block.1} parent=5 // pred_check_branch
      %429 = sbr.rel (%p426) target = $region12
    $region11: #{convnext_block.1} parent=5 // pred_region
      %s430 = ssub.s32 %s23, 1
      // Predicated region
      $region13: #{convnext_block.1} parent=11 // pred_check
        %p431 = pneg %p70
      $region14: #{convnext_block.1} parent=11 // pred_check_branch
        %433 = sbr.rel (%p431) target = $region16
      $region15: #{convnext_block.1} parent=11 // pred_region
        _
      $region16: #{convnext_block.1} parent=11 // pred_fallthru
        _
      // Predicated region
      $region17: #{convnext_block.1} parent=11 // pred_check
        %p434 = pneg %p91
      $region18: #{convnext_block.1} parent=11 // pred_check_branch
        %436 = sbr.rel (%p434) target = $region20
      $region19: #{convnext_block.1} parent=11 // pred_region
        _
      $region20: #{convnext_block.1} parent=11 // pred_fallthru
        _
      // Predicated region
      $region21: #{convnext_block.1} parent=11 // pred_check
        %p437 = pneg %p138
      $region22: #{convnext_block.1} parent=11 // pred_check_branch
        %439 = sbr.rel (%p437) target = $region24
      $region23: #{convnext_block.1} parent=11 // pred_region
        _
      $region24: #{convnext_block.1} parent=11 // pred_fallthru
        _
      // Predicated region
      $region25: #{convnext_block.1} parent=11 // pred_check
        %p440 = pneg %p159
      $region26: #{convnext_block.1} parent=11 // pred_check_branch
        %442 = sbr.rel (%p440) target = $region28
      $region27: #{convnext_block.1} parent=11 // pred_region
        _
      $region28: #{convnext_block.1} parent=11 // pred_fallthru
        _
      // Predicated region
      $region29: #{convnext_block.1} parent=11 // pred_check
        %p443 = pneg %p180
      $region30: #{convnext_block.1} parent=11 // pred_check_branch
        %445 = sbr.rel (%p443) target = $region32
      $region31: #{convnext_block.1} parent=11 // pred_region
        _
      $region32: #{convnext_block.1} parent=11 // pred_fallthru
        _
      // Predicated region
      $region33: #{convnext_block.1} parent=11 // pred_check
        %p446 = pneg %p201
      $region34: #{convnext_block.1} parent=11 // pred_check_branch
        %448 = sbr.rel (%p446) target = $region36
      $region35: #{convnext_block.1} parent=11 // pred_region
        _
      $region36: #{convnext_block.1} parent=11 // pred_fallthru
        _
      // Predicated region
      $region37: #{convnext_block.1} parent=11 // pred_check
        %p449 = pneg %p222
      $region38: #{convnext_block.1} parent=11 // pred_check_branch
        %451 = sbr.rel (%p449) target = $region40
      $region39: #{convnext_block.1} parent=11 // pred_region
        _
      $region40: #{convnext_block.1} parent=11 // pred_fallthru
        _
      // Predicated region
      $region41: #{convnext_block.1} parent=11 // pred_check
        %p452 = pneg %p243
      $region42: #{convnext_block.1} parent=11 // pred_check_branch
        %454 = sbr.rel (%p452) target = $region44
      $region43: #{convnext_block.1} parent=11 // pred_region
        _
      $region44: #{convnext_block.1} parent=11 // pred_fallthru
        _
      // Predicated region
      $region45: #{convnext_block.1} parent=11 // pred_check
        %p455 = pneg %p264
      $region46: #{convnext_block.1} parent=11 // pred_check_branch
        %457 = sbr.rel (%p455) target = $region48
      $region47: #{convnext_block.1} parent=11 // pred_region
        _
      $region48: #{convnext_block.1} parent=11 // pred_fallthru
        _
      // Predicated region
      $region49: #{convnext_block.1} parent=11 // pred_check
        %p458 = pneg %p285
      $region50: #{convnext_block.1} parent=11 // pred_check_branch
        %460 = sbr.rel (%p458) target = $region52
      $region51: #{convnext_block.1} parent=11 // pred_region
        _
      $region52: #{convnext_block.1} parent=11 // pred_fallthru
        _
      // Predicated region
      $region53: #{convnext_block.1} parent=11 // pred_check
        %p461 = pneg %p306
      $region54: #{convnext_block.1} parent=11 // pred_check_branch
        %463 = sbr.rel (%p461) target = $region56
      $region55: #{convnext_block.1} parent=11 // pred_region
        _
      $region56: #{convnext_block.1} parent=11 // pred_fallthru
        _
      // Predicated region
      $region57: #{convnext_block.1} parent=11 // pred_check
        %p464 = pneg %p327
      $region58: #{convnext_block.1} parent=11 // pred_check_branch
        %466 = sbr.rel (%p464) target = $region60
      $region59: #{convnext_block.1} parent=11 // pred_region
        _
      $region60: #{convnext_block.1} parent=11 // pred_fallthru
        _
      // Predicated region
      $region61: #{convnext_block.1} parent=11 // pred_check
        %p467 = pneg %p348
      $region62: #{convnext_block.1} parent=11 // pred_check_branch
        %469 = sbr.rel (%p467) target = $region64
      $region63: #{convnext_block.1} parent=11 // pred_region
        _
      $region64: #{convnext_block.1} parent=11 // pred_fallthru
        _
      // Predicated region
      $region65: #{convnext_block.1} parent=11 // pred_check
        %p470 = pneg %p369
      $region66: #{convnext_block.1} parent=11 // pred_check_branch
        %472 = sbr.rel (%p470) target = $region68
      $region67: #{convnext_block.1} parent=11 // pred_region
        _
      $region68: #{convnext_block.1} parent=11 // pred_fallthru
        _
      // Predicated region
      $region69: #{convnext_block.1} parent=11 // pred_check
        %p473 = pneg %p390
      $region70: #{convnext_block.1} parent=11 // pred_check_branch
        %475 = sbr.rel (%p473) target = $region72
      $region71: #{convnext_block.1} parent=11 // pred_region
        _
      $region72: #{convnext_block.1} parent=11 // pred_fallthru
        _
    $region12: #{convnext_block.1} parent=5 // pred_fallthru
      _
    %p476 = scmp.lt.s32.totalorder %s23, 2
    // Predicated region
    $region73: #{convnext_block.1} parent=5 // pred_check
      %p477 = pneg %p476
    $region74: #{convnext_block.1} parent=5 // pred_check_branch
      %479 = sbr.rel (%p477) target = $region76
    $region75: #{convnext_block.1} parent=5 // pred_region
      // Predicated region
      $region77: #{convnext_block.1} parent=75 // pred_check
        %p480 = pneg %p43
      $region78: #{convnext_block.1} parent=75 // pred_check_branch
        %482 = sbr.rel (%p480) target = $region80
      $region79: #{convnext_block.1} parent=75 // pred_region
        %p483 = scmp.lt.s32.totalorder %s23, 1
        %s484 = scalar_select %p483, %s23, 1
        %s485 = smul.addr %s484, 2
        %s486 = smul.addr %s485, 8
        %s487 = scalar_lea.vmem %s0, %s486
      $region80: #{convnext_block.1} parent=75 // pred_fallthru
        _
      // Predicated region
      $region81: #{convnext_block.1} parent=75 // pred_check
        %p488 = pneg %p111
      $region82: #{convnext_block.1} parent=75 // pred_check_branch
        %490 = sbr.rel (%p488) target = $region84
      $region83: #{convnext_block.1} parent=75 // pred_region
        %p491 = scmp.lt.s32.totalorder %s23, 1
        %s492 = scalar_select %p491, %s23, 1
        %s493 = scalar_lea.vmem %s3, %s492
      $region84: #{convnext_block.1} parent=75 // pred_fallthru
        _
    $region76: #{convnext_block.1} parent=5 // pred_fallthru
      _
    %p494 = scmp.le.s32.totalorder 1, %s23
    %p495 = scmp.lt.s32.totalorder %s23, 3
    %p496 = pnand %p494, %p495
    %p497 = pneg %p496
    // Predicated region
    $region85: #{convnext_block.1} parent=5 // pred_check
      _
    $region86: #{convnext_block.1} parent=5 // pred_check_branch
      %499 = sbr.rel (%p496) target = $region88
    $region87: #{convnext_block.1} parent=5 // pred_region
      %s500 = ssub.s32 %s23, 1
      %p501 = scmp.lt.s32.totalorder %s28, 1
      %s502 = scalar_select %p501, %s28, 1
      %s503 = smul.addr %s502, 2
      %s504 = smul.addr %s503, 8
      %s505 = scalar_lea.vmem %s0, %s504
      %p506 = pneg %p49
      %p507 = pneg %p46
      %p508 = pneg %p70
      %p509 = pneg %p67
      %p510 = pneg %p91
      %p511 = pneg %p88
      %p512 = scmp.lt.s32.totalorder %s28, 1
      %s513 = scalar_select %p512, %s28, 1
      %s514 = scalar_lea.vmem %s3, %s513
      %p515 = pneg %p117
      %p516 = pneg %p114
      %p517 = pneg %p138
      %p518 = pneg %p135
      %p519 = pneg %p159
      %p520 = pneg %p156
      %p521 = pneg %p180
      %p522 = pneg %p177
      %p523 = pneg %p201
      %p524 = pneg %p198
      %p525 = pneg %p222
      %p526 = pneg %p219
      %p527 = pneg %p243
      %p528 = pneg %p240
      %p529 = pneg %p264
      %p530 = pneg %p261
      %p531 = pneg %p285
      %p532 = pneg %p282
      %p533 = pneg %p306
      %p534 = pneg %p303
      %p535 = pneg %p327
      %p536 = pneg %p324
      %p537 = pneg %p348
      %p538 = pneg %p345
      %p539 = pneg %p369
      %p540 = pneg %p366
      %p541 = pneg %p390
      %p542 = pneg %p387
      %p543 = pneg %p416
      %p544 = pneg %p413
      %p545 = scmp.lt.s32.totalorder %s28, 1
      %s546 = scalar_select %p545, %s28, 1
      %s547 = smul.addr %s546, 4
      %s548 = smul.addr %s547, 8
      %s549 = scalar_lea.vmem %s17, %s548
      %p550 = scmp.lt.s32.totalorder %s28, 1
      %s551 = scalar_select %p550, %s28, 1
      %s552 = smul.addr %s551, 2
      %s553 = smul.addr %s552, 8
      %s554 = scalar_lea.vmem %s0, %s553
      %p555 = scmp.lt.s32.totalorder %s28, 1
      %s556 = scalar_select %p555, %s28, 1
      %s557 = scalar_lea.vmem %s3, %s556
      %p558 = scmp.lt.s32.totalorder %s28, 1
      %s559 = scalar_select %p558, %s28, 1
      %s560 = smul.addr %s559, 4
      %s561 = smul.addr %s560, 8
      %s562 = scalar_lea.vmem %s17, %s561
      %v564 = vld [vmem:[%s554] sm:$0xff]
      %v565 = vld [vmem:[%s554 + $0x8] sm:$0xff]
      %v566 = vld [vmem:[%s6] sm:$0xff]
      %v567 = vld [vmem:[%s557] sm:$0x1]
      %v568 = vmul.f32 %v567, 0.5
      %v569 = vmul.f32 %v567, 0.70710677
      %v570 = vand.u32 2147483647, %v569
      %v571 = vmul.f32 %v570, 0.3275911
      %v572 = vadd.f32 %v571, 1.0
      %v573 = vrcp.pop %v572
      %v574 = vmul.f32 %v572, %v573
      %v575 = vsub.f32 1.0, %v574
      %v576 = vmul.f32 %v573, %v575
      %v577 = vadd.f32 %v573, %v576
      %vm578 = vweird.f32 %v572
      %vm579 = vweird.f32 %v573
      %vm580 = vmor %vm578, %vm579
      %v581 = vsel %vm580, %v573, %v577
      %v582 = vand.u32 2147483647, %v572
      %vm583 = vcmp.eq.f32.partialorder %v582, 8.507059e+37
      %v584 = vand.u32 %v572, 2147483648
      %v585 = vor.u32 1.1754944e-38, %v584
      %v586 = vsel %vm583, %v585, %v581
      %v587 = vmul.f32 1.0, %v586
      %v588 = vmul.f32 %v587, 1.0614054
      %v589 = vadd.f32 %v588, -1.4531521
      %v590 = vmul.f32 %v589, %v587
      %v591 = vadd.f32 %v590, 1.4214138
      %v592 = vmul.f32 %v591, %v587
      %v593 = vadd.f32 %v592, -0.28449672
      %v594 = vmul.f32 %v593, %v587
      %v595 = vadd.f32 %v594, 0.2548296
      %v596 = vmul.f32 %v595, %v587
      %v597 = vsub.f32 0.0, %v570
      %v598 = vmul.f32 %v597, %v570
      %v599 = vmul.f32 %v598, 1.442695
      %v600 = vpow.pop %v599
      %v601 = vmul.f32 %v596, %v600
      %v602 = vsub.f32 1.0, %v601
      %vm603 = vcmp.ge.f32.partialorder %v569, 0.0
      %v604 = vsub.f32 0.0, %v602
      %v605 = vsel %vm603, %v602, %v604
      %v606 = vadd.f32 %v605, 1.0
      %v607 = vmul.f32 %v568, %v606
      %v608 = vld [vmem:[%s4] sm:$0xff]
      %v610 = vperm.slane %v607, 0
      %v612 = vmul.f32 %v608, %v610
      %vm613 = vcmask 261120
      %v614 = vsel %vm613, %v612, 0.0
      %615 = vadd.xlane.f32.xlu0 %v614
      %v616 = vpop.xlane.xlu0 %615
      %v617 = vadd.f32 %v566, %v616
      %v618 = vld [vmem:[%s5] sm:$0xff]
      %v619 = vadd.f32 %v617, %v618
      %620 = vrot.lane.b32.xlu0 %v564, 51
      %v621 = vpop.permute.xlu0 %620
      %622 = vrot.lane.b32.xlu0 %v565, 51
      %v623 = vpop.permute.xlu0 %622
      %v624 = vlaneseq
      %v625 = vand.u32 %v624, 127
      %vm626 = vcmp.lt.s32.totalorder %v625, 51
      %v627 = vsel %vm626, %v621, %v623
      %v628 = vsel %vm626, %v623, %v621
      %v629 = vld [vmem:[%s1] sm:$0xff]
      %v630 = vld [vmem:[%s1 + $0x8] sm:$0xff]
      %v631 = vmul.f32 %v628, %v629
      %v632 = vmul.f32 %v627, %v630
      %v633 = vadd.f32 %v631, 0.0
      %v634 = vadd.f32 %v632, 0.0
      %635 = vrot.lane.b32.xlu0 %v564, 50
      %v636 = vpop.permute.xlu0 %635
      %637 = vrot.lane.b32.xlu0 %v565, 50
      %v638 = vpop.permute.xlu0 %637
      %vm639 = vcmp.lt.s32.totalorder %v625, 50
      %v640 = vsel %vm639, %v636, %v638
      %v641 = vsel %vm639, %v638, %v636
      %s642 = scalar_lea.vmem %s1, 16
      %v643 = vld [vmem:[%s642] sm:$0xff]
      %v644 = vld [vmem:[%s642 + $0x8] sm:$0xff]
      %v645 = vmul.f32 %v641, %v643
      %v646 = vmul.f32 %v640, %v644
      %v647 = vadd.f32 %v633, %v645
      %v648 = vadd.f32 %v634, %v646
      %649 = vrot.lane.b32.xlu0 %v564, 49
      %v650 = vpop.permute.xlu0 %649
      %651 = vrot.lane.b32.xlu0 %v565, 49
      %v652 = vpop.permute.xlu0 %651
      %vm653 = vcmp.lt.s32.totalorder %v625, 49
      %v654 = vsel %vm653, %v650, %v652
      %v655 = vsel %vm653, %v652, %v650
      %s656 = scalar_lea.vmem %s1, 32
      %v657 = vld [vmem:[%s656] sm:$0xff]
      %v658 = vld [vmem:[%s656 + $0x8] sm:$0xff]
      %v659 = vmul.f32 %v655, %v657
      %v660 = vmul.f32 %v654, %v658
      %v661 = vadd.f32 %v647, %v659
      %v662 = vadd.f32 %v648, %v660
      %663 = vrot.lane.b32.xlu0 %v564, 48
      %v664 = vpop.permute.xlu0 %663
      %665 = vrot.lane.b32.xlu0 %v565, 48
      %v666 = vpop.permute.xlu0 %665
      %vm667 = vcmp.lt.s32.totalorder %v625, 48
      %v668 = vsel %vm667, %v664, %v666
      %v669 = vsel %vm667, %v666, %v664
      %s670 = scalar_lea.vmem %s1, 48
      %v671 = vld [vmem:[%s670] sm:$0xff]
      %v672 = vld [vmem:[%s670 + $0x8] sm:$0xff]
      %v673 = vmul.f32 %v669, %v671
      %v674 = vmul.f32 %v668, %v672
      %v675 = vadd.f32 %v661, %v673
      %v676 = vadd.f32 %v662, %v674
      %677 = vrot.lane.b32.xlu0 %v564, 47
      %v678 = vpop.permute.xlu0 %677
      %679 = vrot.lane.b32.xlu0 %v565, 47
      %v680 = vpop.permute.xlu0 %679
      %vm681 = vcmp.lt.s32.totalorder %v625, 47
      %v682 = vsel %vm681, %v678, %v680
      %v683 = vsel %vm681, %v680, %v678
      %s684 = scalar_lea.vmem %s1, 64
      %v685 = vld [vmem:[%s684] sm:$0xff]
      %v686 = vld [vmem:[%s684 + $0x8] sm:$0xff]
      %v687 = vmul.f32 %v683, %v685
      %v688 = vmul.f32 %v682, %v686
      %v689 = vadd.f32 %v675, %v687
      %v690 = vadd.f32 %v676, %v688
      %691 = vrot.lane.b32.xlu0 %v564, 46
      %v692 = vpop.permute.xlu0 %691
      %693 = vrot.lane.b32.xlu0 %v565, 46
      %v694 = vpop.permute.xlu0 %693
      %vm695 = vcmp.lt.s32.totalorder %v625, 46
      %v696 = vsel %vm695, %v692, %v694
      %v697 = vsel %vm695, %v694, %v692
      %s698 = scalar_lea.vmem %s1, 80
      %v699 = vld [vmem:[%s698] sm:$0xff]
      %v700 = vld [vmem:[%s698 + $0x8] sm:$0xff]
      %v701 = vmul.f32 %v697, %v699
      %v702 = vmul.f32 %v696, %v700
      %v703 = vadd.f32 %v689, %v701
      %v704 = vadd.f32 %v690, %v702
      %705 = vrot.lane.b32.xlu0 %v564, 45
      %v706 = vpop.permute.xlu0 %705
      %707 = vrot.lane.b32.xlu0 %v565, 45
      %v708 = vpop.permute.xlu0 %707
      %vm709 = vcmp.lt.s32.totalorder %v625, 45
      %v710 = vsel %vm709, %v706, %v708
      %v711 = vsel %vm709, %v708, %v706
      %s712 = scalar_lea.vmem %s1, 96
      %v713 = vld [vmem:[%s712] sm:$0xff]
      %v714 = vld [vmem:[%s712 + $0x8] sm:$0xff]
      %v715 = vmul.f32 %v711, %v713
      %v716 = vmul.f32 %v710, %v714
      %v717 = vadd.f32 %v703, %v715
      %v718 = vadd.f32 %v704, %v716
      %719 = vrot.lane.b32.xlu0 %v564, 35
      %v720 = vpop.permute.xlu0 %719
      %721 = vrot.lane.b32.xlu0 %v565, 35
      %v722 = vpop.permute.xlu0 %721
      %vm723 = vcmp.lt.s32.totalorder %v625, 35
      %v724 = vsel %vm723, %v720, %v722
      %v725 = vsel %vm723, %v722, %v720
      %s726 = scalar_lea.vmem %s1, 112
      %v727 = vld [vmem:[%s726] sm:$0xff]
      %v728 = vld [vmem:[%s726 + $0x8] sm:$0xff]
      %v729 = vmul.f32 %v725, %v727
      %v730 = vmul.f32 %v724, %v728
      %v731 = vadd.f32 %v717, %v729
      %v732 = vadd.f32 %v718, %v730
      %733 = vrot.lane.b32.xlu0 %v564, 34
      %v734 = vpop.permute.xlu0 %733
      %735 = vrot.lane.b32.xlu0 %v565, 34
      %v736 = vpop.permute.xlu0 %735
      %vm737 = vcmp.lt.s32.totalorder %v625, 34
      %v738 = vsel %vm737, %v734, %v736
      %v739 = vsel %vm737, %v736, %v734
      %s740 = scalar_lea.vmem %s1, 128
      %v741 = vld [vmem:[%s740] sm:$0xff]
      %v742 = vld [vmem:[%s740 + $0x8] sm:$0xff]
      %v743 = vmul.f32 %v739, %v741
      %v744 = vmul.f32 %v738, %v742
      %v745 = vadd.f32 %v731, %v743
      %v746 = vadd.f32 %v732, %v744
      %747 = vrot.lane.b32.xlu0 %v564, 33
      %v748 = vpop.permute.xlu0 %747
      %749 = vrot.lane.b32.xlu0 %v565, 33
      %v750 = vpop.permute.xlu0 %749
      %vm751 = vcmp.lt.s32.totalorder %v625, 33
      %v752 = vsel %vm751, %v748, %v750
      %v753 = vsel %vm751, %v750, %v748
      %s754 = scalar_lea.vmem %s1, 144
      %v755 = vld [vmem:[%s754] sm:$0xff]
      %v756 = vld [vmem:[%s754 + $0x8] sm:$0xff]
      %v757 = vmul.f32 %v753, %v755
      %v758 = vmul.f32 %v752, %v756
      %v759 = vadd.f32 %v745, %v757
      %v760 = vadd.f32 %v746, %v758
      %761 = vrot.lane.b32.xlu0 %v564, 32
      %v762 = vpop.permute.xlu0 %761
      %763 = vrot.lane.b32.xlu0 %v565, 32
      %v764 = vpop.permute.xlu0 %763
      %vm765 = vcmp.lt.s32.totalorder %v625, 32
      %v766 = vsel %vm765, %v762, %v764
      %v767 = vsel %vm765, %v764, %v762
      %s768 = scalar_lea.vmem %s1, 160
      %v769 = vld [vmem:[%s768] sm:$0xff]
      %v770 = vld [vmem:[%s768 + $0x8] sm:$0xff]
      %v771 = vmul.f32 %v767, %v769
      %v772 = vmul.f32 %v766, %v770
      %v773 = vadd.f32 %v759, %v771
      %v774 = vadd.f32 %v760, %v772
      %775 = vrot.lane.b32.xlu0 %v564, 31
      %v776 = vpop.permute.xlu0 %775
      %777 = vrot.lane.b32.xlu0 %v565, 31
      %v778 = vpop.permute.xlu0 %777
      %vm779 = vcmp.lt.s32.totalorder %v625, 31
      %v780 = vsel %vm779, %v776, %v778
      %v781 = vsel %vm779, %v778, %v776
      %s782 = scalar_lea.vmem %s1, 176
      %v783 = vld [vmem:[%s782] sm:$0xff]
      %v784 = vld [vmem:[%s782 + $0x8] sm:$0xff]
      %v785 = vmul.f32 %v781, %v783
      %v786 = vmul.f32 %v780, %v784
      %v787 = vadd.f32 %v773, %v785
      %v788 = vadd.f32 %v774, %v786
      %789 = vrot.lane.b32.xlu0 %v564, 30
      %v790 = vpop.permute.xlu0 %789
      %791 = vrot.lane.b32.xlu0 %v565, 30
      %v792 = vpop.permute.xlu0 %791
      %vm793 = vcmp.lt.s32.totalorder %v625, 30
      %v794 = vsel %vm793, %v790, %v792
      %v795 = vsel %vm793, %v792, %v790
      %s796 = scalar_lea.vmem %s1, 192
      %v797 = vld [vmem:[%s796] sm:$0xff]
      %v798 = vld [vmem:[%s796 + $0x8] sm:$0xff]
      %v799 = vmul.f32 %v795, %v797
      %v800 = vmul.f32 %v794, %v798
      %v801 = vadd.f32 %v787, %v799
      %v802 = vadd.f32 %v788, %v800
      %803 = vrot.lane.b32.xlu0 %v564, 29
      %v804 = vpop.permute.xlu0 %803
      %805 = vrot.lane.b32.xlu0 %v565, 29
      %v806 = vpop.permute.xlu0 %805
      %vm807 = vcmp.lt.s32.totalorder %v625, 29
      %v808 = vsel %vm807, %v804, %v806
      %v809 = vsel %vm807, %v806, %v804
      %s810 = scalar_lea.vmem %s1, 208
      %v811 = vld [vmem:[%s810] sm:$0xff]
      %v812 = vld [vmem:[%s810 + $0x8] sm:$0xff]
      %v813 = vmul.f32 %v809, %v811
      %v814 = vmul.f32 %v808, %v812
      %v815 = vadd.f32 %v801, %v813
      %v816 = vadd.f32 %v802, %v814
      %817 = vrot.lane.b32.xlu0 %v564, 19
      %v818 = vpop.permute.xlu0 %817
      %819 = vrot.lane.b32.xlu0 %v565, 19
      %v820 = vpop.permute.xlu0 %819
      %vm821 = vcmp.lt.s32.totalorder %v625, 19
      %v822 = vsel %vm821, %v818, %v820
      %v823 = vsel %vm821, %v820, %v818
      %s824 = scalar_lea.vmem %s1, 224
      %v825 = vld [vmem:[%s824] sm:$0xff]
      %v826 = vld [vmem:[%s824 + $0x8] sm:$0xff]
      %v827 = vmul.f32 %v823, %v825
      %v828 = vmul.f32 %v822, %v826
      %v829 = vadd.f32 %v815, %v827
      %v830 = vadd.f32 %v816, %v828
      %831 = vrot.lane.b32.xlu0 %v564, 18
      %v832 = vpop.permute.xlu0 %831
      %833 = vrot.lane.b32.xlu0 %v565, 18
      %v834 = vpop.permute.xlu0 %833
      %vm835 = vcmp.lt.s32.totalorder %v625, 18
      %v836 = vsel %vm835, %v832, %v834
      %v837 = vsel %vm835, %v834, %v832
      %s838 = scalar_lea.vmem %s1, 240
      %v839 = vld [vmem:[%s838] sm:$0xff]
      %v840 = vld [vmem:[%s838 + $0x8] sm:$0xff]
      %v841 = vmul.f32 %v837, %v839
      %v842 = vmul.f32 %v836, %v840
      %v843 = vadd.f32 %v829, %v841
      %v844 = vadd.f32 %v830, %v842
      %845 = vrot.lane.b32.xlu0 %v564, 17
      %v846 = vpop.permute.xlu0 %845
      %847 = vrot.lane.b32.xlu0 %v565, 17
      %v848 = vpop.permute.xlu0 %847
      %vm849 = vcmp.lt.s32.totalorder %v625, 17
      %v850 = vsel %vm849, %v846, %v848
      %v851 = vsel %vm849, %v848, %v846
      %s852 = scalar_lea.vmem %s1, 256
      %v853 = vld [vmem:[%s852] sm:$0xff]
      %v854 = vld [vmem:[%s852 + $0x8] sm:$0xff]
      %v855 = vmul.f32 %v851, %v853
      %v856 = vmul.f32 %v850, %v854
      %v857 = vadd.f32 %v843, %v855
      %v858 = vadd.f32 %v844, %v856
      %859 = vrot.lane.b32.xlu0 %v564, 16
      %v860 = vpop.permute.xlu0 %859
      %861 = vrot.lane.b32.xlu0 %v565, 16
      %v862 = vpop.permute.xlu0 %861
      %vm863 = vcmp.lt.s32.totalorder %v625, 16
      %v864 = vsel %vm863, %v860, %v862
      %v865 = vsel %vm863, %v862, %v860
      %s866 = scalar_lea.vmem %s1, 272
      %v867 = vld [vmem:[%s866] sm:$0xff]
      %v868 = vld [vmem:[%s866 + $0x8] sm:$0xff]
      %v869 = vmul.f32 %v865, %v867
      %v870 = vmul.f32 %v864, %v868
      %v871 = vadd.f32 %v857, %v869
      %v872 = vadd.f32 %v858, %v870
      %873 = vrot.lane.b32.xlu0 %v564, 15
      %v874 = vpop.permute.xlu0 %873
      %875 = vrot.lane.b32.xlu0 %v565, 15
      %v876 = vpop.permute.xlu0 %875
      %vm877 = vcmp.lt.s32.totalorder %v625, 15
      %v878 = vsel %vm877, %v874, %v876
      %v879 = vsel %vm877, %v876, %v874
      %s880 = scalar_lea.vmem %s1, 288
      %v881 = vld [vmem:[%s880] sm:$0xff]
      %v882 = vld [vmem:[%s880 + $0x8] sm:$0xff]
      %v883 = vmul.f32 %v879, %v881
      %v884 = vmul.f32 %v878, %v882
      %v885 = vadd.f32 %v871, %v883
      %v886 = vadd.f32 %v872, %v884
      %887 = vrot.lane.b32.xlu0 %v564, 14
      %v888 = vpop.permute.xlu0 %887
      %889 = vrot.lane.b32.xlu0 %v565, 14
      %v890 = vpop.permute.xlu0 %889
      %vm891 = vcmp.lt.s32.totalorder %v625, 14
      %v892 = vsel %vm891, %v888, %v890
      %v893 = vsel %vm891, %v890, %v888
      %s894 = scalar_lea.vmem %s1, 304
      %v895 = vld [vmem:[%s894] sm:$0xff]
      %v896 = vld [vmem:[%s894 + $0x8] sm:$0xff]
      %v897 = vmul.f32 %v893, %v895
      %v898 = vmul.f32 %v892, %v896
      %v899 = vadd.f32 %v885, %v897
      %v900 = vadd.f32 %v886, %v898
      %901 = vrot.lane.b32.xlu0 %v564, 13
      %v902 = vpop.permute.xlu0 %901
      %903 = vrot.lane.b32.xlu0 %v565, 13
      %v904 = vpop.permute.xlu0 %903
      %vm905 = vcmp.lt.s32.totalorder %v625, 13
      %v906 = vsel %vm905, %v902, %v904
      %v907 = vsel %vm905, %v904, %v902
      %s908 = scalar_lea.vmem %s1, 320
      %v909 = vld [vmem:[%s908] sm:$0xff]
      %v910 = vld [vmem:[%s908 + $0x8] sm:$0xff]
      %v911 = vmul.f32 %v907, %v909
      %v912 = vmul.f32 %v906, %v910
      %v913 = vadd.f32 %v899, %v911
      %v914 = vadd.f32 %v900, %v912
      %915 = vrot.lane.b32.xlu0 %v564, 3
      %v916 = vpop.permute.xlu0 %915
      %917 = vrot.lane.b32.xlu0 %v565, 3
      %v918 = vpop.permute.xlu0 %917
      %vm919 = vcmp.lt.s32.totalorder %v625, 3
      %v920 = vsel %vm919, %v916, %v918
      %v921 = vsel %vm919, %v918, %v916
      %s922 = scalar_lea.vmem %s1, 336
      %v923 = vld [vmem:[%s922] sm:$0xff]
      %v924 = vld [vmem:[%s922 + $0x8] sm:$0xff]
      %v925 = vmul.f32 %v921, %v923
      %v926 = vmul.f32 %v920, %v924
      %v927 = vadd.f32 %v913, %v925
      %v928 = vadd.f32 %v914, %v926
      %929 = vrot.lane.b32.xlu0 %v564, 2
      %v930 = vpop.permute.xlu0 %929
      %931 = vrot.lane.b32.xlu0 %v565, 2
      %v932 = vpop.permute.xlu0 %931
      %vm933 = vcmp.lt.s32.totalorder %v625, 2
      %v934 = vsel %vm933, %v930, %v932
      %v935 = vsel %vm933, %v932, %v930
      %s936 = scalar_lea.vmem %s1, 352
      %v937 = vld [vmem:[%s936] sm:$0xff]
      %v938 = vld [vmem:[%s936 + $0x8] sm:$0xff]
      %v939 = vmul.f32 %v935, %v937
      %v940 = vmul.f32 %v934, %v938
      %v941 = vadd.f32 %v927, %v939
      %v942 = vadd.f32 %v928, %v940
      %943 = vrot.lane.b32.xlu0 %v564, 1
      %v944 = vpop.permute.xlu0 %943
      %945 = vrot.lane.b32.xlu0 %v565, 1
      %v946 = vpop.permute.xlu0 %945
      %vm947 = vcmp.lt.s32.totalorder %v625, 1
      %v948 = vsel %vm947, %v944, %v946
      %v949 = vsel %vm947, %v946, %v944
      %s950 = scalar_lea.vmem %s1, 368
      %v951 = vld [vmem:[%s950] sm:$0xff]
      %v952 = vld [vmem:[%s950 + $0x8] sm:$0xff]
      %v953 = vmul.f32 %v949, %v951
      %v954 = vmul.f32 %v948, %v952
      %v955 = vadd.f32 %v941, %v953
      %v956 = vadd.f32 %v942, %v954
      %s957 = scalar_lea.vmem %s1, 384
      %v958 = vld [vmem:[%s957] sm:$0xff]
      %v959 = vld [vmem:[%s957 + $0x8] sm:$0xff]
      %v960 = vmul.f32 %v564, %v958
      %v961 = vmul.f32 %v565, %v959
      %v962 = vadd.f32 %v955, %v960
      %v963 = vadd.f32 %v956, %v961
      %964 = vrot.lane.b32.xlu0 %v564, 127
      %v965 = vpop.permute.xlu0 %964
      %966 = vrot.lane.b32.xlu0 %v565, 127
      %v967 = vpop.permute.xlu0 %966
      %vm968 = vcmp.lt.s32.totalorder %v625, 127
      %v969 = vsel %vm968, %v965, %v967
      %v970 = vsel %vm968, %v967, %v965
      %s971 = scalar_lea.vmem %s1, 400
      %v972 = vld [vmem:[%s971] sm:$0xff]
      %v973 = vld [vmem:[%s971 + $0x8] sm:$0xff]
      %v974 = vmul.f32 %v969, %v972
      %v975 = vmul.f32 %v970, %v973
      %v976 = vadd.f32 %v962, %v974
      %v977 = vadd.f32 %v963, %v975
      %978 = vrot.lane.b32.xlu0 %v564, 126
      %v979 = vpop.permute.xlu0 %978
      %980 = vrot.lane.b32.xlu0 %v565, 126
      %v981 = vpop.permute.xlu0 %980
      %vm982 = vcmp.lt.s32.totalorder %v625, 126
      %v983 = vsel %vm982, %v979, %v981
      %v984 = vsel %vm982, %v981, %v979
      %s985 = scalar_lea.vmem %s1, 416
      %v986 = vld [vmem:[%s985] sm:$0xff]
      %v987 = vld [vmem:[%s985 + $0x8] sm:$0xff]
      %v988 = vmul.f32 %v983, %v986
      %v989 = vmul.f32 %v984, %v987
      %v990 = vadd.f32 %v976, %v988
      %v991 = vadd.f32 %v977, %v989
      %992 = vrot.lane.b32.xlu0 %v564, 125
      %v993 = vpop.permute.xlu0 %992
      %994 = vrot.lane.b32.xlu0 %v565, 125
      %v995 = vpop.permute.xlu0 %994
      %vm996 = vcmp.lt.s32.totalorder %v625, 125
      %v997 = vsel %vm996, %v993, %v995
      %v998 = vsel %vm996, %v995, %v993
      %s999 = scalar_lea.vmem %s1, 432
      %v1000 = vld [vmem:[%s999] sm:$0xff]
      %v1001 = vld [vmem:[%s999 + $0x8] sm:$0xff]
      %v1002 = vmul.f32 %v997, %v1000
      %v1003 = vmul.f32 %v998, %v1001
      %v1004 = vadd.f32 %v990, %v1002
      %v1005 = vadd.f32 %v991, %v1003
      %1006 = vrot.lane.b32.xlu0 %v564, 115
      %v1007 = vpop.permute.xlu0 %1006
      %1008 = vrot.lane.b32.xlu0 %v565, 115
      %v1009 = vpop.permute.xlu0 %1008
      %vm1010 = vcmp.lt.s32.totalorder %v625, 115
      %v1011 = vsel %vm1010, %v1007, %v1009
      %v1012 = vsel %vm1010, %v1009, %v1007
      %s1013 = scalar_lea.vmem %s1, 448
      %v1014 = vld [vmem:[%s1013] sm:$0xff]
      %v1015 = vld [vmem:[%s1013 + $0x8] sm:$0xff]
      %v1016 = vmul.f32 %v1011, %v1014
      %v1017 = vmul.f32 %v1012, %v1015
      %v1018 = vadd.f32 %v1004, %v1016
      %v1019 = vadd.f32 %v1005, %v1017
      %1020 = vrot.lane.b32.xlu0 %v564, 114
      %v1021 = vpop.permute.xlu0 %1020
      %1022 = vrot.lane.b32.xlu0 %v565, 114
      %v1023 = vpop.permute.xlu0 %1022
      %vm1024 = vcmp.lt.s32.totalorder %v625, 114
      %v1025 = vsel %vm1024, %v1021, %v1023
      %v1026 = vsel %vm1024, %v1023, %v1021
      %s1027 = scalar_lea.vmem %s1, 464
      %v1028 = vld [vmem:[%s1027] sm:$0xff]
      %v1029 = vld [vmem:[%s1027 + $0x8] sm:$0xff]
      %v1030 = vmul.f32 %v1025, %v1028
      %v1031 = vmul.f32 %v1026, %v1029
      %v1032 = vadd.f32 %v1018, %v1030
      %v1033 = vadd.f32 %v1019, %v1031
      %1034 = vrot.lane.b32.xlu0 %v564, 113
      %v1035 = vpop.permute.xlu0 %1034
      %1036 = vrot.lane.b32.xlu0 %v565, 113
      %v1037 = vpop.permute.xlu0 %1036
      %vm1038 = vcmp.lt.s32.totalorder %v625, 113
      %v1039 = vsel %vm1038, %v1035, %v1037
      %v1040 = vsel %vm1038, %v1037, %v1035
      %s1041 = scalar_lea.vmem %s1, 480
      %v1042 = vld [vmem:[%s1041] sm:$0xff]
      %v1043 = vld [vmem:[%s1041 + $0x8] sm:$0xff]
      %v1044 = vmul.f32 %v1039, %v1042
      %v1045 = vmul.f32 %v1040, %v1043
      %v1046 = vadd.f32 %v1032, %v1044
      %v1047 = vadd.f32 %v1033, %v1045
      %1048 = vrot.lane.b32.xlu0 %v564, 112
      %v1049 = vpop.permute.xlu0 %1048
      %1050 = vrot.lane.b32.xlu0 %v565, 112
      %v1051 = vpop.permute.xlu0 %1050
      %vm1052 = vcmp.lt.s32.totalorder %v625, 112
      %v1053 = vsel %vm1052, %v1049, %v1051
      %v1054 = vsel %vm1052, %v1051, %v1049
      %s1055 = scalar_lea.vmem %s1, 496
      %v1056 = vld [vmem:[%s1055] sm:$0xff]
      %v1057 = vld [vmem:[%s1055 + $0x8] sm:$0xff]
      %v1058 = vmul.f32 %v1053, %v1056
      %v1059 = vmul.f32 %v1054, %v1057
      %v1060 = vadd.f32 %v1046, %v1058
      %v1061 = vadd.f32 %v1047, %v1059
      %1062 = vrot.lane.b32.xlu0 %v564, 111
      %v1063 = vpop.permute.xlu0 %1062
      %1064 = vrot.lane.b32.xlu0 %v565, 111
      %v1065 = vpop.permute.xlu0 %1064
      %vm1066 = vcmp.lt.s32.totalorder %v625, 111
      %v1067 = vsel %vm1066, %v1063, %v1065
      %v1068 = vsel %vm1066, %v1065, %v1063
      %s1069 = scalar_lea.vmem %s1, 512
      %v1070 = vld [vmem:[%s1069] sm:$0xff]
      %v1071 = vld [vmem:[%s1069 + $0x8] sm:$0xff]
      %v1072 = vmul.f32 %v1067, %v1070
      %v1073 = vmul.f32 %v1068, %v1071
      %v1074 = vadd.f32 %v1060, %v1072
      %v1075 = vadd.f32 %v1061, %v1073
      %1076 = vrot.lane.b32.xlu0 %v564, 110
      %v1077 = vpop.permute.xlu0 %1076
      %1078 = vrot.lane.b32.xlu0 %v565, 110
      %v1079 = vpop.permute.xlu0 %1078
      %vm1080 = vcmp.lt.s32.totalorder %v625, 110
      %v1081 = vsel %vm1080, %v1077, %v1079
      %v1082 = vsel %vm1080, %v1079, %v1077
      %s1083 = scalar_lea.vmem %s1, 528
      %v1084 = vld [vmem:[%s1083] sm:$0xff]
      %v1085 = vld [vmem:[%s1083 + $0x8] sm:$0xff]
      %v1086 = vmul.f32 %v1081, %v1084
      %v1087 = vmul.f32 %v1082, %v1085
      %v1088 = vadd.f32 %v1074, %v1086
      %v1089 = vadd.f32 %v1075, %v1087
      %1090 = vrot.lane.b32.xlu0 %v564, 109
      %v1091 = vpop.permute.xlu0 %1090
      %1092 = vrot.lane.b32.xlu0 %v565, 109
      %v1093 = vpop.permute.xlu0 %1092
      %vm1094 = vcmp.lt.s32.totalorder %v625, 109
      %v1095 = vsel %vm1094, %v1091, %v1093
      %v1096 = vsel %vm1094, %v1093, %v1091
      %s1097 = scalar_lea.vmem %s1, 544
      %v1098 = vld [vmem:[%s1097] sm:$0xff]
      %v1099 = vld [vmem:[%s1097 + $0x8] sm:$0xff]
      %v1100 = vmul.f32 %v1095, %v1098
      %v1101 = vmul.f32 %v1096, %v1099
      %v1102 = vadd.f32 %v1088, %v1100
      %v1103 = vadd.f32 %v1089, %v1101
      %1104 = vrot.lane.b32.xlu0 %v564, 99
      %v1105 = vpop.permute.xlu0 %1104
      %1106 = vrot.lane.b32.xlu0 %v565, 99
      %v1107 = vpop.permute.xlu0 %1106
      %vm1108 = vcmp.lt.s32.totalorder %v625, 99
      %v1109 = vsel %vm1108, %v1105, %v1107
      %v1110 = vsel %vm1108, %v1107, %v1105
      %s1111 = scalar_lea.vmem %s1, 560
      %v1112 = vld [vmem:[%s1111] sm:$0xff]
      %v1113 = vld [vmem:[%s1111 + $0x8] sm:$0xff]
      %v1114 = vmul.f32 %v1109, %v1112
      %v1115 = vmul.f32 %v1110, %v1113
      %v1116 = vadd.f32 %v1102, %v1114
      %v1117 = vadd.f32 %v1103, %v1115
      %1118 = vrot.lane.b32.xlu0 %v564, 98
      %v1119 = vpop.permute.xlu0 %1118
      %1120 = vrot.lane.b32.xlu0 %v565, 98
      %v1121 = vpop.permute.xlu0 %1120
      %vm1122 = vcmp.lt.s32.totalorder %v625, 98
      %v1123 = vsel %vm1122, %v1119, %v1121
      %v1124 = vsel %vm1122, %v1121, %v1119
      %s1125 = scalar_lea.vmem %s1, 576
      %v1126 = vld [vmem:[%s1125] sm:$0xff]
      %v1127 = vld [vmem:[%s1125 + $0x8] sm:$0xff]
      %v1128 = vmul.f32 %v1123, %v1126
      %v1129 = vmul.f32 %v1124, %v1127
      %v1130 = vadd.f32 %v1116, %v1128
      %v1131 = vadd.f32 %v1117, %v1129
      %1132 = vrot.lane.b32.xlu0 %v564, 97
      %v1133 = vpop.permute.xlu0 %1132
      %1134 = vrot.lane.b32.xlu0 %v565, 97
      %v1135 = vpop.permute.xlu0 %1134
      %vm1136 = vcmp.lt.s32.totalorder %v625, 97
      %v1137 = vsel %vm1136, %v1133, %v1135
      %v1138 = vsel %vm1136, %v1135, %v1133
      %s1139 = scalar_lea.vmem %s1, 592
      %v1140 = vld [vmem:[%s1139] sm:$0xff]
      %v1141 = vld [vmem:[%s1139 + $0x8] sm:$0xff]
      %v1142 = vmul.f32 %v1137, %v1140
      %v1143 = vmul.f32 %v1138, %v1141
      %v1144 = vadd.f32 %v1130, %v1142
      %v1145 = vadd.f32 %v1131, %v1143
      %1146 = vrot.lane.b32.xlu0 %v564, 96
      %v1147 = vpop.permute.xlu0 %1146
      %1148 = vrot.lane.b32.xlu0 %v565, 96
      %v1149 = vpop.permute.xlu0 %1148
      %vm1150 = vcmp.lt.s32.totalorder %v625, 96
      %v1151 = vsel %vm1150, %v1147, %v1149
      %v1152 = vsel %vm1150, %v1149, %v1147
      %s1153 = scalar_lea.vmem %s1, 608
      %v1154 = vld [vmem:[%s1153] sm:$0xff]
      %v1155 = vld [vmem:[%s1153 + $0x8] sm:$0xff]
      %v1156 = vmul.f32 %v1151, %v1154
      %v1157 = vmul.f32 %v1152, %v1155
      %v1158 = vadd.f32 %v1144, %v1156
      %v1159 = vadd.f32 %v1145, %v1157
      %1160 = vrot.lane.b32.xlu0 %v564, 95
      %v1161 = vpop.permute.xlu0 %1160
      %1162 = vrot.lane.b32.xlu0 %v565, 95
      %v1163 = vpop.permute.xlu0 %1162
      %vm1164 = vcmp.lt.s32.totalorder %v625, 95
      %v1165 = vsel %vm1164, %v1161, %v1163
      %v1166 = vsel %vm1164, %v1163, %v1161
      %s1167 = scalar_lea.vmem %s1, 624
      %v1168 = vld [vmem:[%s1167] sm:$0xff]
      %v1169 = vld [vmem:[%s1167 + $0x8] sm:$0xff]
      %v1170 = vmul.f32 %v1165, %v1168
      %v1171 = vmul.f32 %v1166, %v1169
      %v1172 = vadd.f32 %v1158, %v1170
      %v1173 = vadd.f32 %v1159, %v1171
      %1174 = vrot.lane.b32.xlu0 %v564, 94
      %v1175 = vpop.permute.xlu0 %1174
      %1176 = vrot.lane.b32.xlu0 %v565, 94
      %v1177 = vpop.permute.xlu0 %1176
      %vm1178 = vcmp.lt.s32.totalorder %v625, 94
      %v1179 = vsel %vm1178, %v1175, %v1177
      %v1180 = vsel %vm1178, %v1177, %v1175
      %s1181 = scalar_lea.vmem %s1, 640
      %v1182 = vld [vmem:[%s1181] sm:$0xff]
      %v1183 = vld [vmem:[%s1181 + $0x8] sm:$0xff]
      %v1184 = vmul.f32 %v1179, %v1182
      %v1185 = vmul.f32 %v1180, %v1183
      %v1186 = vadd.f32 %v1172, %v1184
      %v1187 = vadd.f32 %v1173, %v1185
      %1188 = vrot.lane.b32.xlu0 %v564, 93
      %v1189 = vpop.permute.xlu0 %1188
      %1190 = vrot.lane.b32.xlu0 %v565, 93
      %v1191 = vpop.permute.xlu0 %1190
      %vm1192 = vcmp.lt.s32.totalorder %v625, 93
      %v1193 = vsel %vm1192, %v1189, %v1191
      %v1194 = vsel %vm1192, %v1191, %v1189
      %s1195 = scalar_lea.vmem %s1, 656
      %v1196 = vld [vmem:[%s1195] sm:$0xff]
      %v1197 = vld [vmem:[%s1195 + $0x8] sm:$0xff]
      %v1198 = vmul.f32 %v1193, %v1196
      %v1199 = vmul.f32 %v1194, %v1197
      %v1200 = vadd.f32 %v1186, %v1198
      %v1201 = vadd.f32 %v1187, %v1199
      %1202 = vrot.lane.b32.xlu0 %v564, 83
      %v1203 = vpop.permute.xlu0 %1202
      %1204 = vrot.lane.b32.xlu0 %v565, 83
      %v1205 = vpop.permute.xlu0 %1204
      %vm1206 = vcmp.lt.s32.totalorder %v625, 83
      %v1207 = vsel %vm1206, %v1203, %v1205
      %v1208 = vsel %vm1206, %v1205, %v1203
      %s1209 = scalar_lea.vmem %s1, 672
      %v1210 = vld [vmem:[%s1209] sm:$0xff]
      %v1211 = vld [vmem:[%s1209 + $0x8] sm:$0xff]
      %v1212 = vmul.f32 %v1207, %v1210
      %v1213 = vmul.f32 %v1208, %v1211
      %v1214 = vadd.f32 %v1200, %v1212
      %v1215 = vadd.f32 %v1201, %v1213
      %1216 = vrot.lane.b32.xlu0 %v564, 82
      %v1217 = vpop.permute.xlu0 %1216
      %1218 = vrot.lane.b32.xlu0 %v565, 82
      %v1219 = vpop.permute.xlu0 %1218
      %vm1220 = vcmp.lt.s32.totalorder %v625, 82
      %v1221 = vsel %vm1220, %v1217, %v1219
      %v1222 = vsel %vm1220, %v1219, %v1217
      %s1223 = scalar_lea.vmem %s1, 688
      %v1224 = vld [vmem:[%s1223] sm:$0xff]
      %v1225 = vld [vmem:[%s1223 + $0x8] sm:$0xff]
      %v1226 = vmul.f32 %v1221, %v1224
      %v1227 = vmul.f32 %v1222, %v1225
      %v1228 = vadd.f32 %v1214, %v1226
      %v1229 = vadd.f32 %v1215, %v1227
      %1230 = vrot.lane.b32.xlu0 %v564, 81
      %v1231 = vpop.permute.xlu0 %1230
      %1232 = vrot.lane.b32.xlu0 %v565, 81
      %v1233 = vpop.permute.xlu0 %1232
      %vm1234 = vcmp.lt.s32.totalorder %v625, 81
      %v1235 = vsel %vm1234, %v1231, %v1233
      %v1236 = vsel %vm1234, %v1233, %v1231
      %s1237 = scalar_lea.vmem %s1, 704
      %v1238 = vld [vmem:[%s1237] sm:$0xff]
      %v1239 = vld [vmem:[%s1237 + $0x8] sm:$0xff]
      %v1240 = vmul.f32 %v1235, %v1238
      %v1241 = vmul.f32 %v1236, %v1239
      %v1242 = vadd.f32 %v1228, %v1240
      %v1243 = vadd.f32 %v1229, %v1241
      %1244 = vrot.lane.b32.xlu0 %v564, 80
      %v1245 = vpop.permute.xlu0 %1244
      %1246 = vrot.lane.b32.xlu0 %v565, 80
      %v1247 = vpop.permute.xlu0 %1246
      %vm1248 = vcmp.lt.s32.totalorder %v625, 80
      %v1249 = vsel %vm1248, %v1245, %v1247
      %v1250 = vsel %vm1248, %v1247, %v1245
      %s1251 = scalar_lea.vmem %s1, 720
      %v1252 = vld [vmem:[%s1251] sm:$0xff]
      %v1253 = vld [vmem:[%s1251 + $0x8] sm:$0xff]
      %v1254 = vmul.f32 %v1249, %v1252
      %v1255 = vmul.f32 %v1250, %v1253
      %v1256 = vadd.f32 %v1242, %v1254
      %v1257 = vadd.f32 %v1243, %v1255
      %1258 = vrot.lane.b32.xlu0 %v564, 79
      %v1259 = vpop.permute.xlu0 %1258
      %1260 = vrot.lane.b32.xlu0 %v565, 79
      %v1261 = vpop.permute.xlu0 %1260
      %vm1262 = vcmp.lt.s32.totalorder %v625, 79
      %v1263 = vsel %vm1262, %v1259, %v1261
      %v1264 = vsel %vm1262, %v1261, %v1259
      %s1265 = scalar_lea.vmem %s1, 736
      %v1266 = vld [vmem:[%s1265] sm:$0xff]
      %v1267 = vld [vmem:[%s1265 + $0x8] sm:$0xff]
      %v1268 = vmul.f32 %v1263, %v1266
      %v1269 = vmul.f32 %v1264, %v1267
      %v1270 = vadd.f32 %v1256, %v1268
      %v1271 = vadd.f32 %v1257, %v1269
      %1272 = vrot.lane.b32.xlu0 %v564, 78
      %v1273 = vpop.permute.xlu0 %1272
      %1274 = vrot.lane.b32.xlu0 %v565, 78
      %v1275 = vpop.permute.xlu0 %1274
      %vm1276 = vcmp.lt.s32.totalorder %v625, 78
      %v1277 = vsel %vm1276, %v1273, %v1275
      %v1278 = vsel %vm1276, %v1275, %v1273
      %s1279 = scalar_lea.vmem %s1, 752
      %v1280 = vld [vmem:[%s1279] sm:$0xff]
      %v1281 = vld [vmem:[%s1279 + $0x8] sm:$0xff]
      %v1282 = vmul.f32 %v1277, %v1280
      %v1283 = vmul.f32 %v1278, %v1281
      %v1284 = vadd.f32 %v1270, %v1282
      %v1285 = vadd.f32 %v1271, %v1283
      %1286 = vrot.lane.b32.xlu0 %v564, 77
      %v1287 = vpop.permute.xlu0 %1286
      %1288 = vrot.lane.b32.xlu0 %v565, 77
      %v1289 = vpop.permute.xlu0 %1288
      %vm1290 = vcmp.lt.s32.totalorder %v625, 77
      %v1291 = vsel %vm1290, %v1287, %v1289
      %v1292 = vsel %vm1290, %v1289, %v1287
      %s1293 = scalar_lea.vmem %s1, 768
      %v1294 = vld [vmem:[%s1293] sm:$0xff]
      %v1295 = vld [vmem:[%s1293 + $0x8] sm:$0xff]
      %v1296 = vmul.f32 %v1291, %v1294
      %v1297 = vmul.f32 %v1292, %v1295
      %v1298 = vadd.f32 %v1284, %v1296
      %v1299 = vadd.f32 %v1285, %v1297
      %1301 = vset.pattern.permute.xlu0 0
      %1302 = vperm.xlu0 %1301, %v619
      %v1303 = vpop.permute.xlu0 %1302
      %v1305 = vadd.f32 %v1298, %v1303
      %v1306 = vadd.f32 %v1299, %v1303
      %v1307 = vld [vmem:[%s7] sm:$0xff]
      %v1308 = vld [vmem:[%s8] sm:$0xff]
      %v1309 = vadd.f32 %v1305, %v1306
      %1310 = vadd.xlane.f32.xlu0 %v1309
      %v1311 = vpop.xlane.xlu0 %1310
      %v1312 = vrot.slane %v1311, 4
      %v1313 = vadd.f32 %v1311, %v1312
      %v1314 = vrot.slane %v1313, 2
      %v1315 = vadd.f32 %v1313, %v1314
      %v1316 = vrot.slane %v1315, 1
      %v1317 = vadd.f32 %v1315, %v1316
      %v1318 = vmul.f32 %v1317, 0.00048828125
      %v1319 = vsub.f32 %v1305, %v1318
      %v1320 = vsub.f32 %v1306, %v1318
      %v1321 = vmul.f32 %v1319, %v1319
      %v1322 = vmul.f32 %v1320, %v1320
      %v1323 = vadd.f32 %v1321, %v1322
      %1324 = vadd.xlane.f32.xlu0 %v1323
      %v1325 = vpop.xlane.xlu0 %1324
      %v1326 = vrot.slane %v1325, 4
      %v1327 = vadd.f32 %v1325, %v1326
      %v1328 = vrot.slane %v1327, 2
      %v1329 = vadd.f32 %v1327, %v1328
      %v1330 = vrot.slane %v1329, 1
      %v1331 = vadd.f32 %v1329, %v1330
      %v1332 = vmul.f32 %v1331, 0.00048828125
      %v1333 = vadd.f32 %v1332, 1e-05
      %v1334 = vrsqrt.pop %v1333
      %v1335 = vmul.f32 %v1334, %v1333
      %v1336 = vmul.f32 %v1335, %v1334
      %v1337 = vmul.f32 0.5, %v1336
      %v1338 = vsub.f32 1.5, %v1337
      %v1339 = vmul.f32 %v1334, %v1338
      %vm1340 = vweird.f32 %v1333
      %vm1341 = vweird.f32 %v1334
      %vm1342 = vmor %vm1340, %vm1341
      %v1343 = vsel %vm1342, %v1334, %v1339
      %v1344 = vmul.f32 %v1319, %v1343
      %v1345 = vmul.f32 %v1320, %v1343
      %1347 = vset.pattern.permute.xlu0 0
      %1348 = vperm.xlu0 %1347, %v1307
      %v1349 = vpop.permute.xlu0 %1348
      %v1351 = vmul.f32 %v1344, %v1349
      %v1352 = vmul.f32 %v1345, %v1349
      %1354 = vset.pattern.permute.xlu0 0
      %1355 = vperm.xlu0 %1354, %v1308
      %v1356 = vpop.permute.xlu0 %1355
      %v1358 = vadd.f32 %v1351, %v1356
      %v1359 = vadd.f32 %v1352, %v1356
      %1360 = vrot.lane.b32.xlu0 %v1358, 17
      %v1361 = vpop.permute.xlu0 %1360
      %1362 = vrot.lane.b32.xlu0 %v1359, 17
      %v1363 = vpop.permute.xlu0 %1362
      %v1364 = vsel %vm849, %v1361, %v1363
      %v1365 = vsel %vm849, %v1363, %v1361
      %v1366 = vld [vmem:[%s2] sm:$0x3]
      %v1368 = vperm.slane %v1366, 0
      %v1369 = vperm.slane %v1366, 1
      %v1372 = vmul.f32 %v1365, %v1368
      %v1373 = vmul.f32 %v1364, %v1369
      %v1374 = vld [vmem:[%s9] sm:$0xff]
      %v1375 = vld [vmem:[%s9 + $0x8] sm:$0xff]
      %v1376 = vld [vmem:[%s9 + $0x10] sm:$0xff]
      %v1377 = vld [vmem:[%s9 + $0x18] sm:$0xff]
      %v1378 = vpack.c.bf16 %v1375, %v1374
      %v1379 = vpack.c.bf16 %v1377, %v1376
      %v1380 = vpack.c.bf16 %v1372, %v1372
      %v1381 = vpack.c.bf16 %v1373, %v1373
      %1382 = vrot.lane.b32.xlu0 %v1358, 16
      %v1383 = vpop.permute.xlu0 %1382
      %1384 = vrot.lane.b32.xlu0 %v1359, 16
      %v1385 = vpop.permute.xlu0 %1384
      %v1386 = vsel %vm863, %v1383, %v1385
      %v1387 = vsel %vm863, %v1385, %v1383
      %s1388 = scalar_lea.vmem %s2, 2
      %v1389 = vld [vmem:[%s1388] sm:$0x3]
      %v1391 = vperm.slane %v1389, 0
      %v1392 = vperm.slane %v1389, 1
      %v1395 = vmul.f32 %v1387, %v1391
      %v1396 = vmul.f32 %v1386, %v1392
      %s1397 = scalar_lea.vmem %s9, 32
      %v1398 = vld [vmem:[%s1397] sm:$0xff]
      %v1399 = vld [vmem:[%s1397 + $0x8] sm:$0xff]
      %v1400 = vld [vmem:[%s1397 + $0x10] sm:$0xff]
      %v1401 = vld [vmem:[%s1397 + $0x18] sm:$0xff]
      %v1402 = vpack.c.bf16 %v1399, %v1398
      %v1403 = vpack.c.bf16 %v1401, %v1400
      %v1404 = vpack.c.bf16 %v1395, %v1395
      %v1405 = vpack.c.bf16 %v1396, %v1396
      %vm1406 = vcmask 64512
      %v1408 = vsel %vm1406, %v1402, 0
      %v1411 = vsel %vm1406, %v1403, 0
      %vm1413 = vcmask 1043456
      %v1415 = vsel %vm1413, %v1404, 0
      %v1418 = vsel %vm1413, %v1405, 0
      %1420 = vmatpush.bf16.msra.mxu0 0
      %1421 = vmatpush.bf16.msra.mxu0 0
      %1422 = vmatpush.bf16.msra.mxu0 0
      %1423 = vmatpush.bf16.msra.mxu0 0
      %1424 = vmatpush.bf16.msra.mxu0 0
      %1425 = vmatpush.bf16.msra.mxu0 0
      %1426 = vmatpush.bf16.msra.mxu0 0
      %1427 = vmatpush.bf16.msra.mxu0 %v1415
      %1428 = vmatmul.bf16.gmra.mxu0 %v1408
      %v1429 = vpop.f32.mrf.mxu0
      %v1430 = vadd.f32 0.0, %v1429
      %v1431 = vpop.f32.mrf.mxu0
      %v1432 = vadd.f32 0.0, %v1431
      %1433 = vmatmul.bf16.gmra.mxu0 %v1411
      %v1434 = vpop.f32.mrf.mxu0
      %v1435 = vadd.f32 0.0, %v1434
      %v1436 = vpop.f32.mrf.mxu0
      %v1437 = vadd.f32 0.0, %v1436
      %1438 = vdwg.mxu0
      %1439 = vmatpush.bf16.msra.mxu0 0
      %1440 = vmatpush.bf16.msra.mxu0 0
      %1441 = vmatpush.bf16.msra.mxu0 0
      %1442 = vmatpush.bf16.msra.mxu0 0
      %1443 = vmatpush.bf16.msra.mxu0 0
      %1444 = vmatpush.bf16.msra.mxu0 0
      %1445 = vmatpush.bf16.msra.mxu0 0
      %1446 = vmatpush.bf16.msra.mxu0 %v1418
      %1447 = vmatmul.bf16.gmra.mxu0 %v1408
      %v1448 = vpop.f32.mrf.mxu0
      %v1449 = vadd.f32 0.0, %v1448
      %v1450 = vpop.f32.mrf.mxu0
      %v1451 = vadd.f32 0.0, %v1450
      %1452 = vmatmul.bf16.gmra.mxu0 %v1411
      %v1453 = vpop.f32.mrf.mxu0
      %v1454 = vadd.f32 0.0, %v1453
      %v1455 = vpop.f32.mrf.mxu0
      %v1456 = vadd.f32 0.0, %v1455
      %1457 = vdwg.mxu0
      %v1459 = vsel %vm1406, %v1378, 0
      %v1462 = vsel %vm1406, %v1379, 0
      %v1465 = vsel %vm1413, %v1380, 0
      %v1468 = vsel %vm1413, %v1381, 0
      %1470 = vmatpush.bf16.msra.mxu0 0
      %1471 = vmatpush.bf16.msra.mxu0 0
      %1472 = vmatpush.bf16.msra.mxu0 0
      %1473 = vmatpush.bf16.msra.mxu0 0
      %1474 = vmatpush.bf16.msra.mxu0 0
      %1475 = vmatpush.bf16.msra.mxu0 0
      %1476 = vmatpush.bf16.msra.mxu0 0
      %1477 = vmatpush.bf16.msra.mxu0 %v1465
      %1478 = vmatmul.bf16.gmra.mxu0 %v1459
      %v1479 = vpop.f32.mrf.mxu0
      %v1480 = vadd.f32 %v1430, %v1479
      %v1481 = vpop.f32.mrf.mxu0
      %v1482 = vadd.f32 %v1432, %v1481
      %1483 = vmatmul.bf16.gmra.mxu0 %v1462
      %v1484 = vpop.f32.mrf.mxu0
      %v1485 = vadd.f32 %v1435, %v1484
      %v1486 = vpop.f32.mrf.mxu0
      %v1487 = vadd.f32 %v1437, %v1486
      %1488 = vdwg.mxu0
      %1489 = vmatpush.bf16.msra.mxu0 0
      %1490 = vmatpush.bf16.msra.mxu0 0
      %1491 = vmatpush.bf16.msra.mxu0 0
      %1492 = vmatpush.bf16.msra.mxu0 0
      %1493 = vmatpush.bf16.msra.mxu0 0
      %1494 = vmatpush.bf16.msra.mxu0 0
      %1495 = vmatpush.bf16.msra.mxu0 0
      %1496 = vmatpush.bf16.msra.mxu0 %v1468
      %1497 = vmatmul.bf16.gmra.mxu0 %v1459
      %v1498 = vpop.f32.mrf.mxu0
      %v1499 = vadd.f32 %v1449, %v1498
      %v1500 = vpop.f32.mrf.mxu0
      %v1501 = vadd.f32 %v1451, %v1500
      %1502 = vmatmul.bf16.gmra.mxu0 %v1462
      %v1503 = vpop.f32.mrf.mxu0
      %v1504 = vadd.f32 %v1454, %v1503
      %v1505 = vpop.f32.mrf.mxu0
      %v1506 = vadd.f32 %v1456, %v1505
      %1507 = vdwg.mxu0
      %1508 = vrot.lane.b32.xlu0 %v1358, 15
      %v1509 = vpop.permute.xlu0 %1508
      %1510 = vrot.lane.b32.xlu0 %v1359, 15
      %v1511 = vpop.permute.xlu0 %1510
      %v1512 = vsel %vm877, %v1509, %v1511
      %v1513 = vsel %vm877, %v1511, %v1509
      %s1514 = scalar_lea.vmem %s2, 4
      %v1515 = vld [vmem:[%s1514] sm:$0x3]
      %v1517 = vperm.slane %v1515, 0
      %v1518 = vperm.slane %v1515, 1
      %v1521 = vmul.f32 %v1513, %v1517
      %v1522 = vmul.f32 %v1512, %v1518
      %s1523 = scalar_lea.vmem %s9, 64
      %v1524 = vld [vmem:[%s1523] sm:$0xff]
      %v1525 = vld [vmem:[%s1523 + $0x8] sm:$0xff]
      %v1526 = vld [vmem:[%s1523 + $0x10] sm:$0xff]
      %v1527 = vld [vmem:[%s1523 + $0x18] sm:$0xff]
      %v1528 = vpack.c.bf16 %v1525, %v1524
      %v1529 = vpack.c.bf16 %v1527, %v1526
      %v1530 = vpack.c.bf16 %v1521, %v1521
      %v1531 = vpack.c.bf16 %v1522, %v1522
      %v1533 = vsel %vm1406, %v1528, 0
      %v1536 = vsel %vm1406, %v1529, 0
      %v1539 = vsel %vm1413, %v1530, 0
      %v1542 = vsel %vm1413, %v1531, 0
      %1544 = vmatpush.bf16.msra.mxu0 0
      %1545 = vmatpush.bf16.msra.mxu0 0
      %1546 = vmatpush.bf16.msra.mxu0 0
      %1547 = vmatpush.bf16.msra.mxu0 0
      %1548 = vmatpush.bf16.msra.mxu0 0
      %1549 = vmatpush.bf16.msra.mxu0 0
      %1550 = vmatpush.bf16.msra.mxu0 0
      %1551 = vmatpush.bf16.msra.mxu0 %v1539
      %1552 = vmatmul.bf16.gmra.mxu0 %v1533
      %v1553 = vpop.f32.mrf.mxu0
      %v1554 = vadd.f32 0.0, %v1553
      %v1555 = vpop.f32.mrf.mxu0
      %v1556 = vadd.f32 0.0, %v1555
      %1557 = vmatmul.bf16.gmra.mxu0 %v1536
      %v1558 = vpop.f32.mrf.mxu0
      %v1559 = vadd.f32 0.0, %v1558
      %v1560 = vpop.f32.mrf.mxu0
      %v1561 = vadd.f32 0.0, %v1560
      %1562 = vdwg.mxu0
      %1563 = vmatpush.bf16.msra.mxu0 0
      %1564 = vmatpush.bf16.msra.mxu0 0
      %1565 = vmatpush.bf16.msra.mxu0 0
      %1566 = vmatpush.bf16.msra.mxu0 0
      %1567 = vmatpush.bf16.msra.mxu0 0
      %1568 = vmatpush.bf16.msra.mxu0 0
      %1569 = vmatpush.bf16.msra.mxu0 0
      %1570 = vmatpush.bf16.msra.mxu0 %v1542
      %1571 = vmatmul.bf16.gmra.mxu0 %v1533
      %v1572 = vpop.f32.mrf.mxu0
      %v1573 = vadd.f32 0.0, %v1572
      %v1574 = vpop.f32.mrf.mxu0
      %v1575 = vadd.f32 0.0, %v1574
      %1576 = vmatmul.bf16.gmra.mxu0 %v1536
      %v1577 = vpop.f32.mrf.mxu0
      %v1578 = vadd.f32 0.0, %v1577
      %v1579 = vpop.f32.mrf.mxu0
      %v1580 = vadd.f32 0.0, %v1579
      %1581 = vdwg.mxu0
      %v1582 = vadd.f32 %v1480, %v1554
      %v1583 = vadd.f32 %v1499, %v1573
      %v1584 = vadd.f32 %v1482, %v1556
      %v1585 = vadd.f32 %v1501, %v1575
      %v1586 = vadd.f32 %v1485, %v1559
      %v1587 = vadd.f32 %v1504, %v1578
      %v1588 = vadd.f32 %v1487, %v1561
      %v1589 = vadd.f32 %v1506, %v1580
      %1590 = vrot.lane.b32.xlu0 %v1358, 1
      %v1591 = vpop.permute.xlu0 %1590
      %1592 = vrot.lane.b32.xlu0 %v1359, 1
      %v1593 = vpop.permute.xlu0 %1592
      %v1594 = vsel %vm947, %v1591, %v1593
      %v1595 = vsel %vm947, %v1593, %v1591
      %s1596 = scalar_lea.vmem %s2, 6
      %v1597 = vld [vmem:[%s1596] sm:$0x3]
      %v1599 = vperm.slane %v1597, 0
      %v1600 = vperm.slane %v1597, 1
      %v1603 = vmul.f32 %v1595, %v1599
      %v1604 = vmul.f32 %v1594, %v1600
      %s1605 = scalar_lea.vmem %s9, 96
      %v1606 = vld [vmem:[%s1605] sm:$0xff]
      %v1607 = vld [vmem:[%s1605 + $0x8] sm:$0xff]
      %v1608 = vld [vmem:[%s1605 + $0x10] sm:$0xff]
      %v1609 = vld [vmem:[%s1605 + $0x18] sm:$0xff]
      %v1610 = vpack.c.bf16 %v1607, %v1606
      %v1611 = vpack.c.bf16 %v1609, %v1608
      %v1612 = vpack.c.bf16 %v1603, %v1603
      %v1613 = vpack.c.bf16 %v1604, %v1604
      %v1615 = vsel %vm1406, %v1610, 0
      %v1618 = vsel %vm1406, %v1611, 0
      %v1621 = vsel %vm1413, %v1612, 0
      %v1624 = vsel %vm1413, %v1613, 0
      %1626 = vmatpush.bf16.msra.mxu0 0
      %1627 = vmatpush.bf16.msra.mxu0 0
      %1628 = vmatpush.bf16.msra.mxu0 0
      %1629 = vmatpush.bf16.msra.mxu0 0
      %1630 = vmatpush.bf16.msra.mxu0 0
      %1631 = vmatpush.bf16.msra.mxu0 0
      %1632 = vmatpush.bf16.msra.mxu0 0
      %1633 = vmatpush.bf16.msra.mxu0 %v1621
      %1634 = vmatmul.bf16.gmra.mxu0 %v1615
      %v1635 = vpop.f32.mrf.mxu0
      %v1636 = vadd.f32 0.0, %v1635
      %v1637 = vpop.f32.mrf.mxu0
      %v1638 = vadd.f32 0.0, %v1637
      %1639 = vmatmul.bf16.gmra.mxu0 %v1618
      %v1640 = vpop.f32.mrf.mxu0
      %v1641 = vadd.f32 0.0, %v1640
      %v1642 = vpop.f32.mrf.mxu0
      %v1643 = vadd.f32 0.0, %v1642
      %1644 = vdwg.mxu0
      %1645 = vmatpush.bf16.msra.mxu0 0
      %1646 = vmatpush.bf16.msra.mxu0 0
      %1647 = vmatpush.bf16.msra.mxu0 0
      %1648 = vmatpush.bf16.msra.mxu0 0
      %1649 = vmatpush.bf16.msra.mxu0 0
      %1650 = vmatpush.bf16.msra.mxu0 0
      %1651 = vmatpush.bf16.msra.mxu0 0
      %1652 = vmatpush.bf16.msra.mxu0 %v1624
      %1653 = vmatmul.bf16.gmra.mxu0 %v1615
      %v1654 = vpop.f32.mrf.mxu0
      %v1655 = vadd.f32 0.0, %v1654
      %v1656 = vpop.f32.mrf.mxu0
      %v1657 = vadd.f32 0.0, %v1656
      %1658 = vmatmul.bf16.gmra.mxu0 %v1618
      %v1659 = vpop.f32.mrf.mxu0
      %v1660 = vadd.f32 0.0, %v1659
      %v1661 = vpop.f32.mrf.mxu0
      %v1662 = vadd.f32 0.0, %v1661
      %1663 = vdwg.mxu0
      %v1664 = vadd.f32 %v1582, %v1636
      %v1665 = vadd.f32 %v1583, %v1655
      %v1666 = vadd.f32 %v1584, %v1638
      %v1667 = vadd.f32 %v1585, %v1657
      %v1668 = vadd.f32 %v1586, %v1641
      %v1669 = vadd.f32 %v1587, %v1660
      %v1670 = vadd.f32 %v1588, %v1643
      %v1671 = vadd.f32 %v1589, %v1662
      %s1672 = scalar_lea.vmem %s2, 8
      %v1673 = vld [vmem:[%s1672] sm:$0x3]
      %v1675 = vperm.slane %v1673, 0
      %v1676 = vperm.slane %v1673, 1
      %v1679 = vmul.f32 %v1358, %v1675
      %v1680 = vmul.f32 %v1359, %v1676
      %s1681 = scalar_lea.vmem %s9, 128
      %v1682 = vld [vmem:[%s1681] sm:$0xff]
      %v1683 = vld [vmem:[%s1681 + $0x8] sm:$0xff]
      %v1684 = vld [vmem:[%s1681 + $0x10] sm:$0xff]
      %v1685 = vld [vmem:[%s1681 + $0x18] sm:$0xff]
      %v1686 = vpack.c.bf16 %v1683, %v1682
      %v1687 = vpack.c.bf16 %v1685, %v1684
      %v1688 = vpack.c.bf16 %v1679, %v1679
      %v1689 = vpack.c.bf16 %v1680, %v1680
      %v1691 = vsel %vm1406, %v1686, 0
      %v1694 = vsel %vm1406, %v1687, 0
      %v1697 = vsel %vm1413, %v1688, 0
      %v1700 = vsel %vm1413, %v1689, 0
      %1702 = vmatpush.bf16.msra.mxu0 0
      %1703 = vmatpush.bf16.msra.mxu0 0
      %1704 = vmatpush.bf16.msra.mxu0 0
      %1705 = vmatpush.bf16.msra.mxu0 0
      %1706 = vmatpush.bf16.msra.mxu0 0
      %1707 = vmatpush.bf16.msra.mxu0 0
      %1708 = vmatpush.bf16.msra.mxu0 0
      %1709 = vmatpush.bf16.msra.mxu0 %v1697
      %1710 = vmatmul.bf16.gmra.mxu0 %v1691
      %v1711 = vpop.f32.mrf.mxu0
      %v1712 = vadd.f32 0.0, %v1711
      %v1713 = vpop.f32.mrf.mxu0
      %v1714 = vadd.f32 0.0, %v1713
      %1715 = vmatmul.bf16.gmra.mxu0 %v1694
      %v1716 = vpop.f32.mrf.mxu0
      %v1717 = vadd.f32 0.0, %v1716
      %v1718 = vpop.f32.mrf.mxu0
      %v1719 = vadd.f32 0.0, %v1718
      %1720 = vdwg.mxu0
      %1721 = vmatpush.bf16.msra.mxu0 0
      %1722 = vmatpush.bf16.msra.mxu0 0
      %1723 = vmatpush.bf16.msra.mxu0 0
      %1724 = vmatpush.bf16.msra.mxu0 0
      %1725 = vmatpush.bf16.msra.mxu0 0
      %1726 = vmatpush.bf16.msra.mxu0 0
      %1727 = vmatpush.bf16.msra.mxu0 0
      %1728 = vmatpush.bf16.msra.mxu0 %v1700
      %1729 = vmatmul.bf16.gmra.mxu0 %v1691
      %v1730 = vpop.f32.mrf.mxu0
      %v1731 = vadd.f32 0.0, %v1730
      %v1732 = vpop.f32.mrf.mxu0
      %v1733 = vadd.f32 0.0, %v1732
      %1734 = vmatmul.bf16.gmra.mxu0 %v1694
      %v1735 = vpop.f32.mrf.mxu0
      %v1736 = vadd.f32 0.0, %v1735
      %v1737 = vpop.f32.mrf.mxu0
      %v1738 = vadd.f32 0.0, %v1737
      %1739 = vdwg.mxu0
      %v1740 = vadd.f32 %v1664, %v1712
      %v1741 = vadd.f32 %v1665, %v1731
      %v1742 = vadd.f32 %v1666, %v1714
      %v1743 = vadd.f32 %v1667, %v1733
      %v1744 = vadd.f32 %v1668, %v1717
      %v1745 = vadd.f32 %v1669, %v1736
      %v1746 = vadd.f32 %v1670, %v1719
      %v1747 = vadd.f32 %v1671, %v1738
      %1748 = vrot.lane.b32.xlu0 %v1358, 127
      %v1749 = vpop.permute.xlu0 %1748
      %1750 = vrot.lane.b32.xlu0 %v1359, 127
      %v1751 = vpop.permute.xlu0 %1750
      %v1752 = vsel %vm968, %v1749, %v1751
      %v1753 = vsel %vm968, %v1751, %v1749
      %s1754 = scalar_lea.vmem %s2, 10
      %v1755 = vld [vmem:[%s1754] sm:$0x3]
      %v1757 = vperm.slane %v1755, 0
      %v1758 = vperm.slane %v1755, 1
      %v1761 = vmul.f32 %v1752, %v1757
      %v1762 = vmul.f32 %v1753, %v1758
      %s1763 = scalar_lea.vmem %s9, 160
      %v1764 = vld [vmem:[%s1763] sm:$0xff]
      %v1765 = vld [vmem:[%s1763 + $0x8] sm:$0xff]
      %v1766 = vld [vmem:[%s1763 + $0x10] sm:$0xff]
      %v1767 = vld [vmem:[%s1763 + $0x18] sm:$0xff]
      %v1768 = vpack.c.bf16 %v1765, %v1764
      %v1769 = vpack.c.bf16 %v1767, %v1766
      %v1770 = vpack.c.bf16 %v1761, %v1761
      %v1771 = vpack.c.bf16 %v1762, %v1762
      %v1773 = vsel %vm1406, %v1768, 0
      %v1776 = vsel %vm1406, %v1769, 0
      %v1779 = vsel %vm1413, %v1770, 0
      %v1782 = vsel %vm1413, %v1771, 0
      %1784 = vmatpush.bf16.msra.mxu0 0
      %1785 = vmatpush.bf16.msra.mxu0 0
      %1786 = vmatpush.bf16.msra.mxu0 0
      %1787 = vmatpush.bf16.msra.mxu0 0
      %1788 = vmatpush.bf16.msra.mxu0 0
      %1789 = vmatpush.bf16.msra.mxu0 0
      %1790 = vmatpush.bf16.msra.mxu0 0
      %1791 = vmatpush.bf16.msra.mxu0 %v1779
      %1792 = vmatmul.bf16.gmra.mxu0 %v1773
      %v1793 = vpop.f32.mrf.mxu0
      %v1794 = vadd.f32 0.0, %v1793
      %v1795 = vpop.f32.mrf.mxu0
      %v1796 = vadd.f32 0.0, %v1795
      %1797 = vmatmul.bf16.gmra.mxu0 %v1776
      %v1798 = vpop.f32.mrf.mxu0
      %v1799 = vadd.f32 0.0, %v1798
      %v1800 = vpop.f32.mrf.mxu0
      %v1801 = vadd.f32 0.0, %v1800
      %1802 = vdwg.mxu0
      %1803 = vmatpush.bf16.msra.mxu0 0
      %1804 = vmatpush.bf16.msra.mxu0 0
      %1805 = vmatpush.bf16.msra.mxu0 0
      %1806 = vmatpush.bf16.msra.mxu0 0
      %1807 = vmatpush.bf16.msra.mxu0 0
      %1808 = vmatpush.bf16.msra.mxu0 0
      %1809 = vmatpush.bf16.msra.mxu0 0
      %1810 = vmatpush.bf16.msra.mxu0 %v1782
      %1811 = vmatmul.bf16.gmra.mxu0 %v1773
      %v1812 = vpop.f32.mrf.mxu0
      %v1813 = vadd.f32 0.0, %v1812
      %v1814 = vpop.f32.mrf.mxu0
      %v1815 = vadd.f32 0.0, %v1814
      %1816 = vmatmul.bf16.gmra.mxu0 %v1776
      %v1817 = vpop.f32.mrf.mxu0
      %v1818 = vadd.f32 0.0, %v1817
      %v1819 = vpop.f32.mrf.mxu0
      %v1820 = vadd.f32 0.0, %v1819
      %1821 = vdwg.mxu0
      %v1822 = vadd.f32 %v1740, %v1794
      %v1823 = vadd.f32 %v1741, %v1813
      %v1824 = vadd.f32 %v1742, %v1796
      %v1825 = vadd.f32 %v1743, %v1815
      %v1826 = vadd.f32 %v1744, %v1799
      %v1827 = vadd.f32 %v1745, %v1818
      %v1828 = vadd.f32 %v1746, %v1801
      %v1829 = vadd.f32 %v1747, %v1820
      %1830 = vrot.lane.b32.xlu0 %v1358, 113
      %v1831 = vpop.permute.xlu0 %1830
      %1832 = vrot.lane.b32.xlu0 %v1359, 113
      %v1833 = vpop.permute.xlu0 %1832
      %v1834 = vsel %vm1038, %v1831, %v1833
      %v1835 = vsel %vm1038, %v1833, %v1831
      %s1836 = scalar_lea.vmem %s2, 12
      %v1837 = vld [vmem:[%s1836] sm:$0x3]
      %v1839 = vperm.slane %v1837, 0
      %v1840 = vperm.slane %v1837, 1
      %v1843 = vmul.f32 %v1834, %v1839
      %v1844 = vmul.f32 %v1835, %v1840
      %s1845 = scalar_lea.vmem %s9, 192
      %v1846 = vld [vmem:[%s1845] sm:$0xff]
      %v1847 = vld [vmem:[%s1845 + $0x8] sm:$0xff]
      %v1848 = vld [vmem:[%s1845 + $0x10] sm:$0xff]
      %v1849 = vld [vmem:[%s1845 + $0x18] sm:$0xff]
      %v1850 = vpack.c.bf16 %v1847, %v1846
      %v1851 = vpack.c.bf16 %v1849, %v1848
      %v1852 = vpack.c.bf16 %v1843, %v1843
      %v1853 = vpack.c.bf16 %v1844, %v1844
      %v1855 = vsel %vm1406, %v1850, 0
      %v1858 = vsel %vm1406, %v1851, 0
      %v1861 = vsel %vm1413, %v1852, 0
      %v1864 = vsel %vm1413, %v1853, 0
      %1866 = vmatpush.bf16.msra.mxu0 0
      %1867 = vmatpush.bf16.msra.mxu0 0
      %1868 = vmatpush.bf16.msra.mxu0 0
      %1869 = vmatpush.bf16.msra.mxu0 0
      %1870 = vmatpush.bf16.msra.mxu0 0
      %1871 = vmatpush.bf16.msra.mxu0 0
      %1872 = vmatpush.bf16.msra.mxu0 0
      %1873 = vmatpush.bf16.msra.mxu0 %v1861
      %1874 = vmatmul.bf16.gmra.mxu0 %v1855
      %v1875 = vpop.f32.mrf.mxu0
      %v1876 = vadd.f32 0.0, %v1875
      %v1877 = vpop.f32.mrf.mxu0
      %v1878 = vadd.f32 0.0, %v1877
      %1879 = vmatmul.bf16.gmra.mxu0 %v1858
      %v1880 = vpop.f32.mrf.mxu0
      %v1881 = vadd.f32 0.0, %v1880
      %v1882 = vpop.f32.mrf.mxu0
      %v1883 = vadd.f32 0.0, %v1882
      %1884 = vdwg.mxu0
      %1885 = vmatpush.bf16.msra.mxu0 0
      %1886 = vmatpush.bf16.msra.mxu0 0
      %1887 = vmatpush.bf16.msra.mxu0 0
      %1888 = vmatpush.bf16.msra.mxu0 0
      %1889 = vmatpush.bf16.msra.mxu0 0
      %1890 = vmatpush.bf16.msra.mxu0 0
      %1891 = vmatpush.bf16.msra.mxu0 0
      %1892 = vmatpush.bf16.msra.mxu0 %v1864
      %1893 = vmatmul.bf16.gmra.mxu0 %v1855
      %v1894 = vpop.f32.mrf.mxu0
      %v1895 = vadd.f32 0.0, %v1894
      %v1896 = vpop.f32.mrf.mxu0
      %v1897 = vadd.f32 0.0, %v1896
      %1898 = vmatmul.bf16.gmra.mxu0 %v1858
      %v1899 = vpop.f32.mrf.mxu0
      %v1900 = vadd.f32 0.0, %v1899
      %v1901 = vpop.f32.mrf.mxu0
      %v1902 = vadd.f32 0.0, %v1901
      %1903 = vdwg.mxu0
      %v1904 = vadd.f32 %v1822, %v1876
      %v1905 = vadd.f32 %v1823, %v1895
      %v1906 = vadd.f32 %v1824, %v1878
      %v1907 = vadd.f32 %v1825, %v1897
      %v1908 = vadd.f32 %v1826, %v1881
      %v1909 = vadd.f32 %v1827, %v1900
      %v1910 = vadd.f32 %v1828, %v1883
      %v1911 = vadd.f32 %v1829, %v1902
      %1912 = vrot.lane.b32.xlu0 %v1358, 112
      %v1913 = vpop.permute.xlu0 %1912
      %1914 = vrot.lane.b32.xlu0 %v1359, 112
      %v1915 = vpop.permute.xlu0 %1914
      %v1916 = vsel %vm1052, %v1913, %v1915
      %v1917 = vsel %vm1052, %v1915, %v1913
      %s1918 = scalar_lea.vmem %s2, 14
      %v1919 = vld [vmem:[%s1918] sm:$0x3]
      %v1921 = vperm.slane %v1919, 0
      %v1922 = vperm.slane %v1919, 1
      %v1925 = vmul.f32 %v1916, %v1921
      %v1926 = vmul.f32 %v1917, %v1922
      %s1927 = scalar_lea.vmem %s9, 224
      %v1928 = vld [vmem:[%s1927] sm:$0xff]
      %v1929 = vld [vmem:[%s1927 + $0x8] sm:$0xff]
      %v1930 = vld [vmem:[%s1927 + $0x10] sm:$0xff]
      %v1931 = vld [vmem:[%s1927 + $0x18] sm:$0xff]
      %v1932 = vpack.c.bf16 %v1929, %v1928
      %v1933 = vpack.c.bf16 %v1931, %v1930
      %v1934 = vpack.c.bf16 %v1925, %v1925
      %v1935 = vpack.c.bf16 %v1926, %v1926
      %v1937 = vsel %vm1406, %v1932, 0
      %v1940 = vsel %vm1406, %v1933, 0
      %v1943 = vsel %vm1413, %v1934, 0
      %v1946 = vsel %vm1413, %v1935, 0
      %1948 = vmatpush.bf16.msra.mxu0 0
      %1949 = vmatpush.bf16.msra.mxu0 0
      %1950 = vmatpush.bf16.msra.mxu0 0
      %1951 = vmatpush.bf16.msra.mxu0 0
      %1952 = vmatpush.bf16.msra.mxu0 0
      %1953 = vmatpush.bf16.msra.mxu0 0
      %1954 = vmatpush.bf16.msra.mxu0 0
      %1955 = vmatpush.bf16.msra.mxu0 %v1943
      %1956 = vmatmul.bf16.gmra.mxu0 %v1937
      %v1957 = vpop.f32.mrf.mxu0
      %v1958 = vadd.f32 0.0, %v1957
      %v1959 = vpop.f32.mrf.mxu0
      %v1960 = vadd.f32 0.0, %v1959
      %1961 = vmatmul.bf16.gmra.mxu0 %v1940
      %v1962 = vpop.f32.mrf.mxu0
      %v1963 = vadd.f32 0.0, %v1962
      %v1964 = vpop.f32.mrf.mxu0
      %v1965 = vadd.f32 0.0, %v1964
      %1966 = vdwg.mxu0
      %1967 = vmatpush.bf16.msra.mxu0 0
      %1968 = vmatpush.bf16.msra.mxu0 0
      %1969 = vmatpush.bf16.msra.mxu0 0
      %1970 = vmatpush.bf16.msra.mxu0 0
      %1971 = vmatpush.bf16.msra.mxu0 0
      %1972 = vmatpush.bf16.msra.mxu0 0
      %1973 = vmatpush.bf16.msra.mxu0 0
      %1974 = vmatpush.bf16.msra.mxu0 %v1946
      %1975 = vmatmul.bf16.gmra.mxu0 %v1937
      %v1976 = vpop.f32.mrf.mxu0
      %v1977 = vadd.f32 0.0, %v1976
      %v1978 = vpop.f32.mrf.mxu0
      %v1979 = vadd.f32 0.0, %v1978
      %1980 = vmatmul.bf16.gmra.mxu0 %v1940
      %v1981 = vpop.f32.mrf.mxu0
      %v1982 = vadd.f32 0.0, %v1981
      %v1983 = vpop.f32.mrf.mxu0
      %v1984 = vadd.f32 0.0, %v1983
      %1985 = vdwg.mxu0
      %v1986 = vadd.f32 %v1904, %v1958
      %v1987 = vadd.f32 %v1905, %v1977
      %v1988 = vadd.f32 %v1906, %v1960
      %v1989 = vadd.f32 %v1907, %v1979
      %v1990 = vadd.f32 %v1908, %v1963
      %v1991 = vadd.f32 %v1909, %v1982
      %v1992 = vadd.f32 %v1910, %v1965
      %v1993 = vadd.f32 %v1911, %v1984
      %1994 = vrot.lane.b32.xlu0 %v1358, 111
      %v1995 = vpop.permute.xlu0 %1994
      %1996 = vrot.lane.b32.xlu0 %v1359, 111
      %v1997 = vpop.permute.xlu0 %1996
      %v1998 = vsel %vm1066, %v1995, %v1997
      %v1999 = vsel %vm1066, %v1997, %v1995
      %s2000 = scalar_lea.vmem %s2, 16
      %v2001 = vld [vmem:[%s2000] sm:$0x3]
      %v2003 = vperm.slane %v2001, 0
      %v2004 = vperm.slane %v2001, 1
      %v2007 = vmul.f32 %v1998, %v2003
      %v2008 = vmul.f32 %v1999, %v2004
      %s2009 = scalar_lea.vmem %s9, 256
      %v2010 = vld [vmem:[%s2009] sm:$0xff]
      %v2011 = vld [vmem:[%s2009 + $0x8] sm:$0xff]
      %v2012 = vld [vmem:[%s2009 + $0x10] sm:$0xff]
      %v2013 = vld [vmem:[%s2009 + $0x18] sm:$0xff]
      %v2014 = vpack.c.bf16 %v2011, %v2010
      %v2015 = vpack.c.bf16 %v2013, %v2012
      %v2016 = vpack.c.bf16 %v2007, %v2007
      %v2017 = vpack.c.bf16 %v2008, %v2008
      %v2019 = vsel %vm1406, %v2014, 0
      %v2022 = vsel %vm1406, %v2015, 0
      %v2025 = vsel %vm1413, %v2016, 0
      %v2028 = vsel %vm1413, %v2017, 0
      %2030 = vmatpush.bf16.msra.mxu0 0
      %2031 = vmatpush.bf16.msra.mxu0 0
      %2032 = vmatpush.bf16.msra.mxu0 0
      %2033 = vmatpush.bf16.msra.mxu0 0
      %2034 = vmatpush.bf16.msra.mxu0 0
      %2035 = vmatpush.bf16.msra.mxu0 0
      %2036 = vmatpush.bf16.msra.mxu0 0
      %2037 = vmatpush.bf16.msra.mxu0 %v2025
      %2038 = vmatmul.bf16.gmra.mxu0 %v2019
      %v2039 = vpop.f32.mrf.mxu0
      %v2040 = vadd.f32 0.0, %v2039
      %v2041 = vpop.f32.mrf.mxu0
      %v2042 = vadd.f32 0.0, %v2041
      %2043 = vmatmul.bf16.gmra.mxu0 %v2022
      %v2044 = vpop.f32.mrf.mxu0
      %v2045 = vadd.f32 0.0, %v2044
      %v2046 = vpop.f32.mrf.mxu0
      %v2047 = vadd.f32 0.0, %v2046
      %2048 = vdwg.mxu0
      %2049 = vmatpush.bf16.msra.mxu0 0
      %2050 = vmatpush.bf16.msra.mxu0 0
      %2051 = vmatpush.bf16.msra.mxu0 0
      %2052 = vmatpush.bf16.msra.mxu0 0
      %2053 = vmatpush.bf16.msra.mxu0 0
      %2054 = vmatpush.bf16.msra.mxu0 0
      %2055 = vmatpush.bf16.msra.mxu0 0
      %2056 = vmatpush.bf16.msra.mxu0 %v2028
      %2057 = vmatmul.bf16.gmra.mxu0 %v2019
      %v2058 = vpop.f32.mrf.mxu0
      %v2059 = vadd.f32 0.0, %v2058
      %v2060 = vpop.f32.mrf.mxu0
      %v2061 = vadd.f32 0.0, %v2060
      %2062 = vmatmul.bf16.gmra.mxu0 %v2022
      %v2063 = vpop.f32.mrf.mxu0
      %v2064 = vadd.f32 0.0, %v2063
      %v2065 = vpop.f32.mrf.mxu0
      %v2066 = vadd.f32 0.0, %v2065
      %2067 = vdwg.mxu0
      %v2068 = vadd.f32 %v1986, %v2040
      %v2069 = vadd.f32 %v1987, %v2059
      %v2070 = vadd.f32 %v1988, %v2042
      %v2071 = vadd.f32 %v1989, %v2061
      %v2072 = vadd.f32 %v1990, %v2045
      %v2073 = vadd.f32 %v1991, %v2064
      %v2074 = vadd.f32 %v1992, %v2047
      %v2075 = vadd.f32 %v1993, %v2066
      %v2076 = vld [vmem:[%s10] sm:$0xff]
      %v2077 = vld [vmem:[%s10 + $0x8] sm:$0xff]
      %v2078 = vld [vmem:[%s10 + $0x10] sm:$0xff]
      %v2079 = vld [vmem:[%s10 + $0x18] sm:$0xff]
      %2081 = vset.pattern.permute.xlu0 0
      %2082 = vperm.xlu0 %2081, %v2076
      %v2083 = vpop.permute.xlu0 %2082
      %2086 = vset.pattern.permute.xlu0 0
      %2087 = vperm.xlu0 %2086, %v2077
      %v2088 = vpop.permute.xlu0 %2087
      %2091 = vset.pattern.permute.xlu0 0
      %2092 = vperm.xlu0 %2091, %v2078
      %v2093 = vpop.permute.xlu0 %2092
      %2096 = vset.pattern.permute.xlu0 0
      %2097 = vperm.xlu0 %2096, %v2079
      %v2098 = vpop.permute.xlu0 %2097
      %v2100 = vadd.f32 %v2068, %v2083
      %v2101 = vadd.f32 %v2069, %v2083
      %v2102 = vadd.f32 %v2070, %v2088
      %v2103 = vadd.f32 %v2071, %v2088
      %v2104 = vadd.f32 %v2072, %v2093
      %v2105 = vadd.f32 %v2073, %v2093
      %v2106 = vadd.f32 %v2074, %v2098
      %v2107 = vadd.f32 %v2075, %v2098
      %v2108 = vmul.f32 %v2100, 0.5
      %v2109 = vmul.f32 %v2101, 0.5
      %v2110 = vmul.f32 %v2102, 0.5
      %v2111 = vmul.f32 %v2103, 0.5
      %v2112 = vmul.f32 %v2104, 0.5
      %v2113 = vmul.f32 %v2105, 0.5
      %v2114 = vmul.f32 %v2106, 0.5
      %v2115 = vmul.f32 %v2107, 0.5
      %v2116 = vmul.f32 %v2100, 0.70710677
      %v2117 = vmul.f32 %v2101, 0.70710677
      %v2118 = vmul.f32 %v2102, 0.70710677
      %v2119 = vmul.f32 %v2103, 0.70710677
      %v2120 = vmul.f32 %v2104, 0.70710677
      %v2121 = vmul.f32 %v2105, 0.70710677
      %v2122 = vmul.f32 %v2106, 0.70710677
      %v2123 = vmul.f32 %v2107, 0.70710677
      %v2124 = vand.u32 2147483647, %v2116
      %v2125 = vand.u32 2147483647, %v2117
      %v2126 = vand.u32 2147483647, %v2118
      %v2127 = vand.u32 2147483647, %v2119
      %v2128 = vand.u32 2147483647, %v2120
      %v2129 = vand.u32 2147483647, %v2121
      %v2130 = vand.u32 2147483647, %v2122
      %v2131 = vand.u32 2147483647, %v2123
      %v2132 = vmul.f32 %v2124, 0.3275911
      %v2133 = vmul.f32 %v2125, 0.3275911
      %v2134 = vmul.f32 %v2126, 0.3275911
      %v2135 = vmul.f32 %v2127, 0.3275911
      %v2136 = vmul.f32 %v2128, 0.3275911
      %v2137 = vmul.f32 %v2129, 0.3275911
      %v2138 = vmul.f32 %v2130, 0.3275911
      %v2139 = vmul.f32 %v2131, 0.3275911
      %v2140 = vadd.f32 %v2132, 1.0
      %v2141 = vadd.f32 %v2133, 1.0
      %v2142 = vadd.f32 %v2134, 1.0
      %v2143 = vadd.f32 %v2135, 1.0
      %v2144 = vadd.f32 %v2136, 1.0
      %v2145 = vadd.f32 %v2137, 1.0
      %v2146 = vadd.f32 %v2138, 1.0
      %v2147 = vadd.f32 %v2139, 1.0
      %v2148 = vrcp.pop %v2140
      %v2149 = vmul.f32 %v2140, %v2148
      %v2150 = vsub.f32 1.0, %v2149
      %v2151 = vmul.f32 %v2148, %v2150
      %v2152 = vadd.f32 %v2148, %v2151
      %vm2153 = vweird.f32 %v2140
      %vm2154 = vweird.f32 %v2148
      %vm2155 = vmor %vm2153, %vm2154
      %v2156 = vsel %vm2155, %v2148, %v2152
      %v2157 = vand.u32 2147483647, %v2140
      %vm2158 = vcmp.eq.f32.partialorder %v2157, 8.507059e+37
      %v2159 = vand.u32 %v2140, 2147483648
      %v2160 = vor.u32 1.1754944e-38, %v2159
      %v2161 = vsel %vm2158, %v2160, %v2156
      %v2162 = vmul.f32 1.0, %v2161
      %v2163 = vrcp.pop %v2141
      %v2164 = vmul.f32 %v2141, %v2163
      %v2165 = vsub.f32 1.0, %v2164
      %v2166 = vmul.f32 %v2163, %v2165
      %v2167 = vadd.f32 %v2163, %v2166
      %vm2168 = vweird.f32 %v2141
      %vm2169 = vweird.f32 %v2163
      %vm2170 = vmor %vm2168, %vm2169
      %v2171 = vsel %vm2170, %v2163, %v2167
      %v2172 = vand.u32 2147483647, %v2141
      %vm2173 = vcmp.eq.f32.partialorder %v2172, 8.507059e+37
      %v2174 = vand.u32 %v2141, 2147483648
      %v2175 = vor.u32 1.1754944e-38, %v2174
      %v2176 = vsel %vm2173, %v2175, %v2171
      %v2177 = vmul.f32 1.0, %v2176
      %v2178 = vrcp.pop %v2142
      %v2179 = vmul.f32 %v2142, %v2178
      %v2180 = vsub.f32 1.0, %v2179
      %v2181 = vmul.f32 %v2178, %v2180
      %v2182 = vadd.f32 %v2178, %v2181
      %vm2183 = vweird.f32 %v2142
      %vm2184 = vweird.f32 %v2178
      %vm2185 = vmor %vm2183, %vm2184
      %v2186 = vsel %vm2185, %v2178, %v2182
      %v2187 = vand.u32 2147483647, %v2142
      %vm2188 = vcmp.eq.f32.partialorder %v2187, 8.507059e+37
      %v2189 = vand.u32 %v2142, 2147483648
      %v2190 = vor.u32 1.1754944e-38, %v2189
      %v2191 = vsel %vm2188, %v2190, %v2186
      %v2192 = vmul.f32 1.0, %v2191
      %v2193 = vrcp.pop %v2143
      %v2194 = vmul.f32 %v2143, %v2193
      %v2195 = vsub.f32 1.0, %v2194
      %v2196 = vmul.f32 %v2193, %v2195
      %v2197 = vadd.f32 %v2193, %v2196
      %vm2198 = vweird.f32 %v2143
      %vm2199 = vweird.f32 %v2193
      %vm2200 = vmor %vm2198, %vm2199
      %v2201 = vsel %vm2200, %v2193, %v2197
      %v2202 = vand.u32 2147483647, %v2143
      %vm2203 = vcmp.eq.f32.partialorder %v2202, 8.507059e+37
      %v2204 = vand.u32 %v2143, 2147483648
      %v2205 = vor.u32 1.1754944e-38, %v2204
      %v2206 = vsel %vm2203, %v2205, %v2201
      %v2207 = vmul.f32 1.0, %v2206
      %v2208 = vrcp.pop %v2144
      %v2209 = vmul.f32 %v2144, %v2208
      %v2210 = vsub.f32 1.0, %v2209
      %v2211 = vmul.f32 %v2208, %v2210
      %v2212 = vadd.f32 %v2208, %v2211
      %vm2213 = vweird.f32 %v2144
      %vm2214 = vweird.f32 %v2208
      %vm2215 = vmor %vm2213, %vm2214
      %v2216 = vsel %vm2215, %v2208, %v2212
      %v2217 = vand.u32 2147483647, %v2144
      %vm2218 = vcmp.eq.f32.partialorder %v2217, 8.507059e+37
      %v2219 = vand.u32 %v2144, 2147483648
      %v2220 = vor.u32 1.1754944e-38, %v2219
      %v2221 = vsel %vm2218, %v2220, %v2216
      %v2222 = vmul.f32 1.0, %v2221
      %v2223 = vrcp.pop %v2145
      %v2224 = vmul.f32 %v2145, %v2223
      %v2225 = vsub.f32 1.0, %v2224
      %v2226 = vmul.f32 %v2223, %v2225
      %v2227 = vadd.f32 %v2223, %v2226
      %vm2228 = vweird.f32 %v2145
      %vm2229 = vweird.f32 %v2223
      %vm2230 = vmor %vm2228, %vm2229
      %v2231 = vsel %vm2230, %v2223, %v2227
      %v2232 = vand.u32 2147483647, %v2145
      %vm2233 = vcmp.eq.f32.partialorder %v2232, 8.507059e+37
      %v2234 = vand.u32 %v2145, 2147483648
      %v2235 = vor.u32 1.1754944e-38, %v2234
      %v2236 = vsel %vm2233, %v2235, %v2231
      %v2237 = vmul.f32 1.0, %v2236
      %v2238 = vrcp.pop %v2146
      %v2239 = vmul.f32 %v2146, %v2238
      %v2240 = vsub.f32 1.0, %v2239
      %v2241 = vmul.f32 %v2238, %v2240
      %v2242 = vadd.f32 %v2238, %v2241
      %vm2243 = vweird.f32 %v2146
      %vm2244 = vweird.f32 %v2238
      %vm2245 = vmor %vm2243, %vm2244
      %v2246 = vsel %vm2245, %v2238, %v2242
      %v2247 = vand.u32 2147483647, %v2146
      %vm2248 = vcmp.eq.f32.partialorder %v2247, 8.507059e+37
      %v2249 = vand.u32 %v2146, 2147483648
      %v2250 = vor.u32 1.1754944e-38, %v2249
      %v2251 = vsel %vm2248, %v2250, %v2246
      %v2252 = vmul.f32 1.0, %v2251
      %v2253 = vrcp.pop %v2147
      %v2254 = vmul.f32 %v2147, %v2253
      %v2255 = vsub.f32 1.0, %v2254
      %v2256 = vmul.f32 %v2253, %v2255
      %v2257 = vadd.f32 %v2253, %v2256
      %vm2258 = vweird.f32 %v2147
      %vm2259 = vweird.f32 %v2253
      %vm2260 = vmor %vm2258, %vm2259
      %v2261 = vsel %vm2260, %v2253, %v2257
      %v2262 = vand.u32 2147483647, %v2147
      %vm2263 = vcmp.eq.f32.partialorder %v2262, 8.507059e+37
      %v2264 = vand.u32 %v2147, 2147483648
      %v2265 = vor.u32 1.1754944e-38, %v2264
      %v2266 = vsel %vm2263, %v2265, %v2261
      %v2267 = vmul.f32 1.0, %v2266
      %v2268 = vmul.f32 %v2162, 1.0614054
      %v2269 = vmul.f32 %v2177, 1.0614054
      %v2270 = vmul.f32 %v2192, 1.0614054
      %v2271 = vmul.f32 %v2207, 1.0614054
      %v2272 = vmul.f32 %v2222, 1.0614054
      %v2273 = vmul.f32 %v2237, 1.0614054
      %v2274 = vmul.f32 %v2252, 1.0614054
      %v2275 = vmul.f32 %v2267, 1.0614054
      %v2276 = vadd.f32 %v2268, -1.4531521
      %v2277 = vadd.f32 %v2269, -1.4531521
      %v2278 = vadd.f32 %v2270, -1.4531521
      %v2279 = vadd.f32 %v2271, -1.4531521
      %v2280 = vadd.f32 %v2272, -1.4531521
      %v2281 = vadd.f32 %v2273, -1.4531521
      %v2282 = vadd.f32 %v2274, -1.4531521
      %v2283 = vadd.f32 %v2275, -1.4531521
      %v2284 = vmul.f32 %v2276, %v2162
      %v2285 = vmul.f32 %v2277, %v2177
      %v2286 = vmul.f32 %v2278, %v2192
      %v2287 = vmul.f32 %v2279, %v2207
      %v2288 = vmul.f32 %v2280, %v2222
      %v2289 = vmul.f32 %v2281, %v2237
      %v2290 = vmul.f32 %v2282, %v2252
      %v2291 = vmul.f32 %v2283, %v2267
      %v2292 = vadd.f32 %v2284, 1.4214138
      %v2293 = vadd.f32 %v2285, 1.4214138
      %v2294 = vadd.f32 %v2286, 1.4214138
      %v2295 = vadd.f32 %v2287, 1.4214138
      %v2296 = vadd.f32 %v2288, 1.4214138
      %v2297 = vadd.f32 %v2289, 1.4214138
      %v2298 = vadd.f32 %v2290, 1.4214138
      %v2299 = vadd.f32 %v2291, 1.4214138
      %v2300 = vmul.f32 %v2292, %v2162
      %v2301 = vmul.f32 %v2293, %v2177
      %v2302 = vmul.f32 %v2294, %v2192
      %v2303 = vmul.f32 %v2295, %v2207
      %v2304 = vmul.f32 %v2296, %v2222
      %v2305 = vmul.f32 %v2297, %v2237
      %v2306 = vmul.f32 %v2298, %v2252
      %v2307 = vmul.f32 %v2299, %v2267
      %v2308 = vadd.f32 %v2300, -0.28449672
      %v2309 = vadd.f32 %v2301, -0.28449672
      %v2310 = vadd.f32 %v2302, -0.28449672
      %v2311 = vadd.f32 %v2303, -0.28449672
      %v2312 = vadd.f32 %v2304, -0.28449672
      %v2313 = vadd.f32 %v2305, -0.28449672
      %v2314 = vadd.f32 %v2306, -0.28449672
      %v2315 = vadd.f32 %v2307, -0.28449672
      %v2316 = vmul.f32 %v2308, %v2162
      %v2317 = vmul.f32 %v2309, %v2177
      %v2318 = vmul.f32 %v2310, %v2192
      %v2319 = vmul.f32 %v2311, %v2207
      %v2320 = vmul.f32 %v2312, %v2222
      %v2321 = vmul.f32 %v2313, %v2237
      %v2322 = vmul.f32 %v2314, %v2252
      %v2323 = vmul.f32 %v2315, %v2267
      %v2324 = vadd.f32 %v2316, 0.2548296
      %v2325 = vadd.f32 %v2317, 0.2548296
      %v2326 = vadd.f32 %v2318, 0.2548296
      %v2327 = vadd.f32 %v2319, 0.2548296
      %v2328 = vadd.f32 %v2320, 0.2548296
      %v2329 = vadd.f32 %v2321, 0.2548296
      %v2330 = vadd.f32 %v2322, 0.2548296
      %v2331 = vadd.f32 %v2323, 0.2548296
      %v2332 = vmul.f32 %v2324, %v2162
      %v2333 = vmul.f32 %v2325, %v2177
      %v2334 = vmul.f32 %v2326, %v2192
      %v2335 = vmul.f32 %v2327, %v2207
      %v2336 = vmul.f32 %v2328, %v2222
      %v2337 = vmul.f32 %v2329, %v2237
      %v2338 = vmul.f32 %v2330, %v2252
      %v2339 = vmul.f32 %v2331, %v2267
      %v2340 = vsub.f32 0.0, %v2124
      %v2341 = vsub.f32 0.0, %v2125
      %v2342 = vsub.f32 0.0, %v2126
      %v2343 = vsub.f32 0.0, %v2127
      %v2344 = vsub.f32 0.0, %v2128
      %v2345 = vsub.f32 0.0, %v2129
      %v2346 = vsub.f32 0.0, %v2130
      %v2347 = vsub.f32 0.0, %v2131
      %v2348 = vmul.f32 %v2340, %v2124
      %v2349 = vmul.f32 %v2341, %v2125
      %v2350 = vmul.f32 %v2342, %v2126
      %v2351 = vmul.f32 %v2343, %v2127
      %v2352 = vmul.f32 %v2344, %v2128
      %v2353 = vmul.f32 %v2345, %v2129
      %v2354 = vmul.f32 %v2346, %v2130
      %v2355 = vmul.f32 %v2347, %v2131
      %v2356 = vmul.f32 %v2348, 1.442695
      %v2357 = vpow.pop %v2356
      %v2358 = vmul.f32 %v2349, 1.442695
      %v2359 = vpow.pop %v2358
      %v2360 = vmul.f32 %v2350, 1.442695
      %v2361 = vpow.pop %v2360
      %v2362 = vmul.f32 %v2351, 1.442695
      %v2363 = vpow.pop %v2362
      %v2364 = vmul.f32 %v2352, 1.442695
      %v2365 = vpow.pop %v2364
      %v2366 = vmul.f32 %v2353, 1.442695
      %v2367 = vpow.pop %v2366
      %v2368 = vmul.f32 %v2354, 1.442695
      %v2369 = vpow.pop %v2368
      %v2370 = vmul.f32 %v2355, 1.442695
      %v2371 = vpow.pop %v2370
      %v2372 = vmul.f32 %v2332, %v2357
      %v2373 = vmul.f32 %v2333, %v2359
      %v2374 = vmul.f32 %v2334, %v2361
      %v2375 = vmul.f32 %v2335, %v2363
      %v2376 = vmul.f32 %v2336, %v2365
      %v2377 = vmul.f32 %v2337, %v2367
      %v2378 = vmul.f32 %v2338, %v2369
      %v2379 = vmul.f32 %v2339, %v2371
      %v2380 = vsub.f32 1.0, %v2372
      %v2381 = vsub.f32 1.0, %v2373
      %v2382 = vsub.f32 1.0, %v2374
      %v2383 = vsub.f32 1.0, %v2375
      %v2384 = vsub.f32 1.0, %v2376
      %v2385 = vsub.f32 1.0, %v2377
      %v2386 = vsub.f32 1.0, %v2378
      %v2387 = vsub.f32 1.0, %v2379
      %vm2388 = vcmp.ge.f32.partialorder %v2116, 0.0
      %vm2389 = vcmp.ge.f32.partialorder %v2117, 0.0
      %vm2390 = vcmp.ge.f32.partialorder %v2118, 0.0
      %vm2391 = vcmp.ge.f32.partialorder %v2119, 0.0
      %vm2392 = vcmp.ge.f32.partialorder %v2120, 0.0
      %vm2393 = vcmp.ge.f32.partialorder %v2121, 0.0
      %vm2394 = vcmp.ge.f32.partialorder %v2122, 0.0
      %vm2395 = vcmp.ge.f32.partialorder %v2123, 0.0
      %v2396 = vsub.f32 0.0, %v2380
      %v2397 = vsub.f32 0.0, %v2381
      %v2398 = vsub.f32 0.0, %v2382
      %v2399 = vsub.f32 0.0, %v2383
      %v2400 = vsub.f32 0.0, %v2384
      %v2401 = vsub.f32 0.0, %v2385
      %v2402 = vsub.f32 0.0, %v2386
      %v2403 = vsub.f32 0.0, %v2387
      %v2404 = vsel %vm2388, %v2380, %v2396
      %v2405 = vsel %vm2389, %v2381, %v2397
      %v2406 = vsel %vm2390, %v2382, %v2398
      %v2407 = vsel %vm2391, %v2383, %v2399
      %v2408 = vsel %vm2392, %v2384, %v2400
      %v2409 = vsel %vm2393, %v2385, %v2401
      %v2410 = vsel %vm2394, %v2386, %v2402
      %v2411 = vsel %vm2395, %v2387, %v2403
      %v2412 = vadd.f32 %v2404, 1.0
      %v2413 = vadd.f32 %v2405, 1.0
      %v2414 = vadd.f32 %v2406, 1.0
      %v2415 = vadd.f32 %v2407, 1.0
      %v2416 = vadd.f32 %v2408, 1.0
      %v2417 = vadd.f32 %v2409, 1.0
      %v2418 = vadd.f32 %v2410, 1.0
      %v2419 = vadd.f32 %v2411, 1.0
      %v2420 = vmul.f32 %v2108, %v2412
      %v2421 = vmul.f32 %v2109, %v2413
      %v2422 = vmul.f32 %v2110, %v2414
      %v2423 = vmul.f32 %v2111, %v2415
      %v2424 = vmul.f32 %v2112, %v2416
      %v2425 = vmul.f32 %v2113, %v2417
      %v2426 = vmul.f32 %v2114, %v2418
      %v2427 = vmul.f32 %v2115, %v2419
      %v2428 = vld [vmem:[%s11] sm:$0xff]
      %v2429 = vld [vmem:[%s11 + $0x8] sm:$0xff]
      %v2430 = vld [vmem:[%s11 + $0x10] sm:$0xff]
      %v2431 = vld [vmem:[%s11 + $0x18] sm:$0xff]
      %v2432 = vld [vmem:[%s12] sm:$0xff]
      %v2433 = vld [vmem:[%s12 + $0x8] sm:$0xff]
      %v2434 = vld [vmem:[%s12 + $0x10] sm:$0xff]
      %v2435 = vld [vmem:[%s12 + $0x18] sm:$0xff]
      %v2436 = vadd.f32 %v2420, %v2421
      %2437 = vadd.xlane.f32.xlu0 %v2436
      %v2438 = vpop.xlane.xlu0 %2437
      %v2439 = vadd.f32 %v2422, %v2423
      %2440 = vadd.xlane.f32.xlu0 %v2439
      %v2441 = vpop.xlane.xlu0 %2440
      %v2442 = vadd.f32 %v2424, %v2425
      %2443 = vadd.xlane.f32.xlu0 %v2442
      %v2444 = vpop.xlane.xlu0 %2443
      %v2445 = vadd.f32 %v2426, %v2427
      %2446 = vadd.xlane.f32.xlu0 %v2445
      %v2447 = vpop.xlane.xlu0 %2446
      %v2448 = vadd.f32 %v2438, %v2441
      %v2449 = vadd.f32 %v2448, %v2444
      %v2450 = vadd.f32 %v2449, %v2447
      %v2451 = vrot.slane %v2450, 4
      %v2452 = vadd.f32 %v2450, %v2451
      %v2453 = vrot.slane %v2452, 2
      %v2454 = vadd.f32 %v2452, %v2453
      %v2455 = vrot.slane %v2454, 1
      %v2456 = vadd.f32 %v2454, %v2455
      %v2457 = vmul.f32 %v2456, 0.00012207031
      %v2458 = vsub.f32 %v2420, %v2457
      %v2459 = vsub.f32 %v2421, %v2457
      %v2460 = vsub.f32 %v2422, %v2457
      %v2461 = vsub.f32 %v2423, %v2457
      %v2462 = vsub.f32 %v2424, %v2457
      %v2463 = vsub.f32 %v2425, %v2457
      %v2464 = vsub.f32 %v2426, %v2457
      %v2465 = vsub.f32 %v2427, %v2457
      %v2466 = vmul.f32 %v2458, %v2458
      %v2467 = vmul.f32 %v2459, %v2459
      %v2468 = vmul.f32 %v2460, %v2460
      %v2469 = vmul.f32 %v2461, %v2461
      %v2470 = vmul.f32 %v2462, %v2462
      %v2471 = vmul.f32 %v2463, %v2463
      %v2472 = vmul.f32 %v2464, %v2464
      %v2473 = vmul.f32 %v2465, %v2465
      %v2474 = vadd.f32 %v2466, %v2467
      %2475 = vadd.xlane.f32.xlu0 %v2474
      %v2476 = vpop.xlane.xlu0 %2475
      %v2477 = vadd.f32 %v2468, %v2469
      %2478 = vadd.xlane.f32.xlu0 %v2477
      %v2479 = vpop.xlane.xlu0 %2478
      %v2480 = vadd.f32 %v2470, %v2471
      %2481 = vadd.xlane.f32.xlu0 %v2480
      %v2482 = vpop.xlane.xlu0 %2481
      %v2483 = vadd.f32 %v2472, %v2473
      %2484 = vadd.xlane.f32.xlu0 %v2483
      %v2485 = vpop.xlane.xlu0 %2484
      %v2486 = vadd.f32 %v2476, %v2479
      %v2487 = vadd.f32 %v2486, %v2482
      %v2488 = vadd.f32 %v2487, %v2485
      %v2489 = vrot.slane %v2488, 4
      %v2490 = vadd.f32 %v2488, %v2489
      %v2491 = vrot.slane %v2490, 2
      %v2492 = vadd.f32 %v2490, %v2491
      %v2493 = vrot.slane %v2492, 1
      %v2494 = vadd.f32 %v2492, %v2493
      %v2495 = vmul.f32 %v2494, 0.00012207031
      %v2496 = vadd.f32 %v2495, 1e-05
      %v2497 = vrsqrt.pop %v2496
      %v2498 = vmul.f32 %v2497, %v2496
      %v2499 = vmul.f32 %v2498, %v2497
      %v2500 = vmul.f32 0.5, %v2499
      %v2501 = vsub.f32 1.5, %v2500
      %v2502 = vmul.f32 %v2497, %v2501
      %vm2503 = vweird.f32 %v2496
      %vm2504 = vweird.f32 %v2497
      %vm2505 = vmor %vm2503, %vm2504
      %v2506 = vsel %vm2505, %v2497, %v2502
      %v2507 = vmul.f32 %v2458, %v2506
      %v2508 = vmul.f32 %v2459, %v2506
      %v2509 = vmul.f32 %v2460, %v2506
      %v2510 = vmul.f32 %v2461, %v2506
      %v2511 = vmul.f32 %v2462, %v2506
      %v2512 = vmul.f32 %v2463, %v2506
      %v2513 = vmul.f32 %v2464, %v2506
      %v2514 = vmul.f32 %v2465, %v2506
      %2516 = vset.pattern.permute.xlu0 0
      %2517 = vperm.xlu0 %2516, %v2428
      %v2518 = vpop.permute.xlu0 %2517
      %2521 = vset.pattern.permute.xlu0 0
      %2522 = vperm.xlu0 %2521, %v2429
      %v2523 = vpop.permute.xlu0 %2522
      %2526 = vset.pattern.permute.xlu0 0
      %2527 = vperm.xlu0 %2526, %v2430
      %v2528 = vpop.permute.xlu0 %2527
      %2531 = vset.pattern.permute.xlu0 0
      %2532 = vperm.xlu0 %2531, %v2431
      %v2533 = vpop.permute.xlu0 %2532
      %v2535 = vmul.f32 %v2507, %v2518
      %v2536 = vmul.f32 %v2508, %v2518
      %v2537 = vmul.f32 %v2509, %v2523
      %v2538 = vmul.f32 %v2510, %v2523
      %v2539 = vmul.f32 %v2511, %v2528
      %v2540 = vmul.f32 %v2512, %v2528
      %v2541 = vmul.f32 %v2513, %v2533
      %v2542 = vmul.f32 %v2514, %v2533
      %2544 = vset.pattern.permute.xlu0 0
      %2545 = vperm.xlu0 %2544, %v2432
      %v2546 = vpop.permute.xlu0 %2545
      %2549 = vset.pattern.permute.xlu0 0
      %2550 = vperm.xlu0 %2549, %v2433
      %v2551 = vpop.permute.xlu0 %2550
      %2554 = vset.pattern.permute.xlu0 0
      %2555 = vperm.xlu0 %2554, %v2434
      %v2556 = vpop.permute.xlu0 %2555
      %2559 = vset.pattern.permute.xlu0 0
      %2560 = vperm.xlu0 %2559, %v2435
      %v2561 = vpop.permute.xlu0 %2560
      %v2563 = vadd.f32 %v2535, %v2546
      %v2564 = vadd.f32 %v2536, %v2546
      %v2565 = vadd.f32 %v2537, %v2551
      %v2566 = vadd.f32 %v2538, %v2551
      %v2567 = vadd.f32 %v2539, %v2556
      %v2568 = vadd.f32 %v2540, %v2556
      %v2569 = vadd.f32 %v2541, %v2561
      %v2570 = vadd.f32 %v2542, %v2561
      %2571 = vrot.lane.b32.xlu0 %v2563, 17
      %v2572 = vpop.permute.xlu0 %2571
      %2573 = vrot.lane.b32.xlu0 %v2565, 17
      %v2574 = vpop.permute.xlu0 %2573
      %2575 = vrot.lane.b32.xlu0 %v2567, 17
      %v2576 = vpop.permute.xlu0 %2575
      %2577 = vrot.lane.b32.xlu0 %v2569, 17
      %v2578 = vpop.permute.xlu0 %2577
      %2579 = vrot.lane.b32.xlu0 %v2564, 17
      %v2580 = vpop.permute.xlu0 %2579
      %2581 = vrot.lane.b32.xlu0 %v2566, 17
      %v2582 = vpop.permute.xlu0 %2581
      %2583 = vrot.lane.b32.xlu0 %v2568, 17
      %v2584 = vpop.permute.xlu0 %2583
      %2585 = vrot.lane.b32.xlu0 %v2570, 17
      %v2586 = vpop.permute.xlu0 %2585
      %v2587 = vsel %vm849, %v2572, %v2580
      %v2588 = vsel %vm849, %v2574, %v2582
      %v2589 = vsel %vm849, %v2576, %v2584
      %v2590 = vsel %vm849, %v2578, %v2586
      %v2591 = vsel %vm849, %v2580, %v2572
      %v2592 = vsel %vm849, %v2582, %v2574
      %v2593 = vsel %vm849, %v2584, %v2576
      %v2594 = vsel %vm849, %v2586, %v2578
      %v2595 = vmul.f32 %v2591, %v1368
      %v2596 = vmul.f32 %v2587, %v1369
      %v2597 = vmul.f32 %v2592, %v1368
      %v2598 = vmul.f32 %v2588, %v1369
      %v2599 = vmul.f32 %v2593, %v1368
      %v2600 = vmul.f32 %v2589, %v1369
      %v2601 = vmul.f32 %v2594, %v1368
      %v2602 = vmul.f32 %v2590, %v1369
      %v2603 = vld [vmem:[%s13] sm:$0xff]
      %v2604 = vld [vmem:[%s13 + $0x8] sm:$0xff]
      %v2605 = vpack.c.bf16 %v2604, %v2603
      %v2606 = vpack.c.bf16 %v2597, %v2595
      %v2607 = vpack.c.bf16 %v2598, %v2596
      %v2608 = vpack.c.bf16 %v2601, %v2599
      %v2609 = vpack.c.bf16 %v2602, %v2600
      %2610 = vrot.lane.b32.xlu0 %v2563, 16
      %v2611 = vpop.permute.xlu0 %2610
      %2612 = vrot.lane.b32.xlu0 %v2565, 16
      %v2613 = vpop.permute.xlu0 %2612
      %2614 = vrot.lane.b32.xlu0 %v2567, 16
      %v2615 = vpop.permute.xlu0 %2614
      %2616 = vrot.lane.b32.xlu0 %v2569, 16
      %v2617 = vpop.permute.xlu0 %2616
      %2618 = vrot.lane.b32.xlu0 %v2564, 16
      %v2619 = vpop.permute.xlu0 %2618
      %2620 = vrot.lane.b32.xlu0 %v2566, 16
      %v2621 = vpop.permute.xlu0 %2620
      %2622 = vrot.lane.b32.xlu0 %v2568, 16
      %v2623 = vpop.permute.xlu0 %2622
      %2624 = vrot.lane.b32.xlu0 %v2570, 16
      %v2625 = vpop.permute.xlu0 %2624
      %v2626 = vsel %vm863, %v2611, %v2619
      %v2627 = vsel %vm863, %v2613, %v2621
      %v2628 = vsel %vm863, %v2615, %v2623
      %v2629 = vsel %vm863, %v2617, %v2625
      %v2630 = vsel %vm863, %v2619, %v2611
      %v2631 = vsel %vm863, %v2621, %v2613
      %v2632 = vsel %vm863, %v2623, %v2615
      %v2633 = vsel %vm863, %v2625, %v2617
      %v2634 = vmul.f32 %v2630, %v1391
      %v2635 = vmul.f32 %v2626, %v1392
      %v2636 = vmul.f32 %v2631, %v1391
      %v2637 = vmul.f32 %v2627, %v1392
      %v2638 = vmul.f32 %v2632, %v1391
      %v2639 = vmul.f32 %v2628, %v1392
      %v2640 = vmul.f32 %v2633, %v1391
      %v2641 = vmul.f32 %v2629, %v1392
      %s2642 = scalar_lea.vmem %s13, 16
      %v2643 = vld [vmem:[%s2642] sm:$0xff]
      %v2644 = vld [vmem:[%s2642 + $0x8] sm:$0xff]
      %v2645 = vpack.c.bf16 %v2644, %v2643
      %v2646 = vpack.c.bf16 %v2636, %v2634
      %v2647 = vpack.c.bf16 %v2637, %v2635
      %v2648 = vpack.c.bf16 %v2640, %v2638
      %v2649 = vpack.c.bf16 %v2641, %v2639
      %v2651 = vsel %vm613, %v2645, 0
      %2653 = vmatpush.bf16.msra.mxu0 0
      %2654 = vmatpush.bf16.msra.mxu0 0
      %2655 = vmatpush.bf16.msra.mxu0 0
      %2656 = vmatpush.bf16.msra.mxu0 0
      %2657 = vmatpush.bf16.msra.mxu0 0
      %2658 = vmatpush.bf16.msra.mxu0 0
      %2659 = vmatpush.bf16.msra.mxu0 %v2648
      %2660 = vmatpush.bf16.msra.mxu0 %v2646
      %2661 = vmatmul.bf16.gmra.mxu0 %v2651
      %v2662 = vpop.f32.mrf.mxu0
      %v2663 = vadd.f32 0.0, %v2662
      %v2664 = vpop.f32.mrf.mxu0
      %v2665 = vadd.f32 0.0, %v2664
      %2666 = vdwg.mxu0
      %2667 = vmatpush.bf16.msra.mxu0 0
      %2668 = vmatpush.bf16.msra.mxu0 0
      %2669 = vmatpush.bf16.msra.mxu0 0
      %2670 = vmatpush.bf16.msra.mxu0 0
      %2671 = vmatpush.bf16.msra.mxu0 0
      %2672 = vmatpush.bf16.msra.mxu0 0
      %2673 = vmatpush.bf16.msra.mxu0 %v2649
      %2674 = vmatpush.bf16.msra.mxu0 %v2647
      %2675 = vmatmul.bf16.gmra.mxu0 %v2651
      %v2676 = vpop.f32.mrf.mxu0
      %v2677 = vadd.f32 0.0, %v2676
      %v2678 = vpop.f32.mrf.mxu0
      %v2679 = vadd.f32 0.0, %v2678
      %2680 = vdwg.mxu0
      %v2682 = vsel %vm613, %v2605, 0
      %2684 = vmatpush.bf16.msra.mxu0 0
      %2685 = vmatpush.bf16.msra.mxu0 0
      %2686 = vmatpush.bf16.msra.mxu0 0
      %2687 = vmatpush.bf16.msra.mxu0 0
      %2688 = vmatpush.bf16.msra.mxu0 0
      %2689 = vmatpush.bf16.msra.mxu0 0
      %2690 = vmatpush.bf16.msra.mxu0 %v2608
      %2691 = vmatpush.bf16.msra.mxu0 %v2606
      %2692 = vmatmul.bf16.gmra.mxu0 %v2682
      %v2693 = vpop.f32.mrf.mxu0
      %v2694 = vadd.f32 %v2663, %v2693
      %v2695 = vpop.f32.mrf.mxu0
      %v2696 = vadd.f32 %v2665, %v2695
      %2697 = vdwg.mxu0
      %2698 = vmatpush.bf16.msra.mxu0 0
      %2699 = vmatpush.bf16.msra.mxu0 0
      %2700 = vmatpush.bf16.msra.mxu0 0
      %2701 = vmatpush.bf16.msra.mxu0 0
      %2702 = vmatpush.bf16.msra.mxu0 0
      %2703 = vmatpush.bf16.msra.mxu0 0
      %2704 = vmatpush.bf16.msra.mxu0 %v2609
      %2705 = vmatpush.bf16.msra.mxu0 %v2607
      %2706 = vmatmul.bf16.gmra.mxu0 %v2682
      %v2707 = vpop.f32.mrf.mxu0
      %v2708 = vadd.f32 %v2677, %v2707
      %v2709 = vpop.f32.mrf.mxu0
      %v2710 = vadd.f32 %v2679, %v2709
      %2711 = vdwg.mxu0
      %2712 = vrot.lane.b32.xlu0 %v2563, 15
      %v2713 = vpop.permute.xlu0 %2712
      %2714 = vrot.lane.b32.xlu0 %v2565, 15
      %v2715 = vpop.permute.xlu0 %2714
      %2716 = vrot.lane.b32.xlu0 %v2567, 15
      %v2717 = vpop.permute.xlu0 %2716
      %2718 = vrot.lane.b32.xlu0 %v2569, 15
      %v2719 = vpop.permute.xlu0 %2718
      %2720 = vrot.lane.b32.xlu0 %v2564, 15
      %v2721 = vpop.permute.xlu0 %2720
      %2722 = vrot.lane.b32.xlu0 %v2566, 15
      %v2723 = vpop.permute.xlu0 %2722
      %2724 = vrot.lane.b32.xlu0 %v2568, 15
      %v2725 = vpop.permute.xlu0 %2724
      %2726 = vrot.lane.b32.xlu0 %v2570, 15
      %v2727 = vpop.permute.xlu0 %2726
      %v2728 = vsel %vm877, %v2713, %v2721
      %v2729 = vsel %vm877, %v2715, %v2723
      %v2730 = vsel %vm877, %v2717, %v2725
      %v2731 = vsel %vm877, %v2719, %v2727
      %v2732 = vsel %vm877, %v2721, %v2713
      %v2733 = vsel %vm877, %v2723, %v2715
      %v2734 = vsel %vm877, %v2725, %v2717
      %v2735 = vsel %vm877, %v2727, %v2719
      %v2736 = vmul.f32 %v2732, %v1517
      %v2737 = vmul.f32 %v2728, %v1518
      %v2738 = vmul.f32 %v2733, %v1517
      %v2739 = vmul.f32 %v2729, %v1518
      %v2740 = vmul.f32 %v2734, %v1517
      %v2741 = vmul.f32 %v2730, %v1518
      %v2742 = vmul.f32 %v2735, %v1517
      %v2743 = vmul.f32 %v2731, %v1518
      %s2744 = scalar_lea.vmem %s13, 32
      %v2745 = vld [vmem:[%s2744] sm:$0xff]
      %v2746 = vld [vmem:[%s2744 + $0x8] sm:$0xff]
      %v2747 = vpack.c.bf16 %v2746, %v2745
      %v2748 = vpack.c.bf16 %v2738, %v2736
      %v2749 = vpack.c.bf16 %v2739, %v2737
      %v2750 = vpack.c.bf16 %v2742, %v2740
      %v2751 = vpack.c.bf16 %v2743, %v2741
      %v2753 = vsel %vm613, %v2747, 0
      %2755 = vmatpush.bf16.msra.mxu0 0
      %2756 = vmatpush.bf16.msra.mxu0 0
      %2757 = vmatpush.bf16.msra.mxu0 0
      %2758 = vmatpush.bf16.msra.mxu0 0
      %2759 = vmatpush.bf16.msra.mxu0 0
      %2760 = vmatpush.bf16.msra.mxu0 0
      %2761 = vmatpush.bf16.msra.mxu0 %v2750
      %2762 = vmatpush.bf16.msra.mxu0 %v2748
      %2763 = vmatmul.bf16.gmra.mxu0 %v2753
      %v2764 = vpop.f32.mrf.mxu0
      %v2765 = vadd.f32 0.0, %v2764
      %v2766 = vpop.f32.mrf.mxu0
      %v2767 = vadd.f32 0.0, %v2766
      %2768 = vdwg.mxu0
      %2769 = vmatpush.bf16.msra.mxu0 0
      %2770 = vmatpush.bf16.msra.mxu0 0
      %2771 = vmatpush.bf16.msra.mxu0 0
      %2772 = vmatpush.bf16.msra.mxu0 0
      %2773 = vmatpush.bf16.msra.mxu0 0
      %2774 = vmatpush.bf16.msra.mxu0 0
      %2775 = vmatpush.bf16.msra.mxu0 %v2751
      %2776 = vmatpush.bf16.msra.mxu0 %v2749
      %2777 = vmatmul.bf16.gmra.mxu0 %v2753
      %v2778 = vpop.f32.mrf.mxu0
      %v2779 = vadd.f32 0.0, %v2778
      %v2780 = vpop.f32.mrf.mxu0
      %v2781 = vadd.f32 0.0, %v2780
      %2782 = vdwg.mxu0
      %v2783 = vadd.f32 %v2694, %v2765
      %v2784 = vadd.f32 %v2708, %v2779
      %v2785 = vadd.f32 %v2696, %v2767
      %v2786 = vadd.f32 %v2710, %v2781
      %2787 = vrot.lane.b32.xlu0 %v2563, 1
      %v2788 = vpop.permute.xlu0 %2787
      %2789 = vrot.lane.b32.xlu0 %v2565, 1
      %v2790 = vpop.permute.xlu0 %2789
      %2791 = vrot.lane.b32.xlu0 %v2567, 1
      %v2792 = vpop.permute.xlu0 %2791
      %2793 = vrot.lane.b32.xlu0 %v2569, 1
      %v2794 = vpop.permute.xlu0 %2793
      %2795 = vrot.lane.b32.xlu0 %v2564, 1
      %v2796 = vpop.permute.xlu0 %2795
      %2797 = vrot.lane.b32.xlu0 %v2566, 1
      %v2798 = vpop.permute.xlu0 %2797
      %2799 = vrot.lane.b32.xlu0 %v2568, 1
      %v2800 = vpop.permute.xlu0 %2799
      %2801 = vrot.lane.b32.xlu0 %v2570, 1
      %v2802 = vpop.permute.xlu0 %2801
      %v2803 = vsel %vm947, %v2788, %v2796
      %v2804 = vsel %vm947, %v2790, %v2798
      %v2805 = vsel %vm947, %v2792, %v2800
      %v2806 = vsel %vm947, %v2794, %v2802
      %v2807 = vsel %vm947, %v2796, %v2788
      %v2808 = vsel %vm947, %v2798, %v2790
      %v2809 = vsel %vm947, %v2800, %v2792
      %v2810 = vsel %vm947, %v2802, %v2794
      %v2811 = vmul.f32 %v2807, %v1599
      %v2812 = vmul.f32 %v2803, %v1600
      %v2813 = vmul.f32 %v2808, %v1599
      %v2814 = vmul.f32 %v2804, %v1600
      %v2815 = vmul.f32 %v2809, %v1599
      %v2816 = vmul.f32 %v2805, %v1600
      %v2817 = vmul.f32 %v2810, %v1599
      %v2818 = vmul.f32 %v2806, %v1600
      %s2819 = scalar_lea.vmem %s13, 48
      %v2820 = vld [vmem:[%s2819] sm:$0xff]
      %v2821 = vld [vmem:[%s2819 + $0x8] sm:$0xff]
      %v2822 = vpack.c.bf16 %v2821, %v2820
      %v2823 = vpack.c.bf16 %v2813, %v2811
      %v2824 = vpack.c.bf16 %v2814, %v2812
      %v2825 = vpack.c.bf16 %v2817, %v2815
      %v2826 = vpack.c.bf16 %v2818, %v2816
      %v2828 = vsel %vm613, %v2822, 0
      %2830 = vmatpush.bf16.msra.mxu0 0
      %2831 = vmatpush.bf16.msra.mxu0 0
      %2832 = vmatpush.bf16.msra.mxu0 0
      %2833 = vmatpush.bf16.msra.mxu0 0
      %2834 = vmatpush.bf16.msra.mxu0 0
      %2835 = vmatpush.bf16.msra.mxu0 0
      %2836 = vmatpush.bf16.msra.mxu0 %v2825
      %2837 = vmatpush.bf16.msra.mxu0 %v2823
      %2838 = vmatmul.bf16.gmra.mxu0 %v2828
      %v2839 = vpop.f32.mrf.mxu0
      %v2840 = vadd.f32 0.0, %v2839
      %v2841 = vpop.f32.mrf.mxu0
      %v2842 = vadd.f32 0.0, %v2841
      %2843 = vdwg.mxu0
      %2844 = vmatpush.bf16.msra.mxu0 0
      %2845 = vmatpush.bf16.msra.mxu0 0
      %2846 = vmatpush.bf16.msra.mxu0 0
      %2847 = vmatpush.bf16.msra.mxu0 0
      %2848 = vmatpush.bf16.msra.mxu0 0
      %2849 = vmatpush.bf16.msra.mxu0 0
      %2850 = vmatpush.bf16.msra.mxu0 %v2826
      %2851 = vmatpush.bf16.msra.mxu0 %v2824
      %2852 = vmatmul.bf16.gmra.mxu0 %v2828
      %v2853 = vpop.f32.mrf.mxu0
      %v2854 = vadd.f32 0.0, %v2853
      %v2855 = vpop.f32.mrf.mxu0
      %v2856 = vadd.f32 0.0, %v2855
      %2857 = vdwg.mxu0
      %v2858 = vadd.f32 %v2783, %v2840
      %v2859 = vadd.f32 %v2784, %v2854
      %v2860 = vadd.f32 %v2785, %v2842
      %v2861 = vadd.f32 %v2786, %v2856
      %v2862 = vmul.f32 %v2563, %v1675
      %v2863 = vmul.f32 %v2564, %v1676
      %v2864 = vmul.f32 %v2565, %v1675
      %v2865 = vmul.f32 %v2566, %v1676
      %v2866 = vmul.f32 %v2567, %v1675
      %v2867 = vmul.f32 %v2568, %v1676
      %v2868 = vmul.f32 %v2569, %v1675
      %v2869 = vmul.f32 %v2570, %v1676
      %s2870 = scalar_lea.vmem %s13, 64
      %v2871 = vld [vmem:[%s2870] sm:$0xff]
      %v2872 = vld [vmem:[%s2870 + $0x8] sm:$0xff]
      %v2873 = vpack.c.bf16 %v2872, %v2871
      %v2874 = vpack.c.bf16 %v2864, %v2862
      %v2875 = vpack.c.bf16 %v2865, %v2863
      %v2876 = vpack.c.bf16 %v2868, %v2866
      %v2877 = vpack.c.bf16 %v2869, %v2867
      %v2879 = vsel %vm613, %v2873, 0
      %2881 = vmatpush.bf16.msra.mxu0 0
      %2882 = vmatpush.bf16.msra.mxu0 0
      %2883 = vmatpush.bf16.msra.mxu0 0
      %2884 = vmatpush.bf16.msra.mxu0 0
      %2885 = vmatpush.bf16.msra.mxu0 0
      %2886 = vmatpush.bf16.msra.mxu0 0
      %2887 = vmatpush.bf16.msra.mxu0 %v2876
      %2888 = vmatpush.bf16.msra.mxu0 %v2874
      %2889 = vmatmul.bf16.gmra.mxu0 %v2879
      %v2890 = vpop.f32.mrf.mxu0
      %v2891 = vadd.f32 0.0, %v2890
      %v2892 = vpop.f32.mrf.mxu0
      %v2893 = vadd.f32 0.0, %v2892
      %2894 = vdwg.mxu0
      %2895 = vmatpush.bf16.msra.mxu0 0
      %2896 = vmatpush.bf16.msra.mxu0 0
      %2897 = vmatpush.bf16.msra.mxu0 0
      %2898 = vmatpush.bf16.msra.mxu0 0
      %2899 = vmatpush.bf16.msra.mxu0 0
      %2900 = vmatpush.bf16.msra.mxu0 0
      %2901 = vmatpush.bf16.msra.mxu0 %v2877
      %2902 = vmatpush.bf16.msra.mxu0 %v2875
      %2903 = vmatmul.bf16.gmra.mxu0 %v2879
      %v2904 = vpop.f32.mrf.mxu0
      %v2905 = vadd.f32 0.0, %v2904
      %v2906 = vpop.f32.mrf.mxu0
      %v2907 = vadd.f32 0.0, %v2906
      %2908 = vdwg.mxu0
      %v2909 = vadd.f32 %v2858, %v2891
      %v2910 = vadd.f32 %v2859, %v2905
      %v2911 = vadd.f32 %v2860, %v2893
      %v2912 = vadd.f32 %v2861, %v2907
      %2913 = vrot.lane.b32.xlu0 %v2563, 127
      %v2914 = vpop.permute.xlu0 %2913
      %2915 = vrot.lane.b32.xlu0 %v2565, 127
      %v2916 = vpop.permute.xlu0 %2915
      %2917 = vrot.lane.b32.xlu0 %v2567, 127
      %v2918 = vpop.permute.xlu0 %2917
      %2919 = vrot.lane.b32.xlu0 %v2569, 127
      %v2920 = vpop.permute.xlu0 %2919
      %2921 = vrot.lane.b32.xlu0 %v2564, 127
      %v2922 = vpop.permute.xlu0 %2921
      %2923 = vrot.lane.b32.xlu0 %v2566, 127
      %v2924 = vpop.permute.xlu0 %2923
      %2925 = vrot.lane.b32.xlu0 %v2568, 127
      %v2926 = vpop.permute.xlu0 %2925
      %2927 = vrot.lane.b32.xlu0 %v2570, 127
      %v2928 = vpop.permute.xlu0 %2927
      %v2929 = vsel %vm968, %v2914, %v2922
      %v2930 = vsel %vm968, %v2916, %v2924
      %v2931 = vsel %vm968, %v2918, %v2926
      %v2932 = vsel %vm968, %v2920, %v2928
      %v2933 = vsel %vm968, %v2922, %v2914
      %v2934 = vsel %vm968, %v2924, %v2916
      %v2935 = vsel %vm968, %v2926, %v2918
      %v2936 = vsel %vm968, %v2928, %v2920
      %v2937 = vmul.f32 %v2929, %v1757
      %v2938 = vmul.f32 %v2933, %v1758
      %v2939 = vmul.f32 %v2930, %v1757
      %v2940 = vmul.f32 %v2934, %v1758
      %v2941 = vmul.f32 %v2931, %v1757
      %v2942 = vmul.f32 %v2935, %v1758
      %v2943 = vmul.f32 %v2932, %v1757
      %v2944 = vmul.f32 %v2936, %v1758
      %s2945 = scalar_lea.vmem %s13, 80
      %v2946 = vld [vmem:[%s2945] sm:$0xff]
      %v2947 = vld [vmem:[%s2945 + $0x8] sm:$0xff]
      %v2948 = vpack.c.bf16 %v2947, %v2946
      %v2949 = vpack.c.bf16 %v2939, %v2937
      %v2950 = vpack.c.bf16 %v2940, %v2938
      %v2951 = vpack.c.bf16 %v2943, %v2941
      %v2952 = vpack.c.bf16 %v2944, %v2942
      %v2954 = vsel %vm613, %v2948, 0
      %2956 = vmatpush.bf16.msra.mxu0 0
      %2957 = vmatpush.bf16.msra.mxu0 0
      %2958 = vmatpush.bf16.msra.mxu0 0
      %2959 = vmatpush.bf16.msra.mxu0 0
      %2960 = vmatpush.bf16.msra.mxu0 0
      %2961 = vmatpush.bf16.msra.mxu0 0
      %2962 = vmatpush.bf16.msra.mxu0 %v2951
      %2963 = vmatpush.bf16.msra.mxu0 %v2949
      %2964 = vmatmul.bf16.gmra.mxu0 %v2954
      %v2965 = vpop.f32.mrf.mxu0
      %v2966 = vadd.f32 0.0, %v2965
      %v2967 = vpop.f32.mrf.mxu0
      %v2968 = vadd.f32 0.0, %v2967
      %2969 = vdwg.mxu0
      %2970 = vmatpush.bf16.msra.mxu0 0
      %2971 = vmatpush.bf16.msra.mxu0 0
      %2972 = vmatpush.bf16.msra.mxu0 0
      %2973 = vmatpush.bf16.msra.mxu0 0
      %2974 = vmatpush.bf16.msra.mxu0 0
      %2975 = vmatpush.bf16.msra.mxu0 0
      %2976 = vmatpush.bf16.msra.mxu0 %v2952
      %2977 = vmatpush.bf16.msra.mxu0 %v2950
      %2978 = vmatmul.bf16.gmra.mxu0 %v2954
      %v2979 = vpop.f32.mrf.mxu0
      %v2980 = vadd.f32 0.0, %v2979
      %v2981 = vpop.f32.mrf.mxu0
      %v2982 = vadd.f32 0.0, %v2981
      %2983 = vdwg.mxu0
      %v2984 = vadd.f32 %v2909, %v2966
      %v2985 = vadd.f32 %v2910, %v2980
      %v2986 = vadd.f32 %v2911, %v2968
      %v2987 = vadd.f32 %v2912, %v2982
      %2988 = vrot.lane.b32.xlu0 %v2563, 113
      %v2989 = vpop.permute.xlu0 %2988
      %2990 = vrot.lane.b32.xlu0 %v2565, 113
      %v2991 = vpop.permute.xlu0 %2990
      %2992 = vrot.lane.b32.xlu0 %v2567, 113
      %v2993 = vpop.permute.xlu0 %2992
      %2994 = vrot.lane.b32.xlu0 %v2569, 113
      %v2995 = vpop.permute.xlu0 %2994
      %2996 = vrot.lane.b32.xlu0 %v2564, 113
      %v2997 = vpop.permute.xlu0 %2996
      %2998 = vrot.lane.b32.xlu0 %v2566, 113
      %v2999 = vpop.permute.xlu0 %2998
      %3000 = vrot.lane.b32.xlu0 %v2568, 113
      %v3001 = vpop.permute.xlu0 %3000
      %3002 = vrot.lane.b32.xlu0 %v2570, 113
      %v3003 = vpop.permute.xlu0 %3002
      %v3004 = vsel %vm1038, %v2989, %v2997
      %v3005 = vsel %vm1038, %v2991, %v2999
      %v3006 = vsel %vm1038, %v2993, %v3001
      %v3007 = vsel %vm1038, %v2995, %v3003
      %v3008 = vsel %vm1038, %v2997, %v2989
      %v3009 = vsel %vm1038, %v2999, %v2991
      %v3010 = vsel %vm1038, %v3001, %v2993
      %v3011 = vsel %vm1038, %v3003, %v2995
      %v3012 = vmul.f32 %v3004, %v1839
      %v3013 = vmul.f32 %v3008, %v1840
      %v3014 = vmul.f32 %v3005, %v1839
      %v3015 = vmul.f32 %v3009, %v1840
      %v3016 = vmul.f32 %v3006, %v1839
      %v3017 = vmul.f32 %v3010, %v1840
      %v3018 = vmul.f32 %v3007, %v1839
      %v3019 = vmul.f32 %v3011, %v1840
      %s3020 = scalar_lea.vmem %s13, 96
      %v3021 = vld [vmem:[%s3020] sm:$0xff]
      %v3022 = vld [vmem:[%s3020 + $0x8] sm:$0xff]
      %v3023 = vpack.c.bf16 %v3022, %v3021
      %v3024 = vpack.c.bf16 %v3014, %v3012
      %v3025 = vpack.c.bf16 %v3015, %v3013
      %v3026 = vpack.c.bf16 %v3018, %v3016
      %v3027 = vpack.c.bf16 %v3019, %v3017
      %v3029 = vsel %vm613, %v3023, 0
      %3031 = vmatpush.bf16.msra.mxu0 0
      %3032 = vmatpush.bf16.msra.mxu0 0
      %3033 = vmatpush.bf16.msra.mxu0 0
      %3034 = vmatpush.bf16.msra.mxu0 0
      %3035 = vmatpush.bf16.msra.mxu0 0
      %3036 = vmatpush.bf16.msra.mxu0 0
      %3037 = vmatpush.bf16.msra.mxu0 %v3026
      %3038 = vmatpush.bf16.msra.mxu0 %v3024
      %3039 = vmatmul.bf16.gmra.mxu0 %v3029
      %v3040 = vpop.f32.mrf.mxu0
      %v3041 = vadd.f32 0.0, %v3040
      %v3042 = vpop.f32.mrf.mxu0
      %v3043 = vadd.f32 0.0, %v3042
      %3044 = vdwg.mxu0
      %3045 = vmatpush.bf16.msra.mxu0 0
      %3046 = vmatpush.bf16.msra.mxu0 0
      %3047 = vmatpush.bf16.msra.mxu0 0
      %3048 = vmatpush.bf16.msra.mxu0 0
      %3049 = vmatpush.bf16.msra.mxu0 0
      %3050 = vmatpush.bf16.msra.mxu0 0
      %3051 = vmatpush.bf16.msra.mxu0 %v3027
      %3052 = vmatpush.bf16.msra.mxu0 %v3025
      %3053 = vmatmul.bf16.gmra.mxu0 %v3029
      %v3054 = vpop.f32.mrf.mxu0
      %v3055 = vadd.f32 0.0, %v3054
      %v3056 = vpop.f32.mrf.mxu0
      %v3057 = vadd.f32 0.0, %v3056
      %3058 = vdwg.mxu0
      %v3059 = vadd.f32 %v2984, %v3041
      %v3060 = vadd.f32 %v2985, %v3055
      %v3061 = vadd.f32 %v2986, %v3043
      %v3062 = vadd.f32 %v2987, %v3057
      %3063 = vrot.lane.b32.xlu0 %v2563, 112
      %v3064 = vpop.permute.xlu0 %3063
      %3065 = vrot.lane.b32.xlu0 %v2565, 112
      %v3066 = vpop.permute.xlu0 %3065
      %3067 = vrot.lane.b32.xlu0 %v2567, 112
      %v3068 = vpop.permute.xlu0 %3067
      %3069 = vrot.lane.b32.xlu0 %v2569, 112
      %v3070 = vpop.permute.xlu0 %3069
      %3071 = vrot.lane.b32.xlu0 %v2564, 112
      %v3072 = vpop.permute.xlu0 %3071
      %3073 = vrot.lane.b32.xlu0 %v2566, 112
      %v3074 = vpop.permute.xlu0 %3073
      %3075 = vrot.lane.b32.xlu0 %v2568, 112
      %v3076 = vpop.permute.xlu0 %3075
      %3077 = vrot.lane.b32.xlu0 %v2570, 112
      %v3078 = vpop.permute.xlu0 %3077
      %v3079 = vsel %vm1052, %v3064, %v3072
      %v3080 = vsel %vm1052, %v3066, %v3074
      %v3081 = vsel %vm1052, %v3068, %v3076
      %v3082 = vsel %vm1052, %v3070, %v3078
      %v3083 = vsel %vm1052, %v3072, %v3064
      %v3084 = vsel %vm1052, %v3074, %v3066
      %v3085 = vsel %vm1052, %v3076, %v3068
      %v3086 = vsel %vm1052, %v3078, %v3070
      %v3087 = vmul.f32 %v3079, %v1921
      %v3088 = vmul.f32 %v3083, %v1922
      %v3089 = vmul.f32 %v3080, %v1921
      %v3090 = vmul.f32 %v3084, %v1922
      %v3091 = vmul.f32 %v3081, %v1921
      %v3092 = vmul.f32 %v3085, %v1922
      %v3093 = vmul.f32 %v3082, %v1921
      %v3094 = vmul.f32 %v3086, %v1922
      %s3095 = scalar_lea.vmem %s13, 112
      %v3096 = vld [vmem:[%s3095] sm:$0xff]
      %v3097 = vld [vmem:[%s3095 + $0x8] sm:$0xff]
      %v3098 = vpack.c.bf16 %v3097, %v3096
      %v3099 = vpack.c.bf16 %v3089, %v3087
      %v3100 = vpack.c.bf16 %v3090, %v3088
      %v3101 = vpack.c.bf16 %v3093, %v3091
      %v3102 = vpack.c.bf16 %v3094, %v3092
      %v3104 = vsel %vm613, %v3098, 0
      %3106 = vmatpush.bf16.msra.mxu0 0
      %3107 = vmatpush.bf16.msra.mxu0 0
      %3108 = vmatpush.bf16.msra.mxu0 0
      %3109 = vmatpush.bf16.msra.mxu0 0
      %3110 = vmatpush.bf16.msra.mxu0 0
      %3111 = vmatpush.bf16.msra.mxu0 0
      %3112 = vmatpush.bf16.msra.mxu0 %v3101
      %3113 = vmatpush.bf16.msra.mxu0 %v3099
      %3114 = vmatmul.bf16.gmra.mxu0 %v3104
      %v3115 = vpop.f32.mrf.mxu0
      %v3116 = vadd.f32 0.0, %v3115
      %v3117 = vpop.f32.mrf.mxu0
      %v3118 = vadd.f32 0.0, %v3117
      %3119 = vdwg.mxu0
      %3120 = vmatpush.bf16.msra.mxu0 0
      %3121 = vmatpush.bf16.msra.mxu0 0
      %3122 = vmatpush.bf16.msra.mxu0 0
      %3123 = vmatpush.bf16.msra.mxu0 0
      %3124 = vmatpush.bf16.msra.mxu0 0
      %3125 = vmatpush.bf16.msra.mxu0 0
      %3126 = vmatpush.bf16.msra.mxu0 %v3102
      %3127 = vmatpush.bf16.msra.mxu0 %v3100
      %3128 = vmatmul.bf16.gmra.mxu0 %v3104
      %v3129 = vpop.f32.mrf.mxu0
      %v3130 = vadd.f32 0.0, %v3129
      %v3131 = vpop.f32.mrf.mxu0
      %v3132 = vadd.f32 0.0, %v3131
      %3133 = vdwg.mxu0
      %v3134 = vadd.f32 %v3059, %v3116
      %v3135 = vadd.f32 %v3060, %v3130
      %v3136 = vadd.f32 %v3061, %v3118
      %v3137 = vadd.f32 %v3062, %v3132
      %3138 = vrot.lane.b32.xlu0 %v2563, 111
      %v3139 = vpop.permute.xlu0 %3138
      %3140 = vrot.lane.b32.xlu0 %v2565, 111
      %v3141 = vpop.permute.xlu0 %3140
      %3142 = vrot.lane.b32.xlu0 %v2567, 111
      %v3143 = vpop.permute.xlu0 %3142
      %3144 = vrot.lane.b32.xlu0 %v2569, 111
      %v3145 = vpop.permute.xlu0 %3144
      %3146 = vrot.lane.b32.xlu0 %v2564, 111
      %v3147 = vpop.permute.xlu0 %3146
      %3148 = vrot.lane.b32.xlu0 %v2566, 111
      %v3149 = vpop.permute.xlu0 %3148
      %3150 = vrot.lane.b32.xlu0 %v2568, 111
      %v3151 = vpop.permute.xlu0 %3150
      %3152 = vrot.lane.b32.xlu0 %v2570, 111
      %v3153 = vpop.permute.xlu0 %3152
      %v3154 = vsel %vm1066, %v3139, %v3147
      %v3155 = vsel %vm1066, %v3141, %v3149
      %v3156 = vsel %vm1066, %v3143, %v3151
      %v3157 = vsel %vm1066, %v3145, %v3153
      %v3158 = vsel %vm1066, %v3147, %v3139
      %v3159 = vsel %vm1066, %v3149, %v3141
      %v3160 = vsel %vm1066, %v3151, %v3143
      %v3161 = vsel %vm1066, %v3153, %v3145
      %v3162 = vmul.f32 %v3154, %v2003
      %v3163 = vmul.f32 %v3158, %v2004
      %v3164 = vmul.f32 %v3155, %v2003
      %v3165 = vmul.f32 %v3159, %v2004
      %v3166 = vmul.f32 %v3156, %v2003
      %v3167 = vmul.f32 %v3160, %v2004
      %v3168 = vmul.f32 %v3157, %v2003
      %v3169 = vmul.f32 %v3161, %v2004
      %s3170 = scalar_lea.vmem %s13, 128
      %v3171 = vld [vmem:[%s3170] sm:$0xff]
      %v3172 = vld [vmem:[%s3170 + $0x8] sm:$0xff]
      %v3173 = vpack.c.bf16 %v3172, %v3171
      %v3174 = vpack.c.bf16 %v3164, %v3162
      %v3175 = vpack.c.bf16 %v3165, %v3163
      %v3176 = vpack.c.bf16 %v3168, %v3166
      %v3177 = vpack.c.bf16 %v3169, %v3167
      %v3179 = vsel %vm613, %v3173, 0
      %3181 = vmatpush.bf16.msra.mxu0 0
      %3182 = vmatpush.bf16.msra.mxu0 0
      %3183 = vmatpush.bf16.msra.mxu0 0
      %3184 = vmatpush.bf16.msra.mxu0 0
      %3185 = vmatpush.bf16.msra.mxu0 0
      %3186 = vmatpush.bf16.msra.mxu0 0
      %3187 = vmatpush.bf16.msra.mxu0 %v3176
      %3188 = vmatpush.bf16.msra.mxu0 %v3174
      %3189 = vmatmul.bf16.gmra.mxu0 %v3179
      %v3190 = vpop.f32.mrf.mxu0
      %v3191 = vadd.f32 0.0, %v3190
      %v3192 = vpop.f32.mrf.mxu0
      %v3193 = vadd.f32 0.0, %v3192
      %3194 = vdwg.mxu0
      %3195 = vmatpush.bf16.msra.mxu0 0
      %3196 = vmatpush.bf16.msra.mxu0 0
      %3197 = vmatpush.bf16.msra.mxu0 0
      %3198 = vmatpush.bf16.msra.mxu0 0
      %3199 = vmatpush.bf16.msra.mxu0 0
      %3200 = vmatpush.bf16.msra.mxu0 0
      %3201 = vmatpush.bf16.msra.mxu0 %v3177
      %3202 = vmatpush.bf16.msra.mxu0 %v3175
      %3203 = vmatmul.bf16.gmra.mxu0 %v3179
      %v3204 = vpop.f32.mrf.mxu0
      %v3205 = vadd.f32 0.0, %v3204
      %v3206 = vpop.f32.mrf.mxu0
      %v3207 = vadd.f32 0.0, %v3206
      %3208 = vdwg.mxu0
      %v3209 = vadd.f32 %v3134, %v3191
      %v3210 = vadd.f32 %v3135, %v3205
      %v3211 = vadd.f32 %v3136, %v3193
      %v3212 = vadd.f32 %v3137, %v3207
      %v3213 = vld [vmem:[%s14] sm:$0xff]
      %v3214 = vld [vmem:[%s14 + $0x8] sm:$0xff]
      %3216 = vset.pattern.permute.xlu0 0
      %3217 = vperm.xlu0 %3216, %v3213
      %v3218 = vpop.permute.xlu0 %3217
      %3221 = vset.pattern.permute.xlu0 0
      %3222 = vperm.xlu0 %3221, %v3214
      %v3223 = vpop.permute.xlu0 %3222
      %v3225 = vadd.f32 %v3209, %v3218
      %v3226 = vadd.f32 %v3210, %v3218
      %v3227 = vadd.f32 %v3211, %v3223
      %v3228 = vadd.f32 %v3212, %v3223
      %v3229 = vld [vmem:[%s15] sm:$0xff]
      %v3230 = vld [vmem:[%s15 + $0x8] sm:$0xff]
      %v3231 = vpack.c.bf16 %v3230, %v3229
      %v3232 = vpack.c.bf16 %v564, %v564
      %v3233 = vpack.c.bf16 %v565, %v565
      %v3234 = vld [vmem:[%s16] sm:$0xff]
      %v3235 = vld [vmem:[%s16 + $0x8] sm:$0xff]
      %3237 = vset.pattern.permute.xlu0 0
      %3238 = vperm.xlu0 %3237, %v3234
      %v3239 = vpop.permute.xlu0 %3238
      %3242 = vset.pattern.permute.xlu0 0
      %3243 = vperm.xlu0 %3242, %v3235
      %v3244 = vpop.permute.xlu0 %3243
      %v3247 = vsel %vm1406, %v3231, 0
      %v3250 = vsel %vm1413, %v3232, 0
      %v3253 = vsel %vm1413, %v3233, 0
      %3255 = vmatpush.bf16.msra.mxu0 0
      %3256 = vmatpush.bf16.msra.mxu0 0
      %3257 = vmatpush.bf16.msra.mxu0 0
      %3258 = vmatpush.bf16.msra.mxu0 0
      %3259 = vmatpush.bf16.msra.mxu0 0
      %3260 = vmatpush.bf16.msra.mxu0 0
      %3261 = vmatpush.bf16.msra.mxu0 0
      %3262 = vmatpush.bf16.msra.mxu0 %v3250
      %3263 = vmatmul.bf16.gmra.mxu0 %v3247
      %v3264 = vpop.f32.mrf.mxu0
      %v3265 = vadd.f32 %v3239, %v3264
      %v3266 = vpop.f32.mrf.mxu0
      %v3267 = vadd.f32 %v3244, %v3266
      %3268 = vdwg.mxu0
      %3269 = vmatpush.bf16.msra.mxu0 0
      %3270 = vmatpush.bf16.msra.mxu0 0
      %3271 = vmatpush.bf16.msra.mxu0 0
      %3272 = vmatpush.bf16.msra.mxu0 0
      %3273 = vmatpush.bf16.msra.mxu0 0
      %3274 = vmatpush.bf16.msra.mxu0 0
      %3275 = vmatpush.bf16.msra.mxu0 0
      %3276 = vmatpush.bf16.msra.mxu0 %v3253
      %3277 = vmatmul.bf16.gmra.mxu0 %v3247
      %v3278 = vpop.f32.mrf.mxu0
      %v3279 = vadd.f32 %v3239, %v3278
      %v3280 = vpop.f32.mrf.mxu0
      %v3281 = vadd.f32 %v3244, %v3280
      %3282 = vdwg.mxu0
      %v3283 = vadd.f32 %v3225, %v3265
      %v3284 = vadd.f32 %v3226, %v3279
      %v3285 = vadd.f32 %v3227, %v3267
      %v3286 = vadd.f32 %v3228, %v3281
      %3287 = vst [vmem:[%s562] sm:$0xff] %v3283
      %3288 = vst [vmem:[%s562 + $0x8] sm:$0xff] %v3284
      %3289 = vst [vmem:[%s562 + $0x10] sm:$0xff] %v3285
      %3290 = vst [vmem:[%s562 + $0x18] sm:$0xff] %v3286
      %p3291 = scmp.lt.s32.totalorder %s28, 1
      %s3292 = scalar_select %p3291, %s28, 1
      %s3293 = smul.addr %s3292, 4
      %s3294 = smul.addr %s3293, 8
      %s3295 = scalar_lea.vmem %s17, %s3294
      // Predicated region
      $region89: #{convnext_block.1} parent=87 // pred_check
        %p3296 = pneg %p413
      $region90: #{convnext_block.1} parent=87 // pred_check_branch
        %3298 = sbr.rel (%p3296) target = $region92
      $region91: #{convnext_block.1} parent=87 // pred_region
        _
      $region92: #{convnext_block.1} parent=87 // pred_fallthru
        _
    $region88: #{convnext_block.1} parent=5 // pred_fallthru
      _
    %p3299 = scmp.le.s32.totalorder 2, %s23
    // Predicated region
    $region93: #{convnext_block.1} parent=5 // pred_check
      %p3300 = pneg %p3299
    $region94: #{convnext_block.1} parent=5 // pred_check_branch
      %3302 = sbr.rel (%p3300) target = $region96
    $region95: #{convnext_block.1} parent=5 // pred_region
      %s3303 = ssub.s32 %s23, 2
      // Predicated region
      $region97: #{convnext_block.1} parent=95 // pred_check
        %p3304 = pneg %p419
      $region98: #{convnext_block.1} parent=95 // pred_check_branch
        %3306 = sbr.rel (%p3304) target = $region100
      $region99: #{convnext_block.1} parent=95 // pred_region
        %p3307 = scmp.lt.s32.totalorder %s29, 1
        %s3308 = scalar_select %p3307, %s29, 1
        %s3309 = smul.addr %s3308, 4
        %s3310 = smul.addr %s3309, 8
        %s3311 = scalar_lea.vmem %s17, %s3310
      $region100: #{convnext_block.1} parent=95 // pred_fallthru
        _
    $region96: #{convnext_block.1} parent=5 // pred_fallthru
      _
  $region6: #{convnext_block.1} parent=0 // loop_footer
    %s27 = sadd.s32 1, %s23
  $region7: #{convnext_block.1} parent=0 // loop_footer_branch
    %22 = sbr.rel target = $region3
  $region8: #{convnext_block.1} parent=0 // loop_exit
    _

</llo_original>
